<compile_context>
chip_gen: v7x
topology: tpu7x:2x2x1
jax: 0.10.0
libtpu: 0.0.40
codegen_flags: <defaults>
</compile_context>

<pallas_src>
import jax
import jax.numpy as jnp
from jax.experimental import pallas as pl
from jax.experimental.pallas import tpu as pltpu


def pathconv_kernel(paths_ref, last_ref, x_ref, wih_ref, whh_ref, b_ref,
                    gamma_ref, beta_ref, out_ref, xw_ref, acc_ref):
    i = pl.program_id(0)
    n_tiles = pl.num_programs(0)
    PT, L = paths_ref.shape          # paths tile: [P_TILE, L] int32
    N, H = x_ref.shape               # node features: [N, H]

    # ---- once, on the first path tile: input projection for every node + accumulator init ----
    @pl.when(i == 0)
    def _init():
        # xw[n] = x[n] @ W_ih + (b_ih + b_hh): bias folded in so the time loop has no broadcast.
        xw = jnp.dot(x_ref[...].astype(jnp.bfloat16), wih_ref[...],
                     preferred_element_type=jnp.float32) + b_ref[...]
        xw_ref[...] = xw.astype(jnp.bfloat16)
        acc_ref[...] = jnp.zeros_like(acc_ref)

    # ---- LSTM over this tile's paths (time-major unrolled loop; L is small & static) ----
    w_hh = whh_ref[...]                                                   # [H, 4H] bf16
    xw = xw_ref[...]                                                      # [N, 4H] bf16
    lane_n = jax.lax.broadcasted_iota(jnp.int32, (PT, N), 1)              # node ids along lanes

    h = jnp.zeros((PT, H), jnp.float32)
    c = jnp.zeros((PT, H), jnp.float32)
    for t in range(L):
        # Gather x[paths[:, t]] @ W_ih + b via a one-hot MXU matmul (exact: one 1 per row).
        idx_t = paths_ref[:, pl.ds(t, 1)]                                 # [PT, 1] int32
        onehot_t = (lane_n == idx_t).astype(jnp.bfloat16)                 # [PT, N]
        xproj = jnp.dot(onehot_t, xw, preferred_element_type=jnp.float32)  # [PT, 4H]
        # Recurrent projection: single fused matmul (the only op on the serial chain).
        gates = xproj + jnp.dot(h.astype(jnp.bfloat16), w_hh,
                                preferred_element_type=jnp.float32)        # [PT, 4H] f32
        ig = jax.nn.sigmoid(gates[:, 0 * H:1 * H])
        fg = jax.nn.sigmoid(gates[:, 1 * H:2 * H])
        gg = jnp.tanh(gates[:, 2 * H:3 * H])
        og = jax.nn.sigmoid(gates[:, 3 * H:4 * H])
        c = fg * c + ig * gg
        h = og * jnp.tanh(c)

    # ---- scatter_add(h, paths[:, -1]) as a one-hot matmul, accumulated across path tiles ----
    # Padded paths carry last-index -1 and never match the iota -> dropped.
    last = last_ref[...]                                                  # [1, PT] int32
    node_ids = jax.lax.broadcasted_iota(jnp.int32, (N, PT), 0)
    onehot_s = (node_ids == last).astype(jnp.bfloat16)                    # [N, PT]
    acc_ref[...] += jnp.dot(onehot_s, h.astype(jnp.bfloat16),
                            preferred_element_type=jnp.float32)           # [N, H] f32

    # ---- finalize on the last tile: residual + BatchNorm1d (batch stats) + ReLU ----
    @pl.when(i == n_tiles - 1)
    def _finalize():
        y = acc_ref[...] + x_ref[...]
        mean = jnp.mean(y, axis=0, keepdims=True)
        var = jnp.mean((y - mean) ** 2, axis=0, keepdims=True)
        yn = (y - mean) * jax.lax.rsqrt(var + 1e-5)
        yn = yn * gamma_ref[...] + beta_ref[...]
        out_ref[...] = jnp.maximum(yn, 0.0)


def path_conv(x, paths, params, p_tile=128):
    """x: [N, H] float32 node features, paths: [P, L] int node indices. Returns [N, H] f32."""
    N, H = x.shape
    P, L = paths.shape
    H4 = 4 * H

    # Fuse the four gate matrices (gate order i, f, g, o) -> [H, 4H]; bf16 MXU operands.
    w_ih = jnp.concatenate([params["w_ih"][g] for g in range(4)], axis=1).astype(jnp.bfloat16)
    w_hh = jnp.concatenate([params["w_hh"][g] for g in range(4)], axis=1).astype(jnp.bfloat16)
    b = jnp.concatenate([params["b"][g] for g in range(4)], axis=1).astype(jnp.float32)  # [1,4H]

    # Path-axis tiling + padding.  Padded paths gather node 0 (harmless) and are dropped at the
    # scatter by giving them last-index -1.  Index tiles stay as small int32 VMEM inputs because
    # the one-hot construction needs them in vector registers (SMEM would force scalar reads).
    p_tile = min(p_tile, max(8, ((P + 7) // 8) * 8))
    n_tiles = pl.cdiv(P, p_tile)
    p_pad = n_tiles * p_tile
    paths_i32 = paths.astype(jnp.int32)
    last_idx = paths_i32[:, -1].reshape(1, P)
    if p_pad != P:
        paths_i32 = jnp.concatenate(
            [paths_i32, jnp.zeros((p_pad - P, L), jnp.int32)], axis=0)
        last_idx = jnp.concatenate(
            [last_idx, jnp.full((1, p_pad - P), -1, jnp.int32)], axis=1)

    x_f32 = x.astype(jnp.float32)
    gamma = params["gamma"].astype(jnp.float32)
    beta = params["beta"].astype(jnp.float32)

    grid_spec = pltpu.PrefetchScalarGridSpec(
        num_scalar_prefetch=0,
        grid=(n_tiles,),
        in_specs=[
            pl.BlockSpec((p_tile, L), lambda i: (i, 0)),   # paths tile (pipelined over P)
            pl.BlockSpec((1, p_tile), lambda i: (0, i)),   # last-node index tile
            pl.BlockSpec((N, H), lambda i: (0, 0)),        # x (resident across the grid)
            pl.BlockSpec((H, H4), lambda i: (0, 0)),       # fused W_ih
            pl.BlockSpec((H, H4), lambda i: (0, 0)),       # fused W_hh
            pl.BlockSpec((1, H4), lambda i: (0, 0)),       # fused bias (b_ih + b_hh)
            pl.BlockSpec((1, H), lambda i: (0, 0)),        # BN gamma
            pl.BlockSpec((1, H), lambda i: (0, 0)),        # BN beta
        ],
        out_specs=pl.BlockSpec((N, H), lambda i: (0, 0)),  # resident; written on last tile only
        scratch_shapes=[
            pltpu.VMEM((N, H4), jnp.bfloat16),             # xw = x @ W_ih + b (computed once)
            pltpu.VMEM((N, H), jnp.float32),               # scat accumulator across path tiles
        ],
    )
    return pl.pallas_call(
        pathconv_kernel,
        out_shape=jax.ShapeDtypeStruct((N, H), jnp.float32),
        grid_spec=grid_spec,
        compiler_params=pltpu.CompilerParams(
            dimension_semantics=("arbitrary",),            # P axis is a reduction (accumulator)
            vmem_limit_bytes=32 * 1024 * 1024,
        ),
    )(paths_i32, last_idx, x_f32, w_ih, w_hh, b, gamma, beta)


def path_conv_ref(x, paths, params):
    """Pure-JAX f32 reference with the module's exact math (for validation)."""
    hseq = x[paths]                                                       # [P, L, H]
    P, L, H = hseq.shape
    h = jnp.zeros((P, H), jnp.float32)
    c = jnp.zeros((P, H), jnp.float32)
    w_ih, w_hh, b = params["w_ih"], params["w_hh"], params["b"]
    for t in range(L):
        xt = hseq[:, t, :]
        ig = jax.nn.sigmoid(xt @ w_ih[0] + h @ w_hh[0] + b[0])
        fg = jax.nn.sigmoid(xt @ w_ih[1] + h @ w_hh[1] + b[1])
        gg = jnp.tanh(xt @ w_ih[2] + h @ w_hh[2] + b[2])
        og = jax.nn.sigmoid(xt @ w_ih[3] + h @ w_hh[3] + b[3])
        c = fg * c + ig * gg
        h = og * jnp.tanh(c)
    scat = jnp.zeros((x.shape[0], H), jnp.float32).at[paths[:, -1]].add(h)
    y = scat + x
    mean = jnp.mean(y, axis=0, keepdims=True)
    var = jnp.mean((y - mean) ** 2, axis=0, keepdims=True)
    y = (y - mean) * jax.lax.rsqrt(var + 1e-5) * params["gamma"] + params["beta"]
    return jnp.maximum(y, 0.0)


def init_params(key, hidden_dim):
    """Deterministic LSTM(hidden->hidden) + BatchNorm1d(hidden) params.
    Gate order (i, f, g, o); biases are (b_ih + b_hh) combined."""
    H = hidden_dim
    k1, k2, k3 = jax.random.split(key, 3)
    scale = 1.0 / jnp.sqrt(jnp.float32(H))          # PyTorch LSTM uniform init range
    w_ih = jax.random.uniform(k1, (4, H, H), jnp.float32, -scale, scale)
    w_hh = jax.random.uniform(k2, (4, H, H), jnp.float32, -scale, scale)
    b = jax.random.uniform(k3, (4, 1, H), jnp.float32, -scale, scale) * 2.0
    gamma = jnp.ones((1, H), jnp.float32)            # BatchNorm1d reset_parameters()
    beta = jnp.zeros((1, H), jnp.float32)
    return {"w_ih": w_ih, "w_hh": w_hh, "b": b, "gamma": gamma, "beta": beta}


if __name__ == "__main__":
    # Lane/sublane-friendly small shapes: H multiple of 128 (lane-dense gates/output),
    # P > P_TILE so the grid, accumulator and padded-tail path are all exercised.
    N, H = 64, 128         # nodes, hidden_dim (residual requires feature dim == hidden_dim)
    P, L = 192, 4          # number of paths, path length

    key = jax.random.PRNGKey(0)
    kx, kp, kparam = jax.random.split(key, 3)
    x = jax.random.normal(kx, (N, H), jnp.float32)
    paths = jax.random.randint(kp, (P, L), 0, N, jnp.int32)
    params = init_params(kparam, H)

    out = jax.block_until_ready(path_conv(x, paths, params))
    ref = jax.block_until_ready(path_conv_ref(x, paths, params))

    assert out.shape == (N, H)
    assert bool(jnp.all(jnp.isfinite(out)))
    # Tolerance covers bf16 MXU operands in the kernel vs. the all-f32 reference.
    err = float(jnp.max(jnp.abs(out - ref)))
    assert bool(jnp.allclose(out, ref, atol=3e-2, rtol=3e-2)), f"max abs err = {err}"
    print("KERNEL_OK")
</pallas_src>

<mosaic_0001>
module attributes {stable_mosaic.version = 11 : i64} {
  func.func @pathconv_kernel(%arg0: i32, %arg1: memref<128x4xi32, #tpu.memory_space<vmem>>, %arg2: memref<1x128xi32, #tpu.memory_space<vmem>>, %arg3: memref<64x128xf32, #tpu.memory_space<vmem>>, %arg4: memref<128x512xbf16, #tpu.memory_space<vmem>>, %arg5: memref<128x512xbf16, #tpu.memory_space<vmem>>, %arg6: memref<1x512xf32, #tpu.memory_space<vmem>>, %arg7: memref<1x128xf32, #tpu.memory_space<vmem>>, %arg8: memref<1x128xf32, #tpu.memory_space<vmem>>, %arg9: memref<64x128xf32, #tpu.memory_space<vmem>>, %arg10: memref<64x512xbf16, #tpu.memory_space<vmem>>, %arg11: memref<64x128xf32, #tpu.memory_space<vmem>>) attributes {dimension_semantics = [#tpu.dimension_semantics<arbitrary>], iteration_bounds = array<i64: 2>, scalar_prefetch = 0 : i64, scratch_operands = 2 : i64, tpu.core_type = #tpu.core_type<tc>, window_params = [{transform_indices = @transform_0, window_bounds = array<i64: 128, 4>}, {transform_indices = @transform_1, window_bounds = array<i64: 1, 128>}, {pipeline_mode = #tpu.pipeline_mode<synchronous>, transform_indices = @transform_2, window_bounds = array<i64: 64, 128>}, {pipeline_mode = #tpu.pipeline_mode<synchronous>, transform_indices = @transform_3, window_bounds = array<i64: 128, 512>}, {pipeline_mode = #tpu.pipeline_mode<synchronous>, transform_indices = @transform_4, window_bounds = array<i64: 128, 512>}, {pipeline_mode = #tpu.pipeline_mode<synchronous>, transform_indices = @transform_5, window_bounds = array<i64: 1, 512>}, {pipeline_mode = #tpu.pipeline_mode<synchronous>, transform_indices = @transform_6, window_bounds = array<i64: 1, 128>}, {pipeline_mode = #tpu.pipeline_mode<synchronous>, transform_indices = @transform_7, window_bounds = array<i64: 1, 128>}, {pipeline_mode = #tpu.pipeline_mode<synchronous>, transform_indices = @transform_8, window_bounds = array<i64: 64, 128>}]} {
    %c0_i32 = arith.constant 0 : i32
    %0 = arith.cmpi eq, %arg0, %c0_i32 : i32
    %1 = arith.extui %0 : i1 to i32
    %c0_i32_0 = arith.constant 0 : i32
    %2 = arith.cmpi ne, %1, %c0_i32_0 : i32
    scf.if %2 {
      %c0_38 = arith.constant 0 : index
      %c0_39 = arith.constant 0 : index
      %163 = vector.load %arg3[%c0_38, %c0_39] : memref<64x128xf32, #tpu.memory_space<vmem>>, vector<64x128xf32>
      %164 = arith.truncf %163 : vector<64x128xf32> to vector<64x128xbf16>
      %c0_40 = arith.constant 0 : index
      %c0_41 = arith.constant 0 : index
      %165 = vector.load %arg4[%c0_40, %c0_41] : memref<128x512xbf16, #tpu.memory_space<vmem>>, vector<128x512xbf16>
      %cst_42 = arith.constant dense<0.000000e+00> : vector<64x512xf32>
      %166 = tpu.matmul %164, %165, %cst_42 {dimension_numbers = #tpu.dot_dimension_numbers<[1], [0], [0], [1], [0, 0, 1, 1], [], []>} : vector<64x128xbf16>, vector<128x512xbf16>, vector<64x512xf32> -> vector<64x512xf32>
      %c0_43 = arith.constant 0 : index
      %c0_44 = arith.constant 0 : index
      %167 = vector.load %arg6[%c0_43, %c0_44] : memref<1x512xf32, #tpu.memory_space<vmem>>, vector<1x512xf32>
      %168 = vector.broadcast %167 : vector<1x512xf32> to vector<64x512xf32>
      %169 = arith.addf %166, %168 : vector<64x512xf32>
      %170 = arith.truncf %169 : vector<64x512xf32> to vector<64x512xbf16>
      %c0_45 = arith.constant 0 : index
      %c0_46 = arith.constant 0 : index
      %171 = vector.load %arg10[%c0_45, %c0_46] : memref<64x512xbf16, #tpu.memory_space<vmem>>, vector<64x512xbf16>
      tpu.vector_store %arg10[%c0_45, %c0_46], %170 {strides = array<i32>} : memref<64x512xbf16, #tpu.memory_space<vmem>>, vector<64x512xbf16>,
      %cst_47 = arith.constant 0.000000e+00 : f32
      %172 = vector.broadcast %cst_47 : f32 to vector<64x128xf32>
      %c0_48 = arith.constant 0 : index
      %c0_49 = arith.constant 0 : index
      %173 = vector.load %arg11[%c0_48, %c0_49] : memref<64x128xf32, #tpu.memory_space<vmem>>, vector<64x128xf32>
      tpu.vector_store %arg11[%c0_48, %c0_49], %172 {strides = array<i32>} : memref<64x128xf32, #tpu.memory_space<vmem>>, vector<64x128xf32>,
    } else {
    }
    %c0 = arith.constant 0 : index
    %c0_1 = arith.constant 0 : index
    %3 = vector.load %arg5[%c0, %c0_1] : memref<128x512xbf16, #tpu.memory_space<vmem>>, vector<128x512xbf16>
    %c0_2 = arith.constant 0 : index
    %c0_3 = arith.constant 0 : index
    %4 = vector.load %arg10[%c0_2, %c0_3] : memref<64x512xbf16, #tpu.memory_space<vmem>>, vector<64x512xbf16>
    %5 = tpu.iota {dimensions = array<i32: 1>} : vector<128x64xi32>
    %cst = arith.constant 0.000000e+00 : f32
    %6 = vector.broadcast %cst : f32 to vector<128x128xf32>
    %cst_4 = arith.constant 0.000000e+00 : f32
    %7 = vector.broadcast %cst_4 : f32 to vector<128x128xf32>
    %c0_5 = arith.constant 0 : index
    %c0_6 = arith.constant 0 : index
    %8 = vector.load %arg1[%c0_5, %c0_6] : memref<128x4xi32, #tpu.memory_space<vmem>>, vector<128x1xi32>
    %9 = vector.broadcast %8 : vector<128x1xi32> to vector<128x64xi32>
    %10 = arith.cmpi eq, %5, %9 : vector<128x64xi32>
    %11 = arith.extui %10 : vector<128x64xi1> to vector<128x64xi32>
    %12 = arith.sitofp %11 : vector<128x64xi32> to vector<128x64xf32>
    %13 = arith.truncf %12 : vector<128x64xf32> to vector<128x64xbf16>
    %cst_7 = arith.constant dense<0.000000e+00> : vector<128x512xf32>
    %14 = tpu.matmul %13, %4, %cst_7 {dimension_numbers = #tpu.dot_dimension_numbers<[1], [0], [0], [1], [0, 0, 1, 1], [], []>} : vector<128x64xbf16>, vector<64x512xbf16>, vector<128x512xf32> -> vector<128x512xf32>
    %15 = arith.truncf %6 : vector<128x128xf32> to vector<128x128xbf16>
    %cst_8 = arith.constant dense<0.000000e+00> : vector<128x512xf32>
    %16 = tpu.matmul %15, %3, %cst_8 {dimension_numbers = #tpu.dot_dimension_numbers<[1], [0], [0], [1], [0, 0, 1, 1], [], []>} : vector<128x128xbf16>, vector<128x512xbf16>, vector<128x512xf32> -> vector<128x512xf32>
    %17 = arith.addf %14, %16 : vector<128x512xf32>
    %18 = vector.extract_strided_slice %17 {offsets = [0, 0], sizes = [128, 128], strides = [1, 1]} : vector<128x512xf32> to vector<128x128xf32>
    %19 = arith.negf %18 : vector<128x128xf32>
    %20 = math.exp %19 : vector<128x128xf32>
    %cst_9 = arith.constant 1.000000e+00 : f32
    %21 = vector.broadcast %cst_9 : f32 to vector<128x128xf32>
    %22 = arith.addf %21, %20 : vector<128x128xf32>
    %23 = arith.divf %21, %22 : vector<128x128xf32>
    %24 = vector.extract_strided_slice %17 {offsets = [0, 128], sizes = [128, 128], strides = [1, 1]} : vector<128x512xf32> to vector<128x128xf32>
    %25 = arith.negf %24 : vector<128x128xf32>
    %26 = math.exp %25 : vector<128x128xf32>
    %cst_10 = arith.constant 1.000000e+00 : f32
    %27 = vector.broadcast %cst_10 : f32 to vector<128x128xf32>
    %28 = arith.addf %27, %26 : vector<128x128xf32>
    %29 = arith.divf %27, %28 : vector<128x128xf32>
    %30 = vector.extract_strided_slice %17 {offsets = [0, 256], sizes = [128, 128], strides = [1, 1]} : vector<128x512xf32> to vector<128x128xf32>
    %31 = math.tanh %30 : vector<128x128xf32>
    %32 = vector.extract_strided_slice %17 {offsets = [0, 384], sizes = [128, 128], strides = [1, 1]} : vector<128x512xf32> to vector<128x128xf32>
    %33 = arith.negf %32 : vector<128x128xf32>
    %34 = math.exp %33 : vector<128x128xf32>
    %cst_11 = arith.constant 1.000000e+00 : f32
    %35 = vector.broadcast %cst_11 : f32 to vector<128x128xf32>
    %36 = arith.addf %35, %34 : vector<128x128xf32>
    %37 = arith.divf %35, %36 : vector<128x128xf32>
    %38 = arith.mulf %29, %7 : vector<128x128xf32>
    %39 = arith.mulf %23, %31 : vector<128x128xf32>
    %40 = arith.addf %38, %39 : vector<128x128xf32>
    %41 = math.tanh %40 : vector<128x128xf32>
    %42 = arith.mulf %37, %41 : vector<128x128xf32>
    %c0_12 = arith.constant 0 : index
    %c1 = arith.constant 1 : index
    %43 = vector.load %arg1[%c0_12, %c1] : memref<128x4xi32, #tpu.memory_space<vmem>>, vector<128x1xi32>
    %44 = vector.broadcast %43 : vector<128x1xi32> to vector<128x64xi32>
    %45 = arith.cmpi eq, %5, %44 : vector<128x64xi32>
    %46 = arith.extui %45 : vector<128x64xi1> to vector<128x64xi32>
    %47 = arith.sitofp %46 : vector<128x64xi32> to vector<128x64xf32>
    %48 = arith.truncf %47 : vector<128x64xf32> to vector<128x64xbf16>
    %cst_13 = arith.constant dense<0.000000e+00> : vector<128x512xf32>
    %49 = tpu.matmul %48, %4, %cst_13 {dimension_numbers = #tpu.dot_dimension_numbers<[1], [0], [0], [1], [0, 0, 1, 1], [], []>} : vector<128x64xbf16>, vector<64x512xbf16>, vector<128x512xf32> -> vector<128x512xf32>
    %50 = arith.truncf %42 : vector<128x128xf32> to vector<128x128xbf16>
    %cst_14 = arith.constant dense<0.000000e+00> : vector<128x512xf32>
    %51 = tpu.matmul %50, %3, %cst_14 {dimension_numbers = #tpu.dot_dimension_numbers<[1], [0], [0], [1], [0, 0, 1, 1], [], []>} : vector<128x128xbf16>, vector<128x512xbf16>, vector<128x512xf32> -> vector<128x512xf32>
    %52 = arith.addf %49, %51 : vector<128x512xf32>
    %53 = vector.extract_strided_slice %52 {offsets = [0, 0], sizes = [128, 128], strides = [1, 1]} : vector<128x512xf32> to vector<128x128xf32>
    %54 = arith.negf %53 : vector<128x128xf32>
    %55 = math.exp %54 : vector<128x128xf32>
    %cst_15 = arith.constant 1.000000e+00 : f32
    %56 = vector.broadcast %cst_15 : f32 to vector<128x128xf32>
    %57 = arith.addf %56, %55 : vector<128x128xf32>
    %58 = arith.divf %56, %57 : vector<128x128xf32>
    %59 = vector.extract_strided_slice %52 {offsets = [0, 128], sizes = [128, 128], strides = [1, 1]} : vector<128x512xf32> to vector<128x128xf32>
    %60 = arith.negf %59 : vector<128x128xf32>
    %61 = math.exp %60 : vector<128x128xf32>
    %cst_16 = arith.constant 1.000000e+00 : f32
    %62 = vector.broadcast %cst_16 : f32 to vector<128x128xf32>
    %63 = arith.addf %62, %61 : vector<128x128xf32>
    %64 = arith.divf %62, %63 : vector<128x128xf32>
    %65 = vector.extract_strided_slice %52 {offsets = [0, 256], sizes = [128, 128], strides = [1, 1]} : vector<128x512xf32> to vector<128x128xf32>
    %66 = math.tanh %65 : vector<128x128xf32>
    %67 = vector.extract_strided_slice %52 {offsets = [0, 384], sizes = [128, 128], strides = [1, 1]} : vector<128x512xf32> to vector<128x128xf32>
    %68 = arith.negf %67 : vector<128x128xf32>
    %69 = math.exp %68 : vector<128x128xf32>
    %cst_17 = arith.constant 1.000000e+00 : f32
    %70 = vector.broadcast %cst_17 : f32 to vector<128x128xf32>
    %71 = arith.addf %70, %69 : vector<128x128xf32>
    %72 = arith.divf %70, %71 : vector<128x128xf32>
    %73 = arith.mulf %64, %40 : vector<128x128xf32>
    %74 = arith.mulf %58, %66 : vector<128x128xf32>
    %75 = arith.addf %73, %74 : vector<128x128xf32>
    %76 = math.tanh %75 : vector<128x128xf32>
    %77 = arith.mulf %72, %76 : vector<128x128xf32>
    %c0_18 = arith.constant 0 : index
    %c2 = arith.constant 2 : index
    %78 = vector.load %arg1[%c0_18, %c2] : memref<128x4xi32, #tpu.memory_space<vmem>>, vector<128x1xi32>
    %79 = vector.broadcast %78 : vector<128x1xi32> to vector<128x64xi32>
    %80 = arith.cmpi eq, %5, %79 : vector<128x64xi32>
    %81 = arith.extui %80 : vector<128x64xi1> to vector<128x64xi32>
    %82 = arith.sitofp %81 : vector<128x64xi32> to vector<128x64xf32>
    %83 = arith.truncf %82 : vector<128x64xf32> to vector<128x64xbf16>
    %cst_19 = arith.constant dense<0.000000e+00> : vector<128x512xf32>
    %84 = tpu.matmul %83, %4, %cst_19 {dimension_numbers = #tpu.dot_dimension_numbers<[1], [0], [0], [1], [0, 0, 1, 1], [], []>} : vector<128x64xbf16>, vector<64x512xbf16>, vector<128x512xf32> -> vector<128x512xf32>
    %85 = arith.truncf %77 : vector<128x128xf32> to vector<128x128xbf16>
    %cst_20 = arith.constant dense<0.000000e+00> : vector<128x512xf32>
    %86 = tpu.matmul %85, %3, %cst_20 {dimension_numbers = #tpu.dot_dimension_numbers<[1], [0], [0], [1], [0, 0, 1, 1], [], []>} : vector<128x128xbf16>, vector<128x512xbf16>, vector<128x512xf32> -> vector<128x512xf32>
    %87 = arith.addf %84, %86 : vector<128x512xf32>
    %88 = vector.extract_strided_slice %87 {offsets = [0, 0], sizes = [128, 128], strides = [1, 1]} : vector<128x512xf32> to vector<128x128xf32>
    %89 = arith.negf %88 : vector<128x128xf32>
    %90 = math.exp %89 : vector<128x128xf32>
    %cst_21 = arith.constant 1.000000e+00 : f32
    %91 = vector.broadcast %cst_21 : f32 to vector<128x128xf32>
    %92 = arith.addf %91, %90 : vector<128x128xf32>
    %93 = arith.divf %91, %92 : vector<128x128xf32>
    %94 = vector.extract_strided_slice %87 {offsets = [0, 128], sizes = [128, 128], strides = [1, 1]} : vector<128x512xf32> to vector<128x128xf32>
    %95 = arith.negf %94 : vector<128x128xf32>
    %96 = math.exp %95 : vector<128x128xf32>
    %cst_22 = arith.constant 1.000000e+00 : f32
    %97 = vector.broadcast %cst_22 : f32 to vector<128x128xf32>
    %98 = arith.addf %97, %96 : vector<128x128xf32>
    %99 = arith.divf %97, %98 : vector<128x128xf32>
    %100 = vector.extract_strided_slice %87 {offsets = [0, 256], sizes = [128, 128], strides = [1, 1]} : vector<128x512xf32> to vector<128x128xf32>
    %101 = math.tanh %100 : vector<128x128xf32>
    %102 = vector.extract_strided_slice %87 {offsets = [0, 384], sizes = [128, 128], strides = [1, 1]} : vector<128x512xf32> to vector<128x128xf32>
    %103 = arith.negf %102 : vector<128x128xf32>
    %104 = math.exp %103 : vector<128x128xf32>
    %cst_23 = arith.constant 1.000000e+00 : f32
    %105 = vector.broadcast %cst_23 : f32 to vector<128x128xf32>
    %106 = arith.addf %105, %104 : vector<128x128xf32>
    %107 = arith.divf %105, %106 : vector<128x128xf32>
    %108 = arith.mulf %99, %75 : vector<128x128xf32>
    %109 = arith.mulf %93, %101 : vector<128x128xf32>
    %110 = arith.addf %108, %109 : vector<128x128xf32>
    %111 = math.tanh %110 : vector<128x128xf32>
    %112 = arith.mulf %107, %111 : vector<128x128xf32>
    %c0_24 = arith.constant 0 : index
    %c3 = arith.constant 3 : index
    %113 = vector.load %arg1[%c0_24, %c3] : memref<128x4xi32, #tpu.memory_space<vmem>>, vector<128x1xi32>
    %114 = vector.broadcast %113 : vector<128x1xi32> to vector<128x64xi32>
    %115 = arith.cmpi eq, %5, %114 : vector<128x64xi32>
    %116 = arith.extui %115 : vector<128x64xi1> to vector<128x64xi32>
    %117 = arith.sitofp %116 : vector<128x64xi32> to vector<128x64xf32>
    %118 = arith.truncf %117 : vector<128x64xf32> to vector<128x64xbf16>
    %cst_25 = arith.constant dense<0.000000e+00> : vector<128x512xf32>
    %119 = tpu.matmul %118, %4, %cst_25 {dimension_numbers = #tpu.dot_dimension_numbers<[1], [0], [0], [1], [0, 0, 1, 1], [], []>} : vector<128x64xbf16>, vector<64x512xbf16>, vector<128x512xf32> -> vector<128x512xf32>
    %120 = arith.truncf %112 : vector<128x128xf32> to vector<128x128xbf16>
    %cst_26 = arith.constant dense<0.000000e+00> : vector<128x512xf32>
    %121 = tpu.matmul %120, %3, %cst_26 {dimension_numbers = #tpu.dot_dimension_numbers<[1], [0], [0], [1], [0, 0, 1, 1], [], []>} : vector<128x128xbf16>, vector<128x512xbf16>, vector<128x512xf32> -> vector<128x512xf32>
    %122 = arith.addf %119, %121 : vector<128x512xf32>
    %123 = vector.extract_strided_slice %122 {offsets = [0, 0], sizes = [128, 128], strides = [1, 1]} : vector<128x512xf32> to vector<128x128xf32>
    %124 = arith.negf %123 : vector<128x128xf32>
    %125 = math.exp %124 : vector<128x128xf32>
    %cst_27 = arith.constant 1.000000e+00 : f32
    %126 = vector.broadcast %cst_27 : f32 to vector<128x128xf32>
    %127 = arith.addf %126, %125 : vector<128x128xf32>
    %128 = arith.divf %126, %127 : vector<128x128xf32>
    %129 = vector.extract_strided_slice %122 {offsets = [0, 128], sizes = [128, 128], strides = [1, 1]} : vector<128x512xf32> to vector<128x128xf32>
    %130 = arith.negf %129 : vector<128x128xf32>
    %131 = math.exp %130 : vector<128x128xf32>
    %cst_28 = arith.constant 1.000000e+00 : f32
    %132 = vector.broadcast %cst_28 : f32 to vector<128x128xf32>
    %133 = arith.addf %132, %131 : vector<128x128xf32>
    %134 = arith.divf %132, %133 : vector<128x128xf32>
    %135 = vector.extract_strided_slice %122 {offsets = [0, 256], sizes = [128, 128], strides = [1, 1]} : vector<128x512xf32> to vector<128x128xf32>
    %136 = math.tanh %135 : vector<128x128xf32>
    %137 = vector.extract_strided_slice %122 {offsets = [0, 384], sizes = [128, 128], strides = [1, 1]} : vector<128x512xf32> to vector<128x128xf32>
    %138 = arith.negf %137 : vector<128x128xf32>
    %139 = math.exp %138 : vector<128x128xf32>
    %cst_29 = arith.constant 1.000000e+00 : f32
    %140 = vector.broadcast %cst_29 : f32 to vector<128x128xf32>
    %141 = arith.addf %140, %139 : vector<128x128xf32>
    %142 = arith.divf %140, %141 : vector<128x128xf32>
    %143 = arith.mulf %134, %110 : vector<128x128xf32>
    %144 = arith.mulf %128, %136 : vector<128x128xf32>
    %145 = arith.addf %143, %144 : vector<128x128xf32>
    %146 = math.tanh %145 : vector<128x128xf32>
    %147 = arith.mulf %142, %146 : vector<128x128xf32>
    %c0_30 = arith.constant 0 : index
    %c0_31 = arith.constant 0 : index
    %148 = vector.load %arg2[%c0_30, %c0_31] : memref<1x128xi32, #tpu.memory_space<vmem>>, vector<1x128xi32>
    %149 = tpu.iota {dimensions = array<i32: 0>} : vector<64x128xi32>
    %150 = vector.broadcast %148 : vector<1x128xi32> to vector<64x128xi32>
    %151 = arith.cmpi eq, %149, %150 : vector<64x128xi32>
    %152 = arith.extui %151 : vector<64x128xi1> to vector<64x128xi32>
    %153 = arith.sitofp %152 : vector<64x128xi32> to vector<64x128xf32>
    %154 = arith.truncf %153 : vector<64x128xf32> to vector<64x128xbf16>
    %c0_32 = arith.constant 0 : index
    %c0_33 = arith.constant 0 : index
    %155 = vector.load %arg11[%c0_32, %c0_33] : memref<64x128xf32, #tpu.memory_space<vmem>>, vector<64x128xf32>
    %156 = arith.truncf %147 : vector<128x128xf32> to vector<128x128xbf16>
    %cst_34 = arith.constant dense<0.000000e+00> : vector<64x128xf32>
    %157 = tpu.matmul %154, %156, %cst_34 {dimension_numbers = #tpu.dot_dimension_numbers<[1], [0], [0], [1], [0, 0, 1, 1], [], []>} : vector<64x128xbf16>, vector<128x128xbf16>, vector<64x128xf32> -> vector<64x128xf32>
    %158 = arith.addf %155, %157 : vector<64x128xf32>
    %c0_35 = arith.constant 0 : index
    %c0_36 = arith.constant 0 : index
    %159 = vector.load %arg11[%c0_35, %c0_36] : memref<64x128xf32, #tpu.memory_space<vmem>>, vector<64x128xf32>
    tpu.vector_store %arg11[%c0_35, %c0_36], %158 {strides = array<i32>} : memref<64x128xf32, #tpu.memory_space<vmem>>, vector<64x128xf32>,
    %c1_i32 = arith.constant 1 : i32
    %160 = arith.cmpi eq, %arg0, %c1_i32 : i32
    %161 = arith.extui %160 : i1 to i32
    %c0_i32_37 = arith.constant 0 : i32
    %162 = arith.cmpi ne, %161, %c0_i32_37 : i32
    scf.if %162 {
      %c0_38 = arith.constant 0 : index
      %c0_39 = arith.constant 0 : index
      %163 = vector.load %arg11[%c0_38, %c0_39] : memref<64x128xf32, #tpu.memory_space<vmem>>, vector<64x128xf32>
      %c0_40 = arith.constant 0 : index
      %c0_41 = arith.constant 0 : index
      %164 = vector.load %arg3[%c0_40, %c0_41] : memref<64x128xf32, #tpu.memory_space<vmem>>, vector<64x128xf32>
      %165 = arith.addf %163, %164 : vector<64x128xf32>
      %cst_42 = arith.constant dense<0.000000e+00> : vector<128xf32>
      %166 = vector.multi_reduction <add>, %165, %cst_42 [0] : vector<64x128xf32> to vector<128xf32>
      %167 = vector.shape_cast %166 : vector<128xf32> to vector<1x128xf32>
      %cst_43 = arith.constant 6.400000e+01 : f32
      %168 = vector.broadcast %cst_43 : f32 to vector<1x128xf32>
      %169 = arith.divf %167, %168 : vector<1x128xf32>
      %170 = vector.broadcast %169 : vector<1x128xf32> to vector<64x128xf32>
      %171 = arith.subf %165, %170 : vector<64x128xf32>
      %172 = arith.mulf %171, %171 : vector<64x128xf32>
      %cst_44 = arith.constant dense<0.000000e+00> : vector<128xf32>
      %173 = vector.multi_reduction <add>, %172, %cst_44 [0] : vector<64x128xf32> to vector<128xf32>
      %174 = vector.shape_cast %173 : vector<128xf32> to vector<1x128xf32>
      %cst_45 = arith.constant 6.400000e+01 : f32
      %175 = vector.broadcast %cst_45 : f32 to vector<1x128xf32>
      %176 = arith.divf %174, %175 : vector<1x128xf32>
      %177 = vector.broadcast %169 : vector<1x128xf32> to vector<64x128xf32>
      %178 = arith.subf %165, %177 : vector<64x128xf32>
      %cst_46 = arith.constant 9.99999974E-6 : f32
      %179 = vector.broadcast %cst_46 : f32 to vector<1x128xf32>
      %180 = arith.addf %176, %179 : vector<1x128xf32>
      %181 = math.rsqrt %180 : vector<1x128xf32>
      %182 = vector.broadcast %181 : vector<1x128xf32> to vector<64x128xf32>
      %183 = arith.mulf %178, %182 : vector<64x128xf32>
      %c0_47 = arith.constant 0 : index
      %c0_48 = arith.constant 0 : index
      %184 = vector.load %arg7[%c0_47, %c0_48] : memref<1x128xf32, #tpu.memory_space<vmem>>, vector<1x128xf32>
      %185 = vector.broadcast %184 : vector<1x128xf32> to vector<64x128xf32>
      %186 = arith.mulf %183, %185 : vector<64x128xf32>
      %c0_49 = arith.constant 0 : index
      %c0_50 = arith.constant 0 : index
      %187 = vector.load %arg8[%c0_49, %c0_50] : memref<1x128xf32, #tpu.memory_space<vmem>>, vector<1x128xf32>
      %188 = vector.broadcast %187 : vector<1x128xf32> to vector<64x128xf32>
      %189 = arith.addf %186, %188 : vector<64x128xf32>
      %cst_51 = arith.constant 0.000000e+00 : f32
      %190 = vector.broadcast %cst_51 : f32 to vector<64x128xf32>
      %191 = arith.maximumf %189, %190 : vector<64x128xf32>
      %c0_52 = arith.constant 0 : index
      %c0_53 = arith.constant 0 : index
      %192 = vector.load %arg9[%c0_52, %c0_53] : memref<64x128xf32, #tpu.memory_space<vmem>>, vector<64x128xf32>
      tpu.vector_store %arg9[%c0_52, %c0_53], %191 {strides = array<i32>} : memref<64x128xf32, #tpu.memory_space<vmem>>, vector<64x128xf32>,
    } else {
    }
    return
  }
  func.func @transform_0(%arg0: i32) -> (i32, i32) {
    %c0_i32 = arith.constant 0 : i32
    %c0_i32_0 = arith.constant 0 : i32
    return %arg0, %c0_i32 : i32, i32
  }
  func.func @transform_1(%arg0: i32) -> (i32, i32) {
    %c0_i32 = arith.constant 0 : i32
    %c0_i32_0 = arith.constant 0 : i32
    return %c0_i32, %arg0 : i32, i32
  }
  func.func @transform_2(%arg0: i32) -> (i32, i32) {
    %c0_i32 = arith.constant 0 : i32
    %c0_i32_0 = arith.constant 0 : i32
    %c0_i32_1 = arith.constant 0 : i32
    return %c0_i32, %c0_i32_0 : i32, i32
  }
  func.func @transform_3(%arg0: i32) -> (i32, i32) {
    %c0_i32 = arith.constant 0 : i32
    %c0_i32_0 = arith.constant 0 : i32
    %c0_i32_1 = arith.constant 0 : i32
    return %c0_i32, %c0_i32_0 : i32, i32
  }
  func.func @transform_4(%arg0: i32) -> (i32, i32) {
    %c0_i32 = arith.constant 0 : i32
    %c0_i32_0 = arith.constant 0 : i32
    %c0_i32_1 = arith.constant 0 : i32
    return %c0_i32, %c0_i32_0 : i32, i32
  }
  func.func @transform_5(%arg0: i32) -> (i32, i32) {
    %c0_i32 = arith.constant 0 : i32
    %c0_i32_0 = arith.constant 0 : i32
    %c0_i32_1 = arith.constant 0 : i32
    return %c0_i32, %c0_i32_0 : i32, i32
  }
  func.func @transform_6(%arg0: i32) -> (i32, i32) {
    %c0_i32 = arith.constant 0 : i32
    %c0_i32_0 = arith.constant 0 : i32
    %c0_i32_1 = arith.constant 0 : i32
    return %c0_i32, %c0_i32_0 : i32, i32
  }
  func.func @transform_7(%arg0: i32) -> (i32, i32) {
    %c0_i32 = arith.constant 0 : i32
    %c0_i32_0 = arith.constant 0 : i32
    %c0_i32_1 = arith.constant 0 : i32
    return %c0_i32, %c0_i32_0 : i32, i32
  }
  func.func @transform_8(%arg0: i32) -> (i32, i32) {
    %c0_i32 = arith.constant 0 : i32
    %c0_i32_0 = arith.constant 0 : i32
    %c0_i32_1 = arith.constant 0 : i32
    return %c0_i32, %c0_i32_0 : i32, i32
  }
}

</mosaic_0001>

<llo_original>
// kernel: tpu_custom_call.1
$region0: #{tpu_custom_call.1}
  #allocation0 [shape = 'u32[]', space=smem, size = 0x4, offset = 0x4, fixed_abs, tag = 'smem constant byte address 0x4 - core index']
  #allocation1 [shape = 'u32[144,128]{1,0:T(1,128)}', space=vmem, size = 0x12000, scoped, tag = 'internal scratch']
  #allocation2 [shape = 'bf16[64,512]{1,0:T(16,128)(2,1)}', space=vmem, size = 0x10000, scoped, tag = 'scratch operand']
  #allocation3 [shape = 'f32[64,128]{1,0:T(8,128)}', space=vmem, size = 0x8000, scoped, tag = 'scratch operand']
  %s0 = inlined_call_operand.vmem [shape: s32[256,4], index: 0, kind: input, shape index: {}]
  %s1 = inlined_call_operand.vmem [shape: s32[1,256], index: 1, kind: input, shape index: {}]
  %s2 = inlined_call_operand.hbm [shape: f32[64,128], index: 2, kind: input, shape index: {}]
  %s3 = inlined_call_operand.vmem [shape: bf16[128,512], index: 3, kind: input, shape index: {}]
  %s4 = inlined_call_operand.hbm [shape: bf16[128,512], index: 4, kind: input, shape index: {}]
  %s5 = inlined_call_operand.vmem [shape: f32[1,512], index: 5, kind: input, shape index: {}]
  %s6 = inlined_call_operand.vmem [shape: f32[1,128], index: 6, kind: input, shape index: {}]
  %s7 = inlined_call_operand.vmem [shape: f32[1,128], index: 7, kind: input, shape index: {}]
  %s8 = inlined_call_operand.hbm [shape: f32[64,128], index: 8, kind: output, shape index: {}]
  %s9 = sld [smem:[#allocation0]]
  $region81: #{tpu_custom_call.1} parent=0
    _
  %s11 = ssub.s32 1, %s9
  %s12 = scalar_select 0, %s11, %s9
  $region1: #{tpu_custom_call.1} parent=0
    #allocation4 [shape = 'u8[32768]{0}', space=vmem, size = 0x8000, scoped, tag = 'input window, operand 2, single buffered']
    #allocation5 [shape = 's32[2]{0}', space=sflag, size = 0x8, scoped, tag = 'scoped memory for tpu_custom_call.1']
    #allocation6 [shape = 's32[2]{0}', space=sflag, size = 0x8, scoped, tag = 'scoped memory for tpu_custom_call.1']
    #allocation7 [shape = 'u8[131072]{0}', space=vmem, size = 0x20000, scoped, tag = 'input window, operand 4, single buffered']
    #allocation8 [shape = 's32[1]{0}', space=sflag, size = 0x4, scoped, tag = 'scoped memory for tpu_custom_call.1']
    #allocation9 [shape = 'u8[32768]{0}', space=vmem, size = 0x8000, scoped, tag = 'output window, operand 0, single buffered']
    %13 = vsyncpa [#allocation5], 0
    %14 = vsyncpa [#allocation8], 0
    %15 = vsyncpa [#allocation6], 0
    loop: start=0, step=1, limit=4
    $region2: #{tpu_custom_call.1} parent=1 // loop_pre_header
      _
    $region3: #{tpu_custom_call.1} parent=1 // loop_header
      %s17 = sphi 0, %s21
      %p18 = scmp.ge.s32.totalorder %s17, 4
      %s27 = sphi 0, %s29
      %s30 = sphi 0, %s27
      %s31 = sphi 0, %s30
      %s47 = sphi 0, %s31
      %s53 = sphi 0, %s55
      %s56 = sphi 0, %s53
      %s57 = sphi 0, %s56
      %s73 = sphi 0, %s57
      %s77 = sphi 0, %s77
      %s79 = sphi 0, %s77
      %s80 = sphi 0, %s79
      %s94 = sphi 0, %s80
      %s98 = sphi 0, %s98
      %s100 = sphi 0, %s98
      %s101 = sphi 0, %s100
      %s115 = sphi 0, %s101
      %s119 = sphi 0, %s119
      %s121 = sphi 0, %s119
      %s122 = sphi 0, %s121
      %s136 = sphi 0, %s122
      %s140 = sphi 0, %s140
      %s142 = sphi 0, %s140
      %s143 = sphi 0, %s142
      %s157 = sphi 0, %s143
      %s161 = sphi 0, %s161
      %s163 = sphi 0, %s161
      %s164 = sphi 0, %s163
      %s178 = sphi 0, %s164
      %s182 = sphi 0, %s182
      %s184 = sphi 0, %s182
      %s185 = sphi 0, %s184
      %s199 = sphi 0, %s185
      %s203 = sphi 0, %s203
      %s205 = sphi 0, %s203
      %s206 = sphi 0, %s205
      %s220 = sphi 0, %s206
    $region4: #{tpu_custom_call.1} parent=1 // loop_header_branch
      %20 = sbr.rel (%p18) target = $region8
    $region5: #{tpu_custom_call.1} parent=1 // loop_body
      %s22 = ssub.s32 %s17, 1
      %s23 = ssub.s32 %s17, 2
      %s24 = sadd.s32 %s17, 1
      %s25 = ssub.s32 %s17, %s24
      %p26 = scmp.eq.s32.totalorder %s25, 0
      %s28 = sadd.s32 %s27, 1
      %s29 = scalar_select %p26, %s27, %s28
      %p32 = pneg %p26
      %p33 = scmp.eq.s32.totalorder %s17, 1
      %p34 = por %p32, %p33
      %p35 = scmp.ne.s32.totalorder %s27, %s30
      %p36 = scmp.eq.s32.totalorder %s17, 0
      %p37 = por %p35, %p36
      %p38 = scmp.ne.s32.totalorder %s27, %s30
      %p39 = scmp.eq.s32.totalorder %s22, 1
      %p40 = por %p38, %p39
      %p41 = scmp.ne.s32.totalorder %s30, %s31
      %p42 = scmp.eq.s32.totalorder %s22, 0
      %p43 = por %p41, %p42
      %p44 = scmp.ne.s32.totalorder %s30, %s31
      %p45 = scmp.eq.s32.totalorder %s23, 1
      %p46 = por %p44, %p45
      %p48 = scmp.ne.s32.totalorder %s31, %s47
      %p49 = scmp.eq.s32.totalorder %s23, 0
      %p50 = por %p48, %p49
      %s51 = ssub.s32 %s17, %s24
      %p52 = scmp.eq.s32.totalorder %s51, 0
      %s54 = sadd.s32 %s53, 1
      %s55 = scalar_select %p52, %s53, %s54
      %p58 = pneg %p52
      %p59 = scmp.eq.s32.totalorder %s17, 1
      %p60 = por %p58, %p59
      %p61 = scmp.ne.s32.totalorder %s53, %s56
      %p62 = scmp.eq.s32.totalorder %s17, 0
      %p63 = por %p61, %p62
      %p64 = scmp.ne.s32.totalorder %s53, %s56
      %p65 = scmp.eq.s32.totalorder %s22, 1
      %p66 = por %p64, %p65
      %p67 = scmp.ne.s32.totalorder %s56, %s57
      %p68 = scmp.eq.s32.totalorder %s22, 0
      %p69 = por %p67, %p68
      %p70 = scmp.ne.s32.totalorder %s56, %s57
      %p71 = scmp.eq.s32.totalorder %s23, 1
      %p72 = por %p70, %p71
      %p74 = scmp.ne.s32.totalorder %s57, %s73
      %p75 = scmp.eq.s32.totalorder %s23, 0
      %p76 = por %p74, %p75
      %s78 = sadd.s32 %s77, 1
      %p81 = scmp.eq.s32.totalorder %s17, 1
      %p82 = scmp.ne.s32.totalorder %s77, %s79
      %p83 = scmp.eq.s32.totalorder %s17, 0
      %p84 = por %p82, %p83
      %p85 = scmp.ne.s32.totalorder %s77, %s79
      %p86 = scmp.eq.s32.totalorder %s22, 1
      %p87 = por %p85, %p86
      %p88 = scmp.ne.s32.totalorder %s79, %s80
      %p89 = scmp.eq.s32.totalorder %s22, 0
      %p90 = por %p88, %p89
      %p91 = scmp.ne.s32.totalorder %s79, %s80
      %p92 = scmp.eq.s32.totalorder %s23, 1
      %p93 = por %p91, %p92
      %p95 = scmp.ne.s32.totalorder %s80, %s94
      %p96 = scmp.eq.s32.totalorder %s23, 0
      %p97 = por %p95, %p96
      %s99 = sadd.s32 %s98, 1
      %p102 = scmp.eq.s32.totalorder %s17, 1
      %p103 = scmp.ne.s32.totalorder %s98, %s100
      %p104 = scmp.eq.s32.totalorder %s17, 0
      %p105 = por %p103, %p104
      %p106 = scmp.ne.s32.totalorder %s98, %s100
      %p107 = scmp.eq.s32.totalorder %s22, 1
      %p108 = por %p106, %p107
      %p109 = scmp.ne.s32.totalorder %s100, %s101
      %p110 = scmp.eq.s32.totalorder %s22, 0
      %p111 = por %p109, %p110
      %p112 = scmp.ne.s32.totalorder %s100, %s101
      %p113 = scmp.eq.s32.totalorder %s23, 1
      %p114 = por %p112, %p113
      %p116 = scmp.ne.s32.totalorder %s101, %s115
      %p117 = scmp.eq.s32.totalorder %s23, 0
      %p118 = por %p116, %p117
      %s120 = sadd.s32 %s119, 1
      %p123 = scmp.eq.s32.totalorder %s17, 1
      %p124 = scmp.ne.s32.totalorder %s119, %s121
      %p125 = scmp.eq.s32.totalorder %s17, 0
      %p126 = por %p124, %p125
      %p127 = scmp.ne.s32.totalorder %s119, %s121
      %p128 = scmp.eq.s32.totalorder %s22, 1
      %p129 = por %p127, %p128
      %p130 = scmp.ne.s32.totalorder %s121, %s122
      %p131 = scmp.eq.s32.totalorder %s22, 0
      %p132 = por %p130, %p131
      %p133 = scmp.ne.s32.totalorder %s121, %s122
      %p134 = scmp.eq.s32.totalorder %s23, 1
      %p135 = por %p133, %p134
      %p137 = scmp.ne.s32.totalorder %s122, %s136
      %p138 = scmp.eq.s32.totalorder %s23, 0
      %p139 = por %p137, %p138
      %s141 = sadd.s32 %s140, 1
      %p144 = scmp.eq.s32.totalorder %s17, 1
      %p145 = scmp.ne.s32.totalorder %s140, %s142
      %p146 = scmp.eq.s32.totalorder %s17, 0
      %p147 = por %p145, %p146
      %p148 = scmp.ne.s32.totalorder %s140, %s142
      %p149 = scmp.eq.s32.totalorder %s22, 1
      %p150 = por %p148, %p149
      %p151 = scmp.ne.s32.totalorder %s142, %s143
      %p152 = scmp.eq.s32.totalorder %s22, 0
      %p153 = por %p151, %p152
      %p154 = scmp.ne.s32.totalorder %s142, %s143
      %p155 = scmp.eq.s32.totalorder %s23, 1
      %p156 = por %p154, %p155
      %p158 = scmp.ne.s32.totalorder %s143, %s157
      %p159 = scmp.eq.s32.totalorder %s23, 0
      %p160 = por %p158, %p159
      %s162 = sadd.s32 %s161, 1
      %p165 = scmp.eq.s32.totalorder %s17, 1
      %p166 = scmp.ne.s32.totalorder %s161, %s163
      %p167 = scmp.eq.s32.totalorder %s17, 0
      %p168 = por %p166, %p167
      %p169 = scmp.ne.s32.totalorder %s161, %s163
      %p170 = scmp.eq.s32.totalorder %s22, 1
      %p171 = por %p169, %p170
      %p172 = scmp.ne.s32.totalorder %s163, %s164
      %p173 = scmp.eq.s32.totalorder %s22, 0
      %p174 = por %p172, %p173
      %p175 = scmp.ne.s32.totalorder %s163, %s164
      %p176 = scmp.eq.s32.totalorder %s23, 1
      %p177 = por %p175, %p176
      %p179 = scmp.ne.s32.totalorder %s164, %s178
      %p180 = scmp.eq.s32.totalorder %s23, 0
      %p181 = por %p179, %p180
      %s183 = sadd.s32 %s182, 1
      %p186 = scmp.eq.s32.totalorder %s17, 1
      %p187 = scmp.ne.s32.totalorder %s182, %s184
      %p188 = scmp.eq.s32.totalorder %s17, 0
      %p189 = por %p187, %p188
      %p190 = scmp.ne.s32.totalorder %s182, %s184
      %p191 = scmp.eq.s32.totalorder %s22, 1
      %p192 = por %p190, %p191
      %p193 = scmp.ne.s32.totalorder %s184, %s185
      %p194 = scmp.eq.s32.totalorder %s22, 0
      %p195 = por %p193, %p194
      %p196 = scmp.ne.s32.totalorder %s184, %s185
      %p197 = scmp.eq.s32.totalorder %s23, 1
      %p198 = por %p196, %p197
      %p200 = scmp.ne.s32.totalorder %s185, %s199
      %p201 = scmp.eq.s32.totalorder %s23, 0
      %p202 = por %p200, %p201
      %s204 = sadd.s32 %s203, 1
      %p207 = scmp.eq.s32.totalorder %s17, 1
      %p208 = scmp.ne.s32.totalorder %s203, %s205
      %p209 = scmp.eq.s32.totalorder %s17, 0
      %p210 = por %p208, %p209
      %p211 = scmp.ne.s32.totalorder %s203, %s205
      %p212 = scmp.eq.s32.totalorder %s22, 1
      %p213 = por %p211, %p212
      %p214 = scmp.ne.s32.totalorder %s205, %s206
      %p215 = scmp.eq.s32.totalorder %s22, 0
      %p216 = por %p214, %p215
      %p217 = scmp.ne.s32.totalorder %s205, %s206
      %p218 = scmp.eq.s32.totalorder %s23, 1
      %p219 = por %p217, %p218
      %p221 = scmp.ne.s32.totalorder %s206, %s220
      %p222 = scmp.eq.s32.totalorder %s23, 0
      %p223 = por %p221, %p222
      %p224 = scmp.le.s32.totalorder 1, %s17
      %p225 = scmp.lt.s32.totalorder %s17, 3
      %p226 = pnand %p224, %p225
      %p227 = pneg %p226
      // Predicated region
      $region9: #{tpu_custom_call.1} parent=5 // pred_check
        _
      $region10: #{tpu_custom_call.1} parent=5 // pred_check_branch
        %229 = sbr.rel (%p226) target = $region12
      $region11: #{tpu_custom_call.1} parent=5 // pred_region
        %s230 = ssub.s32 %s17, 1
        // Predicated region
        $region13: #{tpu_custom_call.1} parent=11 // pred_check
          %p231 = pneg %p90
        $region14: #{tpu_custom_call.1} parent=11 // pred_check_branch
          %233 = sbr.rel (%p231) target = $region16
        $region15: #{tpu_custom_call.1} parent=11 // pred_region
          %s235 = ssub.s32 1024, 1024
          %236 = vsyncadd [#allocation5], %s235
          %s237 = sshll.u32 [#allocation4], 4
          %s238 = int_to_ptr.vmem [resolvable:$true] %s237
          %243 = dma.hbm_to_vmem [thread:$0]  %s2, 1024, %s238, [#allocation5], 128, 128, 8
        $region16: #{tpu_custom_call.1} parent=11 // pred_fallthru
          _
        // Predicated region
        $region17: #{tpu_custom_call.1} parent=11 // pred_check
          %p244 = pneg %p111
        $region18: #{tpu_custom_call.1} parent=11 // pred_check_branch
          %246 = sbr.rel (%p244) target = $region20
        $region19: #{tpu_custom_call.1} parent=11 // pred_region
          _
        $region20: #{tpu_custom_call.1} parent=11 // pred_fallthru
          _
        // Predicated region
        $region21: #{tpu_custom_call.1} parent=11 // pred_check
          %p247 = pneg %p132
        $region22: #{tpu_custom_call.1} parent=11 // pred_check_branch
          %249 = sbr.rel (%p247) target = $region24
        $region23: #{tpu_custom_call.1} parent=11 // pred_region
          %s251 = ssub.s32 4096, 4096
          %252 = vsyncadd [#allocation8], %s251
          %s253 = sshll.u32 [#allocation7], 4
          %s254 = int_to_ptr.vmem [resolvable:$true] %s253
          %259 = dma.hbm_to_vmem [thread:$0]  %s4, 4096, %s254, [#allocation8], 256, 256, 16
        $region24: #{tpu_custom_call.1} parent=11 // pred_fallthru
          _
        // Predicated region
        $region25: #{tpu_custom_call.1} parent=11 // pred_check
          %p260 = pneg %p153
        $region26: #{tpu_custom_call.1} parent=11 // pred_check_branch
          %262 = sbr.rel (%p260) target = $region28
        $region27: #{tpu_custom_call.1} parent=11 // pred_region
          _
        $region28: #{tpu_custom_call.1} parent=11 // pred_fallthru
          _
        // Predicated region
        $region29: #{tpu_custom_call.1} parent=11 // pred_check
          %p263 = pneg %p174
        $region30: #{tpu_custom_call.1} parent=11 // pred_check_branch
          %265 = sbr.rel (%p263) target = $region32
        $region31: #{tpu_custom_call.1} parent=11 // pred_region
          _
        $region32: #{tpu_custom_call.1} parent=11 // pred_fallthru
          _
        // Predicated region
        $region33: #{tpu_custom_call.1} parent=11 // pred_check
          %p266 = pneg %p195
        $region34: #{tpu_custom_call.1} parent=11 // pred_check_branch
          %268 = sbr.rel (%p266) target = $region36
        $region35: #{tpu_custom_call.1} parent=11 // pred_region
          _
        $region36: #{tpu_custom_call.1} parent=11 // pred_fallthru
          _
      $region12: #{tpu_custom_call.1} parent=5 // pred_fallthru
        _
      %p269 = scmp.lt.s32.totalorder %s17, 2
      // Predicated region
      $region37: #{tpu_custom_call.1} parent=5 // pred_check
        %p270 = pneg %p269
      $region38: #{tpu_custom_call.1} parent=5 // pred_check_branch
        %272 = sbr.rel (%p270) target = $region40
      $region39: #{tpu_custom_call.1} parent=5 // pred_region
        // Predicated region
        $region41: #{tpu_custom_call.1} parent=39 // pred_check
          %p273 = pneg %p37
        $region42: #{tpu_custom_call.1} parent=39 // pred_check_branch
          %275 = sbr.rel (%p273) target = $region44
        $region43: #{tpu_custom_call.1} parent=39 // pred_region
          %s276 = smul.u32 16, %s17
          %p277 = scmp.lt.s32.totalorder %s276, 31
          %s278 = scalar_select %p277, %s276, 31
          %s279 = smul.addr %s278, 8
          %s280 = scalar_lea.vmem %s0, %s279
          %s281 = smul.u32 16, %s17
        $region44: #{tpu_custom_call.1} parent=39 // pred_fallthru
          _
        // Predicated region
        $region45: #{tpu_custom_call.1} parent=39 // pred_check
          %p282 = pneg %p63
        $region46: #{tpu_custom_call.1} parent=39 // pred_check_branch
          %284 = sbr.rel (%p282) target = $region48
        $region47: #{tpu_custom_call.1} parent=39 // pred_region
          %p285 = scmp.lt.s32.totalorder %s17, 1
          %s286 = scalar_select %p285, %s17, 1
          %s287 = scalar_lea.vmem %s1, %s286
        $region48: #{tpu_custom_call.1} parent=39 // pred_fallthru
          _
      $region40: #{tpu_custom_call.1} parent=5 // pred_fallthru
        _
      %p288 = scmp.le.s32.totalorder 1, %s17
      %p289 = scmp.lt.s32.totalorder %s17, 3
      %p290 = pnand %p288, %p289
      %p291 = pneg %p290
      // Predicated region
      $region49: #{tpu_custom_call.1} parent=5 // pred_check
        _
      $region50: #{tpu_custom_call.1} parent=5 // pred_check_branch
        %293 = sbr.rel (%p290) target = $region52
      $region51: #{tpu_custom_call.1} parent=5 // pred_region
        %s294 = ssub.s32 %s17, 1
        // Predicated region
        $region53: #{tpu_custom_call.1} parent=51 // pred_check
          %p295 = pneg %p90
        $region54: #{tpu_custom_call.1} parent=51 // pred_check_branch
          %297 = sbr.rel (%p295) target = $region56
        $region55: #{tpu_custom_call.1} parent=51 // pred_region
          %298 = dma.done [#allocation5], 1024
        $region56: #{tpu_custom_call.1} parent=51 // pred_fallthru
          _
        // Predicated region
        $region57: #{tpu_custom_call.1} parent=51 // pred_check
          %p299 = pneg %p132
        $region58: #{tpu_custom_call.1} parent=51 // pred_check_branch
          %301 = sbr.rel (%p299) target = $region60
        $region59: #{tpu_custom_call.1} parent=51 // pred_region
          %302 = dma.done [#allocation8], 4096
        $region60: #{tpu_custom_call.1} parent=51 // pred_fallthru
          _
        %s303 = smul.u32 16, %s22
        %p304 = scmp.lt.s32.totalorder %s303, 31
        %s305 = scalar_select %p304, %s303, 31
        %s306 = smul.addr %s305, 8
        %s307 = scalar_lea.vmem %s0, %s306
        %p308 = pneg %p43
        %p309 = pneg %p40
        %p310 = scmp.lt.s32.totalorder %s22, 1
        %s311 = scalar_select %p310, %s22, 1
        %s312 = scalar_lea.vmem %s1, %s311
        %p313 = pneg %p69
        %p314 = pneg %p66
        %p315 = pneg %p90
        %p316 = pneg %p87
        %p317 = pneg %p111
        %p318 = pneg %p108
        %p319 = pneg %p132
        %p320 = pneg %p129
        %p321 = pneg %p153
        %p322 = pneg %p150
        %p323 = pneg %p174
        %p324 = pneg %p171
        %p325 = pneg %p195
        %p326 = pneg %p192
        %p327 = pneg %p216
        %p328 = pneg %p213
        %s329 = smul.u32 16, %s22
        %p330 = scmp.lt.s32.totalorder %s329, 31
        %s331 = scalar_select %p330, %s329, 31
        %s332 = smul.addr %s331, 8
        %s333 = scalar_lea.vmem %s0, %s332
        %s334 = smul.u32 16, %s22
        %p335 = scmp.lt.s32.totalorder %s22, 1
        %s336 = scalar_select %p335, %s22, 1
        %s337 = scalar_lea.vmem %s1, %s336
        %p339 = scmp.eq.s32.totalorder %s22, 0
        // Predicated region
        $region61: #{tpu_custom_call.1} parent=51 // pred_check
          %p340 = pneg %p339
        $region62: #{tpu_custom_call.1} parent=51 // pred_check_branch
          %342 = sbr.rel (%p340) target = $region64
        $region63: #{tpu_custom_call.1} parent=51 // pred_region
          %v343 = vld [vmem:[#allocation4] sm:$0xff]
          %v344 = vld [vmem:[#allocation4 + $0x8] sm:$0xff]
          %v345 = vld [vmem:[#allocation4 + $0x10] sm:$0xff]
          %v346 = vld [vmem:[#allocation4 + $0x18] sm:$0xff]
          %v347 = vld [vmem:[#allocation4 + $0x20] sm:$0xff]
          %v348 = vld [vmem:[#allocation4 + $0x28] sm:$0xff]
          %v349 = vld [vmem:[#allocation4 + $0x30] sm:$0xff]
          %v350 = vld [vmem:[#allocation4 + $0x38] sm:$0xff]
          %v351 = vpack.c.bf16 %v344, %v343
          %v352 = vpack.c.bf16 %v346, %v345
          %v353 = vpack.c.bf16 %v348, %v347
          %v354 = vpack.c.bf16 %v350, %v349
          %v355 = vld [vmem:[%s3] sm:$0xff]
          %v356 = vld [vmem:[%s3 + $0x8] sm:$0xff]
          %v357 = vld [vmem:[%s3 + $0x10] sm:$0xff]
          %v358 = vld [vmem:[%s3 + $0x18] sm:$0xff]
          %v359 = vld [vmem:[%s3 + $0x20] sm:$0xff]
          %v360 = vld [vmem:[%s3 + $0x28] sm:$0xff]
          %v361 = vld [vmem:[%s3 + $0x30] sm:$0xff]
          %v362 = vld [vmem:[%s3 + $0x38] sm:$0xff]
          %v363 = vld [vmem:[%s3 + $0x40] sm:$0xff]
          %v364 = vld [vmem:[%s3 + $0x48] sm:$0xff]
          %v365 = vld [vmem:[%s3 + $0x50] sm:$0xff]
          %v366 = vld [vmem:[%s3 + $0x58] sm:$0xff]
          %v367 = vld [vmem:[%s3 + $0x60] sm:$0xff]
          %v368 = vld [vmem:[%s3 + $0x68] sm:$0xff]
          %v369 = vld [vmem:[%s3 + $0x70] sm:$0xff]
          %v370 = vld [vmem:[%s3 + $0x78] sm:$0xff]
          %v371 = vld [vmem:[%s3 + $0x80] sm:$0xff]
          %v372 = vld [vmem:[%s3 + $0x88] sm:$0xff]
          %v373 = vld [vmem:[%s3 + $0x90] sm:$0xff]
          %v374 = vld [vmem:[%s3 + $0x98] sm:$0xff]
          %v375 = vld [vmem:[%s3 + $0xa0] sm:$0xff]
          %v376 = vld [vmem:[%s3 + $0xa8] sm:$0xff]
          %v377 = vld [vmem:[%s3 + $0xb0] sm:$0xff]
          %v378 = vld [vmem:[%s3 + $0xb8] sm:$0xff]
          %v379 = vld [vmem:[%s3 + $0xc0] sm:$0xff]
          %v380 = vld [vmem:[%s3 + $0xc8] sm:$0xff]
          %v381 = vld [vmem:[%s3 + $0xd0] sm:$0xff]
          %v382 = vld [vmem:[%s3 + $0xd8] sm:$0xff]
          %v383 = vld [vmem:[%s3 + $0xe0] sm:$0xff]
          %v384 = vld [vmem:[%s3 + $0xe8] sm:$0xff]
          %v385 = vld [vmem:[%s3 + $0xf0] sm:$0xff]
          %v386 = vld [vmem:[%s3 + $0xf8] sm:$0xff]
          %v387 = vld [vmem:[%s5] sm:$0xf]
          %v389 = vlaneseq
          %v390 = vshrl.u32 %v389, 7
          %v391 = vsub.s32 0, %v390
          %v392 = vrot.slane %v387, %v391
          %v393 = vlaneseq
          %v394 = vshrl.u32 %v393, 7
          %v395 = vsub.s32 1, %v394
          %v396 = vrot.slane %v387, %v395
          %v397 = vlaneseq
          %v398 = vshrl.u32 %v397, 7
          %v399 = vsub.s32 2, %v398
          %v400 = vrot.slane %v387, %v399
          %v401 = vlaneseq
          %v402 = vshrl.u32 %v401, 7
          %v403 = vsub.s32 3, %v402
          %v404 = vrot.slane %v387, %v403
          %v441 = vunpack.c.l.b16 %v355
          %v442 = vunpack.c.h.b16 %v355
          %v443 = vunpack.c.l.b16 %v356
          %v444 = vunpack.c.h.b16 %v356
          %v445 = vunpack.c.l.b16 %v357
          %v446 = vunpack.c.h.b16 %v357
          %v447 = vunpack.c.l.b16 %v358
          %v448 = vunpack.c.h.b16 %v358
          %v449 = vunpack.c.l.b16 %v359
          %v450 = vunpack.c.h.b16 %v359
          %v451 = vunpack.c.l.b16 %v360
          %v452 = vunpack.c.h.b16 %v360
          %v453 = vunpack.c.l.b16 %v361
          %v454 = vunpack.c.h.b16 %v361
          %v455 = vunpack.c.l.b16 %v362
          %v456 = vunpack.c.h.b16 %v362
          %v457 = vunpack.c.l.b16 %v363
          %v458 = vunpack.c.h.b16 %v363
          %v459 = vunpack.c.l.b16 %v364
          %v460 = vunpack.c.h.b16 %v364
          %v461 = vunpack.c.l.b16 %v365
          %v462 = vunpack.c.h.b16 %v365
          %v463 = vunpack.c.l.b16 %v366
          %v464 = vunpack.c.h.b16 %v366
          %v465 = vunpack.c.l.b16 %v367
          %v466 = vunpack.c.h.b16 %v367
          %v467 = vunpack.c.l.b16 %v368
          %v468 = vunpack.c.h.b16 %v368
          %v469 = vunpack.c.l.b16 %v369
          %v470 = vunpack.c.h.b16 %v369
          %v471 = vunpack.c.l.b16 %v370
          %v472 = vunpack.c.h.b16 %v370
          %v473 = vunpack.c.l.b16 %v371
          %v474 = vunpack.c.h.b16 %v371
          %v475 = vunpack.c.l.b16 %v372
          %v476 = vunpack.c.h.b16 %v372
          %v477 = vunpack.c.l.b16 %v373
          %v478 = vunpack.c.h.b16 %v373
          %v479 = vunpack.c.l.b16 %v374
          %v480 = vunpack.c.h.b16 %v374
          %v481 = vunpack.c.l.b16 %v375
          %v482 = vunpack.c.h.b16 %v375
          %v483 = vunpack.c.l.b16 %v376
          %v484 = vunpack.c.h.b16 %v376
          %v485 = vunpack.c.l.b16 %v377
          %v486 = vunpack.c.h.b16 %v377
          %v487 = vunpack.c.l.b16 %v378
          %v488 = vunpack.c.h.b16 %v378
          %v489 = vunpack.c.l.b16 %v379
          %v490 = vunpack.c.h.b16 %v379
          %v491 = vunpack.c.l.b16 %v380
          %v492 = vunpack.c.h.b16 %v380
          %v493 = vunpack.c.l.b16 %v381
          %v494 = vunpack.c.h.b16 %v381
          %v495 = vunpack.c.l.b16 %v382
          %v496 = vunpack.c.h.b16 %v382
          %v497 = vunpack.c.l.b16 %v383
          %v498 = vunpack.c.h.b16 %v383
          %v499 = vunpack.c.l.b16 %v384
          %v500 = vunpack.c.h.b16 %v384
          %v501 = vunpack.c.l.b16 %v385
          %v502 = vunpack.c.h.b16 %v385
          %v503 = vunpack.c.l.b16 %v386
          %v504 = vunpack.c.h.b16 %v386
          %v505 = vpack.c.b16 %v445, %v441
          %v506 = vpack.c.b16 %v446, %v442
          %v507 = vpack.c.b16 %v447, %v443
          %v508 = vpack.c.b16 %v448, %v444
          %v509 = vpack.c.b16 %v453, %v449
          %v510 = vpack.c.b16 %v454, %v450
          %v511 = vpack.c.b16 %v455, %v451
          %v512 = vpack.c.b16 %v456, %v452
          %v513 = vpack.c.b16 %v461, %v457
          %v514 = vpack.c.b16 %v462, %v458
          %v515 = vpack.c.b16 %v463, %v459
          %v516 = vpack.c.b16 %v464, %v460
          %v517 = vpack.c.b16 %v469, %v465
          %v518 = vpack.c.b16 %v470, %v466
          %v519 = vpack.c.b16 %v471, %v467
          %v520 = vpack.c.b16 %v472, %v468
          %v521 = vpack.c.b16 %v477, %v473
          %v522 = vpack.c.b16 %v478, %v474
          %v523 = vpack.c.b16 %v479, %v475
          %v524 = vpack.c.b16 %v480, %v476
          %v525 = vpack.c.b16 %v485, %v481
          %v526 = vpack.c.b16 %v486, %v482
          %v527 = vpack.c.b16 %v487, %v483
          %v528 = vpack.c.b16 %v488, %v484
          %v529 = vpack.c.b16 %v493, %v489
          %v530 = vpack.c.b16 %v494, %v490
          %v531 = vpack.c.b16 %v495, %v491
          %v532 = vpack.c.b16 %v496, %v492
          %v533 = vpack.c.b16 %v501, %v497
          %v534 = vpack.c.b16 %v502, %v498
          %v535 = vpack.c.b16 %v503, %v499
          %v536 = vpack.c.b16 %v504, %v500
          %569 = vmatprep.subr.bf16.mxu0 %v506
          %570 = vmatpush1.bf16.msra.mxu0 %v505
          %571 = vmatprep.subr.bf16.mxu0 %v510
          %572 = vmatpush1.bf16.msra.mxu0 %v509
          %573 = vmatprep.subr.bf16.mxu0 %v514
          %574 = vmatpush1.bf16.msra.mxu0 %v513
          %575 = vmatprep.subr.bf16.mxu0 %v518
          %576 = vmatpush1.bf16.msra.mxu0 %v517
          %577 = vmatprep.subr.bf16.mxu0 %v522
          %578 = vmatpush1.bf16.msra.mxu0 %v521
          %579 = vmatprep.subr.bf16.mxu0 %v526
          %580 = vmatpush1.bf16.msra.mxu0 %v525
          %581 = vmatprep.subr.bf16.mxu0 %v530
          %582 = vmatpush1.bf16.msra.mxu0 %v529
          %583 = vmatprep.subr.bf16.mxu0 %v534
          %584 = vmatpush1.bf16.msra.mxu0 %v533
          %585 = vmatprep.subr.bf16.mxu0 0
          %586 = vmatpush1.bf16.msra.mxu0 0
          %587 = vmatprep.subr.bf16.mxu0 0
          %588 = vmatpush1.bf16.msra.mxu0 0
          %589 = vmatprep.subr.bf16.mxu0 0
          %590 = vmatpush1.bf16.msra.mxu0 0
          %591 = vmatprep.subr.bf16.mxu0 0
          %592 = vmatpush1.bf16.msra.mxu0 0
          %593 = vmatprep.subr.bf16.mxu0 0
          %594 = vmatpush1.bf16.msra.mxu0 0
          %595 = vmatprep.subr.bf16.mxu0 0
          %596 = vmatpush1.bf16.msra.mxu0 0
          %597 = vmatprep.subr.bf16.mxu0 0
          %598 = vmatpush1.bf16.msra.mxu0 0
          %599 = vmatprep.subr.bf16.mxu0 0
          %600 = vmatpush1.bf16.msra.mxu0 0
          %601 = vmatprep.mubr.bf16.mxu0 0
          %602 = vmatmul.mubr.bf16.gmra.mrb[0].mxu0 %v351
          %v603 = vpop.f32.mrb[0].mxu0
          %v604 = vadd.f32 %v392, %v603
          %v605 = vpop.f32.mrb[0].mxu0
          %v606 = vadd.f32 %v396, %v605
          %v607 = vpop.f32.mrb[0].mxu0
          %v608 = vadd.f32 %v392, %v607
          %v609 = vpop.f32.mrb[0].mxu0
          %v610 = vadd.f32 %v396, %v609
          %611 = vmatprep.mubr.bf16.mxu0 0
          %612 = vmatmul.mubr.bf16.gmra.mrb[0].mxu0 %v352
          %v613 = vpop.f32.mrb[0].mxu0
          %v614 = vadd.f32 %v392, %v613
          %v615 = vpop.f32.mrb[0].mxu0
          %v616 = vadd.f32 %v396, %v615
          %v617 = vpop.f32.mrb[0].mxu0
          %v618 = vadd.f32 %v392, %v617
          %v619 = vpop.f32.mrb[0].mxu0
          %v620 = vadd.f32 %v396, %v619
          %621 = vmatprep.mubr.bf16.mxu0 0
          %622 = vmatmul.mubr.bf16.gmra.mrb[0].mxu0 %v353
          %v623 = vpop.f32.mrb[0].mxu0
          %v624 = vadd.f32 %v392, %v623
          %v625 = vpop.f32.mrb[0].mxu0
          %v626 = vadd.f32 %v396, %v625
          %v627 = vpop.f32.mrb[0].mxu0
          %v628 = vadd.f32 %v392, %v627
          %v629 = vpop.f32.mrb[0].mxu0
          %v630 = vadd.f32 %v396, %v629
          %631 = vmatprep.mubr.bf16.mxu0 0
          %632 = vmatmul.mubr.bf16.gmra.mrb[0].mxu0 %v354
          %v633 = vpop.f32.mrb[0].mxu0
          %v634 = vadd.f32 %v392, %v633
          %v635 = vpop.f32.mrb[0].mxu0
          %v636 = vadd.f32 %v396, %v635
          %v637 = vpop.f32.mrb[0].mxu0
          %v638 = vadd.f32 %v392, %v637
          %v639 = vpop.f32.mrb[0].mxu0
          %v640 = vadd.f32 %v396, %v639
          %641 = vdwg.mxu0
          %642 = vmatprep.subr.bf16.mxu0 %v508
          %643 = vmatpush1.bf16.msra.mxu0 %v507
          %644 = vmatprep.subr.bf16.mxu0 %v512
          %645 = vmatpush1.bf16.msra.mxu0 %v511
          %646 = vmatprep.subr.bf16.mxu0 %v516
          %647 = vmatpush1.bf16.msra.mxu0 %v515
          %648 = vmatprep.subr.bf16.mxu0 %v520
          %649 = vmatpush1.bf16.msra.mxu0 %v519
          %650 = vmatprep.subr.bf16.mxu0 %v524
          %651 = vmatpush1.bf16.msra.mxu0 %v523
          %652 = vmatprep.subr.bf16.mxu0 %v528
          %653 = vmatpush1.bf16.msra.mxu0 %v527
          %654 = vmatprep.subr.bf16.mxu0 %v532
          %655 = vmatpush1.bf16.msra.mxu0 %v531
          %656 = vmatprep.subr.bf16.mxu0 %v536
          %657 = vmatpush1.bf16.msra.mxu0 %v535
          %658 = vmatprep.subr.bf16.mxu0 0
          %659 = vmatpush1.bf16.msra.mxu0 0
          %660 = vmatprep.subr.bf16.mxu0 0
          %661 = vmatpush1.bf16.msra.mxu0 0
          %662 = vmatprep.subr.bf16.mxu0 0
          %663 = vmatpush1.bf16.msra.mxu0 0
          %664 = vmatprep.subr.bf16.mxu0 0
          %665 = vmatpush1.bf16.msra.mxu0 0
          %666 = vmatprep.subr.bf16.mxu0 0
          %667 = vmatpush1.bf16.msra.mxu0 0
          %668 = vmatprep.subr.bf16.mxu0 0
          %669 = vmatpush1.bf16.msra.mxu0 0
          %670 = vmatprep.subr.bf16.mxu0 0
          %671 = vmatpush1.bf16.msra.mxu0 0
          %672 = vmatprep.subr.bf16.mxu0 0
          %673 = vmatpush1.bf16.msra.mxu0 0
          %674 = vmatprep.mubr.bf16.mxu0 0
          %675 = vmatmul.mubr.bf16.gmra.mrb[0].mxu0 %v351
          %v676 = vpop.f32.mrb[0].mxu0
          %v677 = vadd.f32 %v400, %v676
          %v678 = vpop.f32.mrb[0].mxu0
          %v679 = vadd.f32 %v404, %v678
          %v680 = vpop.f32.mrb[0].mxu0
          %v681 = vadd.f32 %v400, %v680
          %v682 = vpop.f32.mrb[0].mxu0
          %v683 = vadd.f32 %v404, %v682
          %684 = vmatprep.mubr.bf16.mxu0 0
          %685 = vmatmul.mubr.bf16.gmra.mrb[0].mxu0 %v352
          %v686 = vpop.f32.mrb[0].mxu0
          %v687 = vadd.f32 %v400, %v686
          %v688 = vpop.f32.mrb[0].mxu0
          %v689 = vadd.f32 %v404, %v688
          %v690 = vpop.f32.mrb[0].mxu0
          %v691 = vadd.f32 %v400, %v690
          %v692 = vpop.f32.mrb[0].mxu0
          %v693 = vadd.f32 %v404, %v692
          %694 = vmatprep.mubr.bf16.mxu0 0
          %695 = vmatmul.mubr.bf16.gmra.mrb[0].mxu0 %v353
          %v696 = vpop.f32.mrb[0].mxu0
          %v697 = vadd.f32 %v400, %v696
          %v698 = vpop.f32.mrb[0].mxu0
          %v699 = vadd.f32 %v404, %v698
          %v700 = vpop.f32.mrb[0].mxu0
          %v701 = vadd.f32 %v400, %v700
          %v702 = vpop.f32.mrb[0].mxu0
          %v703 = vadd.f32 %v404, %v702
          %704 = vmatprep.mubr.bf16.mxu0 0
          %705 = vmatmul.mubr.bf16.gmra.mrb[0].mxu0 %v354
          %v706 = vpop.f32.mrb[0].mxu0
          %v707 = vadd.f32 %v400, %v706
          %v708 = vpop.f32.mrb[0].mxu0
          %v709 = vadd.f32 %v404, %v708
          %v710 = vpop.f32.mrb[0].mxu0
          %v711 = vadd.f32 %v400, %v710
          %v712 = vpop.f32.mrb[0].mxu0
          %v713 = vadd.f32 %v404, %v712
          %714 = vdwg.mxu0
          %v715 = vpack.c.bf16 %v608, %v604
          %v716 = vpack.c.bf16 %v610, %v606
          %v717 = vpack.c.bf16 %v681, %v677
          %v718 = vpack.c.bf16 %v683, %v679
          %v719 = vpack.c.bf16 %v618, %v614
          %v720 = vpack.c.bf16 %v620, %v616
          %v721 = vpack.c.bf16 %v691, %v687
          %v722 = vpack.c.bf16 %v693, %v689
          %v723 = vpack.c.bf16 %v628, %v624
          %v724 = vpack.c.bf16 %v630, %v626
          %v725 = vpack.c.bf16 %v701, %v697
          %v726 = vpack.c.bf16 %v703, %v699
          %v727 = vpack.c.bf16 %v638, %v634
          %v728 = vpack.c.bf16 %v640, %v636
          %v729 = vpack.c.bf16 %v711, %v707
          %v730 = vpack.c.bf16 %v713, %v709
          %731 = vst [vmem:[#allocation2] sm:$0xff] %v715
          %732 = vst [vmem:[#allocation2 + $0x8] sm:$0xff] %v716
          %733 = vst [vmem:[#allocation2 + $0x10] sm:$0xff] %v717
          %734 = vst [vmem:[#allocation2 + $0x18] sm:$0xff] %v718
          %735 = vst [vmem:[#allocation2 + $0x20] sm:$0xff] %v719
          %736 = vst [vmem:[#allocation2 + $0x28] sm:$0xff] %v720
          %737 = vst [vmem:[#allocation2 + $0x30] sm:$0xff] %v721
          %738 = vst [vmem:[#allocation2 + $0x38] sm:$0xff] %v722
          %739 = vst [vmem:[#allocation2 + $0x40] sm:$0xff] %v723
          %740 = vst [vmem:[#allocation2 + $0x48] sm:$0xff] %v724
          %741 = vst [vmem:[#allocation2 + $0x50] sm:$0xff] %v725
          %742 = vst [vmem:[#allocation2 + $0x58] sm:$0xff] %v726
          %743 = vst [vmem:[#allocation2 + $0x60] sm:$0xff] %v727
          %744 = vst [vmem:[#allocation2 + $0x68] sm:$0xff] %v728
          %745 = vst [vmem:[#allocation2 + $0x70] sm:$0xff] %v729
          %746 = vst [vmem:[#allocation2 + $0x78] sm:$0xff] %v730
          %747 = vst [vmem:[#allocation3] sm:$0xff] 0.0
          %748 = vst [vmem:[#allocation3 + $0x8] sm:$0xff] 0.0
          %749 = vst [vmem:[#allocation3 + $0x10] sm:$0xff] 0.0
          %750 = vst [vmem:[#allocation3 + $0x18] sm:$0xff] 0.0
          %751 = vst [vmem:[#allocation3 + $0x20] sm:$0xff] 0.0
          %752 = vst [vmem:[#allocation3 + $0x28] sm:$0xff] 0.0
          %753 = vst [vmem:[#allocation3 + $0x30] sm:$0xff] 0.0
          %754 = vst [vmem:[#allocation3 + $0x38] sm:$0xff] 0.0
        $region64: #{tpu_custom_call.1} parent=51 // pred_fallthru
          _
        %v755 = vld [vmem:[#allocation7] sm:$0xff]
        %v756 = vld [vmem:[#allocation7 + $0x8] sm:$0xff]
        %v757 = vld [vmem:[#allocation7 + $0x10] sm:$0xff]
        %v758 = vld [vmem:[#allocation7 + $0x18] sm:$0xff]
        %v759 = vld [vmem:[#allocation7 + $0x20] sm:$0xff]
        %v760 = vld [vmem:[#allocation7 + $0x28] sm:$0xff]
        %v761 = vld [vmem:[#allocation7 + $0x30] sm:$0xff]
        %v762 = vld [vmem:[#allocation7 + $0x38] sm:$0xff]
        %v763 = vld [vmem:[#allocation7 + $0x40] sm:$0xff]
        %v764 = vld [vmem:[#allocation7 + $0x48] sm:$0xff]
        %v765 = vld [vmem:[#allocation7 + $0x50] sm:$0xff]
        %v766 = vld [vmem:[#allocation7 + $0x58] sm:$0xff]
        %v767 = vld [vmem:[#allocation7 + $0x60] sm:$0xff]
        %v768 = vld [vmem:[#allocation7 + $0x68] sm:$0xff]
        %v769 = vld [vmem:[#allocation7 + $0x70] sm:$0xff]
        %v770 = vld [vmem:[#allocation7 + $0x78] sm:$0xff]
        %v771 = vld [vmem:[#allocation7 + $0x80] sm:$0xff]
        %v772 = vld [vmem:[#allocation7 + $0x88] sm:$0xff]
        %v773 = vld [vmem:[#allocation7 + $0x90] sm:$0xff]
        %v774 = vld [vmem:[#allocation7 + $0x98] sm:$0xff]
        %v775 = vld [vmem:[#allocation7 + $0xa0] sm:$0xff]
        %v776 = vld [vmem:[#allocation7 + $0xa8] sm:$0xff]
        %v777 = vld [vmem:[#allocation7 + $0xb0] sm:$0xff]
        %v778 = vld [vmem:[#allocation7 + $0xb8] sm:$0xff]
        %v779 = vld [vmem:[#allocation7 + $0xc0] sm:$0xff]
        %v780 = vld [vmem:[#allocation7 + $0xc8] sm:$0xff]
        %v781 = vld [vmem:[#allocation7 + $0xd0] sm:$0xff]
        %v782 = vld [vmem:[#allocation7 + $0xd8] sm:$0xff]
        %v783 = vld [vmem:[#allocation7 + $0xe0] sm:$0xff]
        %v784 = vld [vmem:[#allocation7 + $0xe8] sm:$0xff]
        %v785 = vld [vmem:[#allocation7 + $0xf0] sm:$0xff]
        %v786 = vld [vmem:[#allocation7 + $0xf8] sm:$0xff]
        %v787 = vld [vmem:[#allocation2] sm:$0xff]
        %v788 = vld [vmem:[#allocation2 + $0x8] sm:$0xff]
        %v789 = vld [vmem:[#allocation2 + $0x10] sm:$0xff]
        %v790 = vld [vmem:[#allocation2 + $0x18] sm:$0xff]
        %v791 = vld [vmem:[#allocation2 + $0x20] sm:$0xff]
        %v792 = vld [vmem:[#allocation2 + $0x28] sm:$0xff]
        %v793 = vld [vmem:[#allocation2 + $0x30] sm:$0xff]
        %v794 = vld [vmem:[#allocation2 + $0x38] sm:$0xff]
        %v795 = vld [vmem:[#allocation2 + $0x40] sm:$0xff]
        %v796 = vld [vmem:[#allocation2 + $0x48] sm:$0xff]
        %v797 = vld [vmem:[#allocation2 + $0x50] sm:$0xff]
        %v798 = vld [vmem:[#allocation2 + $0x58] sm:$0xff]
        %v799 = vld [vmem:[#allocation2 + $0x60] sm:$0xff]
        %v800 = vld [vmem:[#allocation2 + $0x68] sm:$0xff]
        %v801 = vld [vmem:[#allocation2 + $0x70] sm:$0xff]
        %v802 = vld [vmem:[#allocation2 + $0x78] sm:$0xff]
        %v803 = vlaneseq
        %v804 = vand.u32 %v803, 127
        %v805 = vld [vmem:[%s333] sm:$0xff]
        %v806 = vld [vmem:[%s333 + $0x8] sm:$0xff]
        %v807 = vld [vmem:[%s333 + $0x10] sm:$0xff]
        %v808 = vld [vmem:[%s333 + $0x18] sm:$0xff]
        %v809 = vld [vmem:[%s333 + $0x20] sm:$0xff]
        %v810 = vld [vmem:[%s333 + $0x28] sm:$0xff]
        %v811 = vld [vmem:[%s333 + $0x30] sm:$0xff]
        %v812 = vld [vmem:[%s333 + $0x38] sm:$0xff]
        %v813 = vld [vmem:[%s333 + $0x40] sm:$0xff]
        %v814 = vld [vmem:[%s333 + $0x48] sm:$0xff]
        %v815 = vld [vmem:[%s333 + $0x50] sm:$0xff]
        %v816 = vld [vmem:[%s333 + $0x58] sm:$0xff]
        %v817 = vld [vmem:[%s333 + $0x60] sm:$0xff]
        %v818 = vld [vmem:[%s333 + $0x68] sm:$0xff]
        %v819 = vld [vmem:[%s333 + $0x70] sm:$0xff]
        %v820 = vld [vmem:[%s333 + $0x78] sm:$0xff]
        %821 = vset.pattern.permute.xlu0 0
        %822 = vperm.xlu0 %821, %v805
        %v823 = vpop.permute.xlu0 %822
        %824 = vset.pattern.permute.xlu0 0
        %825 = vperm.xlu0 %824, %v806
        %v826 = vpop.permute.xlu0 %825
        %827 = vset.pattern.permute.xlu0 0
        %828 = vperm.xlu0 %827, %v807
        %v829 = vpop.permute.xlu0 %828
        %830 = vset.pattern.permute.xlu0 0
        %831 = vperm.xlu0 %830, %v808
        %v832 = vpop.permute.xlu0 %831
        %833 = vset.pattern.permute.xlu0 0
        %834 = vperm.xlu0 %833, %v809
        %v835 = vpop.permute.xlu0 %834
        %836 = vset.pattern.permute.xlu0 0
        %837 = vperm.xlu0 %836, %v810
        %v838 = vpop.permute.xlu0 %837
        %839 = vset.pattern.permute.xlu0 0
        %840 = vperm.xlu0 %839, %v811
        %v841 = vpop.permute.xlu0 %840
        %842 = vset.pattern.permute.xlu0 0
        %843 = vperm.xlu0 %842, %v812
        %v844 = vpop.permute.xlu0 %843
        %845 = vset.pattern.permute.xlu0 0
        %846 = vperm.xlu0 %845, %v813
        %v847 = vpop.permute.xlu0 %846
        %848 = vset.pattern.permute.xlu0 0
        %849 = vperm.xlu0 %848, %v814
        %v850 = vpop.permute.xlu0 %849
        %851 = vset.pattern.permute.xlu0 0
        %852 = vperm.xlu0 %851, %v815
        %v853 = vpop.permute.xlu0 %852
        %854 = vset.pattern.permute.xlu0 0
        %855 = vperm.xlu0 %854, %v816
        %v856 = vpop.permute.xlu0 %855
        %857 = vset.pattern.permute.xlu0 0
        %858 = vperm.xlu0 %857, %v817
        %v859 = vpop.permute.xlu0 %858
        %860 = vset.pattern.permute.xlu0 0
        %861 = vperm.xlu0 %860, %v818
        %v862 = vpop.permute.xlu0 %861
        %863 = vset.pattern.permute.xlu0 0
        %864 = vperm.xlu0 %863, %v819
        %v865 = vpop.permute.xlu0 %864
        %866 = vset.pattern.permute.xlu0 0
        %867 = vperm.xlu0 %866, %v820
        %v868 = vpop.permute.xlu0 %867
        %vm869 = vcmp.eq.s32.totalorder %v804, %v823
        %vm870 = vcmp.eq.s32.totalorder %v804, %v826
        %vm871 = vcmp.eq.s32.totalorder %v804, %v829
        %vm872 = vcmp.eq.s32.totalorder %v804, %v832
        %vm873 = vcmp.eq.s32.totalorder %v804, %v835
        %vm874 = vcmp.eq.s32.totalorder %v804, %v838
        %vm875 = vcmp.eq.s32.totalorder %v804, %v841
        %vm876 = vcmp.eq.s32.totalorder %v804, %v844
        %vm877 = vcmp.eq.s32.totalorder %v804, %v847
        %vm878 = vcmp.eq.s32.totalorder %v804, %v850
        %vm879 = vcmp.eq.s32.totalorder %v804, %v853
        %vm880 = vcmp.eq.s32.totalorder %v804, %v856
        %vm881 = vcmp.eq.s32.totalorder %v804, %v859
        %vm882 = vcmp.eq.s32.totalorder %v804, %v862
        %vm883 = vcmp.eq.s32.totalorder %v804, %v865
        %vm884 = vcmp.eq.s32.totalorder %v804, %v868
        %v885 = vsel %vm869, 1, 0
        %v886 = vsel %vm870, 1, 0
        %v887 = vsel %vm871, 1, 0
        %v888 = vsel %vm872, 1, 0
        %v889 = vsel %vm873, 1, 0
        %v890 = vsel %vm874, 1, 0
        %v891 = vsel %vm875, 1, 0
        %v892 = vsel %vm876, 1, 0
        %v893 = vsel %vm877, 1, 0
        %v894 = vsel %vm878, 1, 0
        %v895 = vsel %vm879, 1, 0
        %v896 = vsel %vm880, 1, 0
        %v897 = vsel %vm881, 1, 0
        %v898 = vsel %vm882, 1, 0
        %v899 = vsel %vm883, 1, 0
        %v900 = vsel %vm884, 1, 0
        %v901 = vcvt.s32.f32 %v885
        %v902 = vcvt.s32.f32 %v886
        %v903 = vcvt.s32.f32 %v887
        %v904 = vcvt.s32.f32 %v888
        %v905 = vcvt.s32.f32 %v889
        %v906 = vcvt.s32.f32 %v890
        %v907 = vcvt.s32.f32 %v891
        %v908 = vcvt.s32.f32 %v892
        %v909 = vcvt.s32.f32 %v893
        %v910 = vcvt.s32.f32 %v894
        %v911 = vcvt.s32.f32 %v895
        %v912 = vcvt.s32.f32 %v896
        %v913 = vcvt.s32.f32 %v897
        %v914 = vcvt.s32.f32 %v898
        %v915 = vcvt.s32.f32 %v899
        %v916 = vcvt.s32.f32 %v900
        %v917 = vpack.c.bf16 %v902, %v901
        %v918 = vpack.c.bf16 %v904, %v903
        %v919 = vpack.c.bf16 %v906, %v905
        %v920 = vpack.c.bf16 %v908, %v907
        %v921 = vpack.c.bf16 %v910, %v909
        %v922 = vpack.c.bf16 %v912, %v911
        %v923 = vpack.c.bf16 %v914, %v913
        %v924 = vpack.c.bf16 %v916, %v915
        %v957 = vunpack.c.l.b16 %v755
        %v958 = vunpack.c.h.b16 %v755
        %v959 = vunpack.c.l.b16 %v756
        %v960 = vunpack.c.h.b16 %v756
        %v961 = vunpack.c.l.b16 %v757
        %v962 = vunpack.c.h.b16 %v757
        %v963 = vunpack.c.l.b16 %v758
        %v964 = vunpack.c.h.b16 %v758
        %v965 = vunpack.c.l.b16 %v759
        %v966 = vunpack.c.h.b16 %v759
        %v967 = vunpack.c.l.b16 %v760
        %v968 = vunpack.c.h.b16 %v760
        %v969 = vunpack.c.l.b16 %v761
        %v970 = vunpack.c.h.b16 %v761
        %v971 = vunpack.c.l.b16 %v762
        %v972 = vunpack.c.h.b16 %v762
        %v973 = vunpack.c.l.b16 %v763
        %v974 = vunpack.c.h.b16 %v763
        %v975 = vunpack.c.l.b16 %v764
        %v976 = vunpack.c.h.b16 %v764
        %v977 = vunpack.c.l.b16 %v765
        %v978 = vunpack.c.h.b16 %v765
        %v979 = vunpack.c.l.b16 %v766
        %v980 = vunpack.c.h.b16 %v766
        %v981 = vunpack.c.l.b16 %v767
        %v982 = vunpack.c.h.b16 %v767
        %v983 = vunpack.c.l.b16 %v768
        %v984 = vunpack.c.h.b16 %v768
        %v985 = vunpack.c.l.b16 %v769
        %v986 = vunpack.c.h.b16 %v769
        %v987 = vunpack.c.l.b16 %v770
        %v988 = vunpack.c.h.b16 %v770
        %v989 = vunpack.c.l.b16 %v771
        %v990 = vunpack.c.h.b16 %v771
        %v991 = vunpack.c.l.b16 %v772
        %v992 = vunpack.c.h.b16 %v772
        %v993 = vunpack.c.l.b16 %v773
        %v994 = vunpack.c.h.b16 %v773
        %v995 = vunpack.c.l.b16 %v774
        %v996 = vunpack.c.h.b16 %v774
        %v997 = vunpack.c.l.b16 %v775
        %v998 = vunpack.c.h.b16 %v775
        %v999 = vunpack.c.l.b16 %v776
        %v1000 = vunpack.c.h.b16 %v776
        %v1001 = vunpack.c.l.b16 %v777
        %v1002 = vunpack.c.h.b16 %v777
        %v1003 = vunpack.c.l.b16 %v778
        %v1004 = vunpack.c.h.b16 %v778
        %v1005 = vunpack.c.l.b16 %v779
        %v1006 = vunpack.c.h.b16 %v779
        %v1007 = vunpack.c.l.b16 %v780
        %v1008 = vunpack.c.h.b16 %v780
        %v1009 = vunpack.c.l.b16 %v781
        %v1010 = vunpack.c.h.b16 %v781
        %v1011 = vunpack.c.l.b16 %v782
        %v1012 = vunpack.c.h.b16 %v782
        %v1013 = vunpack.c.l.b16 %v783
        %v1014 = vunpack.c.h.b16 %v783
        %v1015 = vunpack.c.l.b16 %v784
        %v1016 = vunpack.c.h.b16 %v784
        %v1017 = vunpack.c.l.b16 %v785
        %v1018 = vunpack.c.h.b16 %v785
        %v1019 = vunpack.c.l.b16 %v786
        %v1020 = vunpack.c.h.b16 %v786
        %v1021 = vpack.c.b16 %v961, %v957
        %v1022 = vpack.c.b16 %v962, %v958
        %v1023 = vpack.c.b16 %v963, %v959
        %v1024 = vpack.c.b16 %v964, %v960
        %v1025 = vpack.c.b16 %v969, %v965
        %v1026 = vpack.c.b16 %v970, %v966
        %v1027 = vpack.c.b16 %v971, %v967
        %v1028 = vpack.c.b16 %v972, %v968
        %v1029 = vpack.c.b16 %v977, %v973
        %v1030 = vpack.c.b16 %v978, %v974
        %v1031 = vpack.c.b16 %v979, %v975
        %v1032 = vpack.c.b16 %v980, %v976
        %v1033 = vpack.c.b16 %v985, %v981
        %v1034 = vpack.c.b16 %v986, %v982
        %v1035 = vpack.c.b16 %v987, %v983
        %v1036 = vpack.c.b16 %v988, %v984
        %v1037 = vpack.c.b16 %v993, %v989
        %v1038 = vpack.c.b16 %v994, %v990
        %v1039 = vpack.c.b16 %v995, %v991
        %v1040 = vpack.c.b16 %v996, %v992
        %v1041 = vpack.c.b16 %v1001, %v997
        %v1042 = vpack.c.b16 %v1002, %v998
        %v1043 = vpack.c.b16 %v1003, %v999
        %v1044 = vpack.c.b16 %v1004, %v1000
        %v1045 = vpack.c.b16 %v1009, %v1005
        %v1046 = vpack.c.b16 %v1010, %v1006
        %v1047 = vpack.c.b16 %v1011, %v1007
        %v1048 = vpack.c.b16 %v1012, %v1008
        %v1049 = vpack.c.b16 %v1017, %v1013
        %v1050 = vpack.c.b16 %v1018, %v1014
        %v1051 = vpack.c.b16 %v1019, %v1015
        %v1052 = vpack.c.b16 %v1020, %v1016
        %1085 = vmatprep.subr.bf16.mxu0 %v1022
        %1086 = vmatpush1.bf16.msra.mxu0 %v1021
        %1087 = vmatprep.subr.bf16.mxu0 %v1026
        %1088 = vmatpush1.bf16.msra.mxu0 %v1025
        %1089 = vmatprep.subr.bf16.mxu0 %v1030
        %1090 = vmatpush1.bf16.msra.mxu0 %v1029
        %1091 = vmatprep.subr.bf16.mxu0 %v1034
        %1092 = vmatpush1.bf16.msra.mxu0 %v1033
        %1093 = vmatprep.subr.bf16.mxu0 %v1038
        %1094 = vmatpush1.bf16.msra.mxu0 %v1037
        %1095 = vmatprep.subr.bf16.mxu0 %v1042
        %1096 = vmatpush1.bf16.msra.mxu0 %v1041
        %1097 = vmatprep.subr.bf16.mxu0 %v1046
        %1098 = vmatpush1.bf16.msra.mxu0 %v1045
        %1099 = vmatprep.subr.bf16.mxu0 %v1050
        %1100 = vmatpush1.bf16.msra.mxu0 %v1049
        %1101 = vmatprep.subr.bf16.mxu0 0
        %1102 = vmatpush1.bf16.msra.mxu0 0
        %1103 = vmatprep.subr.bf16.mxu0 0
        %1104 = vmatpush1.bf16.msra.mxu0 0
        %1105 = vmatprep.subr.bf16.mxu0 0
        %1106 = vmatpush1.bf16.msra.mxu0 0
        %1107 = vmatprep.subr.bf16.mxu0 0
        %1108 = vmatpush1.bf16.msra.mxu0 0
        %1109 = vmatprep.subr.bf16.mxu0 0
        %1110 = vmatpush1.bf16.msra.mxu0 0
        %1111 = vmatprep.subr.bf16.mxu0 0
        %1112 = vmatpush1.bf16.msra.mxu0 0
        %1113 = vmatprep.subr.bf16.mxu0 0
        %1114 = vmatpush1.bf16.msra.mxu0 0
        %1115 = vmatprep.subr.bf16.mxu0 0
        %1116 = vmatpush1.bf16.msra.mxu0 0
        %1117 = vmatprep.mubr.bf16.mxu0 0
        %1118 = vmatmul.mubr.bf16.gmra.mrb[0].mxu0 0
        %v1119 = vpop.f32.mrb[0].mxu0
        %v1120 = vadd.f32 0.0, %v1119
        %v1121 = vpop.f32.mrb[0].mxu0
        %v1122 = vadd.f32 0.0, %v1121
        %v1123 = vpop.f32.mrb[0].mxu0
        %v1124 = vadd.f32 0.0, %v1123
        %v1125 = vpop.f32.mrb[0].mxu0
        %v1126 = vadd.f32 0.0, %v1125
        %1127 = vmatprep.mubr.bf16.mxu0 0
        %1128 = vmatmul.mubr.bf16.gmra.mrb[0].mxu0 0
        %v1129 = vpop.f32.mrb[0].mxu0
        %v1130 = vadd.f32 0.0, %v1129
        %v1131 = vpop.f32.mrb[0].mxu0
        %v1132 = vadd.f32 0.0, %v1131
        %v1133 = vpop.f32.mrb[0].mxu0
        %v1134 = vadd.f32 0.0, %v1133
        %v1135 = vpop.f32.mrb[0].mxu0
        %v1136 = vadd.f32 0.0, %v1135
        %1137 = vmatprep.mubr.bf16.mxu0 0
        %1138 = vmatmul.mubr.bf16.gmra.mrb[0].mxu0 0
        %v1139 = vpop.f32.mrb[0].mxu0
        %v1140 = vadd.f32 0.0, %v1139
        %v1141 = vpop.f32.mrb[0].mxu0
        %v1142 = vadd.f32 0.0, %v1141
        %v1143 = vpop.f32.mrb[0].mxu0
        %v1144 = vadd.f32 0.0, %v1143
        %v1145 = vpop.f32.mrb[0].mxu0
        %v1146 = vadd.f32 0.0, %v1145
        %1147 = vmatprep.mubr.bf16.mxu0 0
        %1148 = vmatmul.mubr.bf16.gmra.mrb[0].mxu0 0
        %v1149 = vpop.f32.mrb[0].mxu0
        %v1150 = vadd.f32 0.0, %v1149
        %v1151 = vpop.f32.mrb[0].mxu0
        %v1152 = vadd.f32 0.0, %v1151
        %v1153 = vpop.f32.mrb[0].mxu0
        %v1154 = vadd.f32 0.0, %v1153
        %v1155 = vpop.f32.mrb[0].mxu0
        %v1156 = vadd.f32 0.0, %v1155
        %1157 = vmatprep.mubr.bf16.mxu0 0
        %1158 = vmatmul.mubr.bf16.gmra.mrb[0].mxu0 0
        %v1159 = vpop.f32.mrb[0].mxu0
        %v1160 = vadd.f32 0.0, %v1159
        %v1161 = vpop.f32.mrb[0].mxu0
        %v1162 = vadd.f32 0.0, %v1161
        %v1163 = vpop.f32.mrb[0].mxu0
        %v1164 = vadd.f32 0.0, %v1163
        %v1165 = vpop.f32.mrb[0].mxu0
        %v1166 = vadd.f32 0.0, %v1165
        %1167 = vmatprep.mubr.bf16.mxu0 0
        %1168 = vmatmul.mubr.bf16.gmra.mrb[0].mxu0 0
        %v1169 = vpop.f32.mrb[0].mxu0
        %v1170 = vadd.f32 0.0, %v1169
        %v1171 = vpop.f32.mrb[0].mxu0
        %v1172 = vadd.f32 0.0, %v1171
        %v1173 = vpop.f32.mrb[0].mxu0
        %v1174 = vadd.f32 0.0, %v1173
        %v1175 = vpop.f32.mrb[0].mxu0
        %v1176 = vadd.f32 0.0, %v1175
        %1177 = vmatprep.mubr.bf16.mxu0 0
        %1178 = vmatmul.mubr.bf16.gmra.mrb[0].mxu0 0
        %v1179 = vpop.f32.mrb[0].mxu0
        %v1180 = vadd.f32 0.0, %v1179
        %v1181 = vpop.f32.mrb[0].mxu0
        %v1182 = vadd.f32 0.0, %v1181
        %v1183 = vpop.f32.mrb[0].mxu0
        %v1184 = vadd.f32 0.0, %v1183
        %v1185 = vpop.f32.mrb[0].mxu0
        %v1186 = vadd.f32 0.0, %v1185
        %1187 = vmatprep.mubr.bf16.mxu0 0
        %1188 = vmatmul.mubr.bf16.gmra.mrb[0].mxu0 0
        %v1189 = vpop.f32.mrb[0].mxu0
        %v1190 = vadd.f32 0.0, %v1189
        %v1191 = vpop.f32.mrb[0].mxu0
        %v1192 = vadd.f32 0.0, %v1191
        %v1193 = vpop.f32.mrb[0].mxu0
        %v1194 = vadd.f32 0.0, %v1193
        %v1195 = vpop.f32.mrb[0].mxu0
        %v1196 = vadd.f32 0.0, %v1195
        %1197 = vdwg.mxu0
        %1198 = vmatprep.subr.bf16.mxu0 %v1024
        %1199 = vmatpush1.bf16.msra.mxu0 %v1023
        %1200 = vmatprep.subr.bf16.mxu0 %v1028
        %1201 = vmatpush1.bf16.msra.mxu0 %v1027
        %1202 = vmatprep.subr.bf16.mxu0 %v1032
        %1203 = vmatpush1.bf16.msra.mxu0 %v1031
        %1204 = vmatprep.subr.bf16.mxu0 %v1036
        %1205 = vmatpush1.bf16.msra.mxu0 %v1035
        %1206 = vmatprep.subr.bf16.mxu0 %v1040
        %1207 = vmatpush1.bf16.msra.mxu0 %v1039
        %1208 = vmatprep.subr.bf16.mxu0 %v1044
        %1209 = vmatpush1.bf16.msra.mxu0 %v1043
        %1210 = vmatprep.subr.bf16.mxu0 %v1048
        %1211 = vmatpush1.bf16.msra.mxu0 %v1047
        %1212 = vmatprep.subr.bf16.mxu0 %v1052
        %1213 = vmatpush1.bf16.msra.mxu0 %v1051
        %1214 = vmatprep.subr.bf16.mxu0 0
        %1215 = vmatpush1.bf16.msra.mxu0 0
        %1216 = vmatprep.subr.bf16.mxu0 0
        %1217 = vmatpush1.bf16.msra.mxu0 0
        %1218 = vmatprep.subr.bf16.mxu0 0
        %1219 = vmatpush1.bf16.msra.mxu0 0
        %1220 = vmatprep.subr.bf16.mxu0 0
        %1221 = vmatpush1.bf16.msra.mxu0 0
        %1222 = vmatprep.subr.bf16.mxu0 0
        %1223 = vmatpush1.bf16.msra.mxu0 0
        %1224 = vmatprep.subr.bf16.mxu0 0
        %1225 = vmatpush1.bf16.msra.mxu0 0
        %1226 = vmatprep.subr.bf16.mxu0 0
        %1227 = vmatpush1.bf16.msra.mxu0 0
        %1228 = vmatprep.subr.bf16.mxu0 0
        %1229 = vmatpush1.bf16.msra.mxu0 0
        %1230 = vmatprep.mubr.bf16.mxu0 0
        %1231 = vmatmul.mubr.bf16.gmra.mrb[0].mxu0 0
        %v1232 = vpop.f32.mrb[0].mxu0
        %v1233 = vadd.f32 0.0, %v1232
        %v1234 = vpop.f32.mrb[0].mxu0
        %v1235 = vadd.f32 0.0, %v1234
        %v1236 = vpop.f32.mrb[0].mxu0
        %v1237 = vadd.f32 0.0, %v1236
        %v1238 = vpop.f32.mrb[0].mxu0
        %v1239 = vadd.f32 0.0, %v1238
        %1240 = vmatprep.mubr.bf16.mxu0 0
        %1241 = vmatmul.mubr.bf16.gmra.mrb[0].mxu0 0
        %v1242 = vpop.f32.mrb[0].mxu0
        %v1243 = vadd.f32 0.0, %v1242
        %v1244 = vpop.f32.mrb[0].mxu0
        %v1245 = vadd.f32 0.0, %v1244
        %v1246 = vpop.f32.mrb[0].mxu0
        %v1247 = vadd.f32 0.0, %v1246
        %v1248 = vpop.f32.mrb[0].mxu0
        %v1249 = vadd.f32 0.0, %v1248
        %1250 = vmatprep.mubr.bf16.mxu0 0
        %1251 = vmatmul.mubr.bf16.gmra.mrb[0].mxu0 0
        %v1252 = vpop.f32.mrb[0].mxu0
        %v1253 = vadd.f32 0.0, %v1252
        %v1254 = vpop.f32.mrb[0].mxu0
        %v1255 = vadd.f32 0.0, %v1254
        %v1256 = vpop.f32.mrb[0].mxu0
        %v1257 = vadd.f32 0.0, %v1256
        %v1258 = vpop.f32.mrb[0].mxu0
        %v1259 = vadd.f32 0.0, %v1258
        %1260 = vmatprep.mubr.bf16.mxu0 0
        %1261 = vmatmul.mubr.bf16.gmra.mrb[0].mxu0 0
        %v1262 = vpop.f32.mrb[0].mxu0
        %v1263 = vadd.f32 0.0, %v1262
        %v1264 = vpop.f32.mrb[0].mxu0
        %v1265 = vadd.f32 0.0, %v1264
        %v1266 = vpop.f32.mrb[0].mxu0
        %v1267 = vadd.f32 0.0, %v1266
        %v1268 = vpop.f32.mrb[0].mxu0
        %v1269 = vadd.f32 0.0, %v1268
        %1270 = vmatprep.mubr.bf16.mxu0 0
        %1271 = vmatmul.mubr.bf16.gmra.mrb[0].mxu0 0
        %v1272 = vpop.f32.mrb[0].mxu0
        %v1273 = vadd.f32 0.0, %v1272
        %v1274 = vpop.f32.mrb[0].mxu0
        %v1275 = vadd.f32 0.0, %v1274
        %v1276 = vpop.f32.mrb[0].mxu0
        %v1277 = vadd.f32 0.0, %v1276
        %v1278 = vpop.f32.mrb[0].mxu0
        %v1279 = vadd.f32 0.0, %v1278
        %1280 = vmatprep.mubr.bf16.mxu0 0
        %1281 = vmatmul.mubr.bf16.gmra.mrb[0].mxu0 0
        %v1282 = vpop.f32.mrb[0].mxu0
        %v1283 = vadd.f32 0.0, %v1282
        %v1284 = vpop.f32.mrb[0].mxu0
        %v1285 = vadd.f32 0.0, %v1284
        %v1286 = vpop.f32.mrb[0].mxu0
        %v1287 = vadd.f32 0.0, %v1286
        %v1288 = vpop.f32.mrb[0].mxu0
        %v1289 = vadd.f32 0.0, %v1288
        %1290 = vmatprep.mubr.bf16.mxu0 0
        %1291 = vmatmul.mubr.bf16.gmra.mrb[0].mxu0 0
        %v1292 = vpop.f32.mrb[0].mxu0
        %v1293 = vadd.f32 0.0, %v1292
        %v1294 = vpop.f32.mrb[0].mxu0
        %v1295 = vadd.f32 0.0, %v1294
        %v1296 = vpop.f32.mrb[0].mxu0
        %v1297 = vadd.f32 0.0, %v1296
        %v1298 = vpop.f32.mrb[0].mxu0
        %v1299 = vadd.f32 0.0, %v1298
        %1300 = vmatprep.mubr.bf16.mxu0 0
        %1301 = vmatmul.mubr.bf16.gmra.mrb[0].mxu0 0
        %v1302 = vpop.f32.mrb[0].mxu0
        %v1303 = vadd.f32 0.0, %v1302
        %v1304 = vpop.f32.mrb[0].mxu0
        %v1305 = vadd.f32 0.0, %v1304
        %v1306 = vpop.f32.mrb[0].mxu0
        %v1307 = vadd.f32 0.0, %v1306
        %v1308 = vpop.f32.mrb[0].mxu0
        %v1309 = vadd.f32 0.0, %v1308
        %1310 = vdwg.mxu0
        %vm1311 = vcmask 523264
        %v1313 = vsel %vm1311, %v917, 0
        %v1316 = vsel %vm1311, %v918, 0
        %v1319 = vsel %vm1311, %v919, 0
        %v1322 = vsel %vm1311, %v920, 0
        %v1325 = vsel %vm1311, %v921, 0
        %v1328 = vsel %vm1311, %v922, 0
        %v1331 = vsel %vm1311, %v923, 0
        %v1334 = vsel %vm1311, %v924, 0
        %1336 = vmatprep.subr.bf16.mxu0 %v788
        %1337 = vmatpush1.bf16.msra.mxu0 %v787
        %1338 = vmatprep.subr.bf16.mxu0 %v792
        %1339 = vmatpush1.bf16.msra.mxu0 %v791
        %1340 = vmatprep.subr.bf16.mxu0 %v796
        %1341 = vmatpush1.bf16.msra.mxu0 %v795
        %1342 = vmatprep.subr.bf16.mxu0 %v800
        %1343 = vmatpush1.bf16.msra.mxu0 %v799
        %1344 = vmatprep.subr.bf16.mxu0 0
        %1345 = vmatpush1.bf16.msra.mxu0 0
        %1346 = vmatprep.subr.bf16.mxu0 0
        %1347 = vmatpush1.bf16.msra.mxu0 0
        %1348 = vmatprep.subr.bf16.mxu0 0
        %1349 = vmatpush1.bf16.msra.mxu0 0
        %1350 = vmatprep.subr.bf16.mxu0 0
        %1351 = vmatpush1.bf16.msra.mxu0 0
        %1352 = vmatprep.subr.bf16.mxu0 0
        %1353 = vmatpush1.bf16.msra.mxu0 0
        %1354 = vmatprep.subr.bf16.mxu0 0
        %1355 = vmatpush1.bf16.msra.mxu0 0
        %1356 = vmatprep.subr.bf16.mxu0 0
        %1357 = vmatpush1.bf16.msra.mxu0 0
        %1358 = vmatprep.subr.bf16.mxu0 0
        %1359 = vmatpush1.bf16.msra.mxu0 0
        %1360 = vmatprep.subr.bf16.mxu0 0
        %1361 = vmatpush1.bf16.msra.mxu0 0
        %1362 = vmatprep.subr.bf16.mxu0 0
        %1363 = vmatpush1.bf16.msra.mxu0 0
        %1364 = vmatprep.subr.bf16.mxu0 0
        %1365 = vmatpush1.bf16.msra.mxu0 0
        %1366 = vmatprep.subr.bf16.mxu0 0
        %1367 = vmatpush1.bf16.msra.mxu0 0
        %1368 = vmatprep.mubr.bf16.mxu0 0
        %1369 = vmatmul.mubr.bf16.gmra.mrb[0].mxu0 %v1313
        %v1370 = vpop.f32.mrb[0].mxu0
        %v1371 = vadd.f32 %v1120, %v1370
        %v1372 = vpop.f32.mrb[0].mxu0
        %v1373 = vadd.f32 %v1122, %v1372
        %v1374 = vpop.f32.mrb[0].mxu0
        %v1375 = vadd.f32 %v1124, %v1374
        %v1376 = vpop.f32.mrb[0].mxu0
        %v1377 = vadd.f32 %v1126, %v1376
        %1378 = vmatprep.mubr.bf16.mxu0 0
        %1379 = vmatmul.mubr.bf16.gmra.mrb[0].mxu0 %v1316
        %v1380 = vpop.f32.mrb[0].mxu0
        %v1381 = vadd.f32 %v1130, %v1380
        %v1382 = vpop.f32.mrb[0].mxu0
        %v1383 = vadd.f32 %v1132, %v1382
        %v1384 = vpop.f32.mrb[0].mxu0
        %v1385 = vadd.f32 %v1134, %v1384
        %v1386 = vpop.f32.mrb[0].mxu0
        %v1387 = vadd.f32 %v1136, %v1386
        %1388 = vmatprep.mubr.bf16.mxu0 0
        %1389 = vmatmul.mubr.bf16.gmra.mrb[0].mxu0 %v1319
        %v1390 = vpop.f32.mrb[0].mxu0
        %v1391 = vadd.f32 %v1140, %v1390
        %v1392 = vpop.f32.mrb[0].mxu0
        %v1393 = vadd.f32 %v1142, %v1392
        %v1394 = vpop.f32.mrb[0].mxu0
        %v1395 = vadd.f32 %v1144, %v1394
        %v1396 = vpop.f32.mrb[0].mxu0
        %v1397 = vadd.f32 %v1146, %v1396
        %1398 = vmatprep.mubr.bf16.mxu0 0
        %1399 = vmatmul.mubr.bf16.gmra.mrb[0].mxu0 %v1322
        %v1400 = vpop.f32.mrb[0].mxu0
        %v1401 = vadd.f32 %v1150, %v1400
        %v1402 = vpop.f32.mrb[0].mxu0
        %v1403 = vadd.f32 %v1152, %v1402
        %v1404 = vpop.f32.mrb[0].mxu0
        %v1405 = vadd.f32 %v1154, %v1404
        %v1406 = vpop.f32.mrb[0].mxu0
        %v1407 = vadd.f32 %v1156, %v1406
        %1408 = vmatprep.mubr.bf16.mxu0 0
        %1409 = vmatmul.mubr.bf16.gmra.mrb[0].mxu0 %v1325
        %v1410 = vpop.f32.mrb[0].mxu0
        %v1411 = vadd.f32 %v1160, %v1410
        %v1412 = vpop.f32.mrb[0].mxu0
        %v1413 = vadd.f32 %v1162, %v1412
        %v1414 = vpop.f32.mrb[0].mxu0
        %v1415 = vadd.f32 %v1164, %v1414
        %v1416 = vpop.f32.mrb[0].mxu0
        %v1417 = vadd.f32 %v1166, %v1416
        %1418 = vmatprep.mubr.bf16.mxu0 0
        %1419 = vmatmul.mubr.bf16.gmra.mrb[0].mxu0 %v1328
        %v1420 = vpop.f32.mrb[0].mxu0
        %v1421 = vadd.f32 %v1170, %v1420
        %v1422 = vpop.f32.mrb[0].mxu0
        %v1423 = vadd.f32 %v1172, %v1422
        %v1424 = vpop.f32.mrb[0].mxu0
        %v1425 = vadd.f32 %v1174, %v1424
        %v1426 = vpop.f32.mrb[0].mxu0
        %v1427 = vadd.f32 %v1176, %v1426
        %1428 = vmatprep.mubr.bf16.mxu0 0
        %1429 = vmatmul.mubr.bf16.gmra.mrb[0].mxu0 %v1331
        %v1430 = vpop.f32.mrb[0].mxu0
        %v1431 = vadd.f32 %v1180, %v1430
        %v1432 = vpop.f32.mrb[0].mxu0
        %v1433 = vadd.f32 %v1182, %v1432
        %v1434 = vpop.f32.mrb[0].mxu0
        %v1435 = vadd.f32 %v1184, %v1434
        %v1436 = vpop.f32.mrb[0].mxu0
        %v1437 = vadd.f32 %v1186, %v1436
        %1438 = vmatprep.mubr.bf16.mxu0 0
        %1439 = vmatmul.mubr.bf16.gmra.mrb[0].mxu0 %v1334
        %v1440 = vpop.f32.mrb[0].mxu0
        %v1441 = vadd.f32 %v1190, %v1440
        %v1442 = vpop.f32.mrb[0].mxu0
        %v1443 = vadd.f32 %v1192, %v1442
        %v1444 = vpop.f32.mrb[0].mxu0
        %v1445 = vadd.f32 %v1194, %v1444
        %v1446 = vpop.f32.mrb[0].mxu0
        %v1447 = vadd.f32 %v1196, %v1446
        %1448 = vdwg.mxu0
        %1449 = vmatprep.subr.bf16.mxu0 %v790
        %1450 = vmatpush1.bf16.msra.mxu0 %v789
        %1451 = vmatprep.subr.bf16.mxu0 %v794
        %1452 = vmatpush1.bf16.msra.mxu0 %v793
        %1453 = vmatprep.subr.bf16.mxu0 %v798
        %1454 = vmatpush1.bf16.msra.mxu0 %v797
        %1455 = vmatprep.subr.bf16.mxu0 %v802
        %1456 = vmatpush1.bf16.msra.mxu0 %v801
        %1457 = vmatprep.subr.bf16.mxu0 0
        %1458 = vmatpush1.bf16.msra.mxu0 0
        %1459 = vmatprep.subr.bf16.mxu0 0
        %1460 = vmatpush1.bf16.msra.mxu0 0
        %1461 = vmatprep.subr.bf16.mxu0 0
        %1462 = vmatpush1.bf16.msra.mxu0 0
        %1463 = vmatprep.subr.bf16.mxu0 0
        %1464 = vmatpush1.bf16.msra.mxu0 0
        %1465 = vmatprep.subr.bf16.mxu0 0
        %1466 = vmatpush1.bf16.msra.mxu0 0
        %1467 = vmatprep.subr.bf16.mxu0 0
        %1468 = vmatpush1.bf16.msra.mxu0 0
        %1469 = vmatprep.subr.bf16.mxu0 0
        %1470 = vmatpush1.bf16.msra.mxu0 0
        %1471 = vmatprep.subr.bf16.mxu0 0
        %1472 = vmatpush1.bf16.msra.mxu0 0
        %1473 = vmatprep.subr.bf16.mxu0 0
        %1474 = vmatpush1.bf16.msra.mxu0 0
        %1475 = vmatprep.subr.bf16.mxu0 0
        %1476 = vmatpush1.bf16.msra.mxu0 0
        %1477 = vmatprep.subr.bf16.mxu0 0
        %1478 = vmatpush1.bf16.msra.mxu0 0
        %1479 = vmatprep.subr.bf16.mxu0 0
        %1480 = vmatpush1.bf16.msra.mxu0 0
        %1481 = vmatprep.mubr.bf16.mxu0 0
        %1482 = vmatmul.mubr.bf16.gmra.mrb[0].mxu0 %v1313
        %v1483 = vpop.f32.mrb[0].mxu0
        %v1484 = vadd.f32 %v1233, %v1483
        %v1485 = vpop.f32.mrb[0].mxu0
        %v1486 = vadd.f32 %v1235, %v1485
        %v1487 = vpop.f32.mrb[0].mxu0
        %v1488 = vadd.f32 %v1237, %v1487
        %v1489 = vpop.f32.mrb[0].mxu0
        %v1490 = vadd.f32 %v1239, %v1489
        %1491 = vmatprep.mubr.bf16.mxu0 0
        %1492 = vmatmul.mubr.bf16.gmra.mrb[0].mxu0 %v1316
        %v1493 = vpop.f32.mrb[0].mxu0
        %v1494 = vadd.f32 %v1243, %v1493
        %v1495 = vpop.f32.mrb[0].mxu0
        %v1496 = vadd.f32 %v1245, %v1495
        %v1497 = vpop.f32.mrb[0].mxu0
        %v1498 = vadd.f32 %v1247, %v1497
        %v1499 = vpop.f32.mrb[0].mxu0
        %v1500 = vadd.f32 %v1249, %v1499
        %1501 = vmatprep.mubr.bf16.mxu0 0
        %1502 = vmatmul.mubr.bf16.gmra.mrb[0].mxu0 %v1319
        %v1503 = vpop.f32.mrb[0].mxu0
        %v1504 = vadd.f32 %v1253, %v1503
        %v1505 = vpop.f32.mrb[0].mxu0
        %v1506 = vadd.f32 %v1255, %v1505
        %v1507 = vpop.f32.mrb[0].mxu0
        %v1508 = vadd.f32 %v1257, %v1507
        %v1509 = vpop.f32.mrb[0].mxu0
        %v1510 = vadd.f32 %v1259, %v1509
        %1511 = vmatprep.mubr.bf16.mxu0 0
        %1512 = vmatmul.mubr.bf16.gmra.mrb[0].mxu0 %v1322
        %v1513 = vpop.f32.mrb[0].mxu0
        %v1514 = vadd.f32 %v1263, %v1513
        %v1515 = vpop.f32.mrb[0].mxu0
        %v1516 = vadd.f32 %v1265, %v1515
        %v1517 = vpop.f32.mrb[0].mxu0
        %v1518 = vadd.f32 %v1267, %v1517
        %v1519 = vpop.f32.mrb[0].mxu0
        %v1520 = vadd.f32 %v1269, %v1519
        %1521 = vmatprep.mubr.bf16.mxu0 0
        %1522 = vmatmul.mubr.bf16.gmra.mrb[0].mxu0 %v1325
        %v1523 = vpop.f32.mrb[0].mxu0
        %v1524 = vadd.f32 %v1273, %v1523
        %v1525 = vpop.f32.mrb[0].mxu0
        %v1526 = vadd.f32 %v1275, %v1525
        %v1527 = vpop.f32.mrb[0].mxu0
        %v1528 = vadd.f32 %v1277, %v1527
        %v1529 = vpop.f32.mrb[0].mxu0
        %v1530 = vadd.f32 %v1279, %v1529
        %1531 = vmatprep.mubr.bf16.mxu0 0
        %1532 = vmatmul.mubr.bf16.gmra.mrb[0].mxu0 %v1328
        %v1533 = vpop.f32.mrb[0].mxu0
        %v1534 = vadd.f32 %v1283, %v1533
        %v1535 = vpop.f32.mrb[0].mxu0
        %v1536 = vadd.f32 %v1285, %v1535
        %v1537 = vpop.f32.mrb[0].mxu0
        %v1538 = vadd.f32 %v1287, %v1537
        %v1539 = vpop.f32.mrb[0].mxu0
        %v1540 = vadd.f32 %v1289, %v1539
        %1541 = vmatprep.mubr.bf16.mxu0 0
        %1542 = vmatmul.mubr.bf16.gmra.mrb[0].mxu0 %v1331
        %v1543 = vpop.f32.mrb[0].mxu0
        %v1544 = vadd.f32 %v1293, %v1543
        %v1545 = vpop.f32.mrb[0].mxu0
        %v1546 = vadd.f32 %v1295, %v1545
        %v1547 = vpop.f32.mrb[0].mxu0
        %v1548 = vadd.f32 %v1297, %v1547
        %v1549 = vpop.f32.mrb[0].mxu0
        %v1550 = vadd.f32 %v1299, %v1549
        %1551 = vmatprep.mubr.bf16.mxu0 0
        %1552 = vmatmul.mubr.bf16.gmra.mrb[0].mxu0 %v1334
        %v1553 = vpop.f32.mrb[0].mxu0
        %v1554 = vadd.f32 %v1303, %v1553
        %v1555 = vpop.f32.mrb[0].mxu0
        %v1556 = vadd.f32 %v1305, %v1555
        %v1557 = vpop.f32.mrb[0].mxu0
        %v1558 = vadd.f32 %v1307, %v1557
        %v1559 = vpop.f32.mrb[0].mxu0
        %v1560 = vadd.f32 %v1309, %v1559
        %1561 = vdwg.mxu0
        %v1562 = vxor.u32 %v1371, 2147483648
        %v1563 = vxor.u32 %v1375, 2147483648
        %v1564 = vxor.u32 %v1381, 2147483648
        %v1565 = vxor.u32 %v1385, 2147483648
        %v1566 = vxor.u32 %v1391, 2147483648
        %v1567 = vxor.u32 %v1395, 2147483648
        %v1568 = vxor.u32 %v1401, 2147483648
        %v1569 = vxor.u32 %v1405, 2147483648
        %v1570 = vxor.u32 %v1411, 2147483648
        %v1571 = vxor.u32 %v1415, 2147483648
        %v1572 = vxor.u32 %v1421, 2147483648
        %v1573 = vxor.u32 %v1425, 2147483648
        %v1574 = vxor.u32 %v1431, 2147483648
        %v1575 = vxor.u32 %v1435, 2147483648
        %v1576 = vxor.u32 %v1441, 2147483648
        %v1577 = vxor.u32 %v1445, 2147483648
        %v1578 = vmul.f32 %v1562, 1.442695
        %v1579 = vpow.pop %v1578
        %v1580 = vmul.f32 %v1563, 1.442695
        %v1581 = vpow.pop %v1580
        %v1582 = vmul.f32 %v1564, 1.442695
        %v1583 = vpow.pop %v1582
        %v1584 = vmul.f32 %v1565, 1.442695
        %v1585 = vpow.pop %v1584
        %v1586 = vmul.f32 %v1566, 1.442695
        %v1587 = vpow.pop %v1586
        %v1588 = vmul.f32 %v1567, 1.442695
        %v1589 = vpow.pop %v1588
        %v1590 = vmul.f32 %v1568, 1.442695
        %v1591 = vpow.pop %v1590
        %v1592 = vmul.f32 %v1569, 1.442695
        %v1593 = vpow.pop %v1592
        %v1594 = vmul.f32 %v1570, 1.442695
        %v1595 = vpow.pop %v1594
        %v1596 = vmul.f32 %v1571, 1.442695
        %v1597 = vpow.pop %v1596
        %v1598 = vmul.f32 %v1572, 1.442695
        %v1599 = vpow.pop %v1598
        %v1600 = vmul.f32 %v1573, 1.442695
        %v1601 = vpow.pop %v1600
        %v1602 = vmul.f32 %v1574, 1.442695
        %v1603 = vpow.pop %v1602
        %v1604 = vmul.f32 %v1575, 1.442695
        %v1605 = vpow.pop %v1604
        %v1606 = vmul.f32 %v1576, 1.442695
        %v1607 = vpow.pop %v1606
        %v1608 = vmul.f32 %v1577, 1.442695
        %v1609 = vpow.pop %v1608
        %v1610 = vadd.f32 %v1579, 1.0
        %v1611 = vadd.f32 %v1581, 1.0
        %v1612 = vadd.f32 %v1583, 1.0
        %v1613 = vadd.f32 %v1585, 1.0
        %v1614 = vadd.f32 %v1587, 1.0
        %v1615 = vadd.f32 %v1589, 1.0
        %v1616 = vadd.f32 %v1591, 1.0
        %v1617 = vadd.f32 %v1593, 1.0
        %v1618 = vadd.f32 %v1595, 1.0
        %v1619 = vadd.f32 %v1597, 1.0
        %v1620 = vadd.f32 %v1599, 1.0
        %v1621 = vadd.f32 %v1601, 1.0
        %v1622 = vadd.f32 %v1603, 1.0
        %v1623 = vadd.f32 %v1605, 1.0
        %v1624 = vadd.f32 %v1607, 1.0
        %v1625 = vadd.f32 %v1609, 1.0
        %v1626 = vrcp.pop %v1610
        %v1627 = vmul.f32 1.0, %v1626
        %v1628 = vrcp.pop %v1611
        %v1629 = vmul.f32 1.0, %v1628
        %v1630 = vrcp.pop %v1612
        %v1631 = vmul.f32 1.0, %v1630
        %v1632 = vrcp.pop %v1613
        %v1633 = vmul.f32 1.0, %v1632
        %v1634 = vrcp.pop %v1614
        %v1635 = vmul.f32 1.0, %v1634
        %v1636 = vrcp.pop %v1615
        %v1637 = vmul.f32 1.0, %v1636
        %v1638 = vrcp.pop %v1616
        %v1639 = vmul.f32 1.0, %v1638
        %v1640 = vrcp.pop %v1617
        %v1641 = vmul.f32 1.0, %v1640
        %v1642 = vrcp.pop %v1618
        %v1643 = vmul.f32 1.0, %v1642
        %v1644 = vrcp.pop %v1619
        %v1645 = vmul.f32 1.0, %v1644
        %v1646 = vrcp.pop %v1620
        %v1647 = vmul.f32 1.0, %v1646
        %v1648 = vrcp.pop %v1621
        %v1649 = vmul.f32 1.0, %v1648
        %v1650 = vrcp.pop %v1622
        %v1651 = vmul.f32 1.0, %v1650
        %v1652 = vrcp.pop %v1623
        %v1653 = vmul.f32 1.0, %v1652
        %v1654 = vrcp.pop %v1624
        %v1655 = vmul.f32 1.0, %v1654
        %v1656 = vrcp.pop %v1625
        %v1657 = vmul.f32 1.0, %v1656
        %v1658 = vxor.u32 %v1373, 2147483648
        %v1659 = vxor.u32 %v1377, 2147483648
        %v1660 = vxor.u32 %v1383, 2147483648
        %v1661 = vxor.u32 %v1387, 2147483648
        %v1662 = vxor.u32 %v1393, 2147483648
        %v1663 = vxor.u32 %v1397, 2147483648
        %v1664 = vxor.u32 %v1403, 2147483648
        %v1665 = vxor.u32 %v1407, 2147483648
        %v1666 = vxor.u32 %v1413, 2147483648
        %v1667 = vxor.u32 %v1417, 2147483648
        %v1668 = vxor.u32 %v1423, 2147483648
        %v1669 = vxor.u32 %v1427, 2147483648
        %v1670 = vxor.u32 %v1433, 2147483648
        %v1671 = vxor.u32 %v1437, 2147483648
        %v1672 = vxor.u32 %v1443, 2147483648
        %v1673 = vxor.u32 %v1447, 2147483648
        %v1674 = vmul.f32 %v1658, 1.442695
        %v1675 = vpow.pop %v1674
        %v1676 = vmul.f32 %v1659, 1.442695
        %v1677 = vpow.pop %v1676
        %v1678 = vmul.f32 %v1660, 1.442695
        %v1679 = vpow.pop %v1678
        %v1680 = vmul.f32 %v1661, 1.442695
        %v1681 = vpow.pop %v1680
        %v1682 = vmul.f32 %v1662, 1.442695
        %v1683 = vpow.pop %v1682
        %v1684 = vmul.f32 %v1663, 1.442695
        %v1685 = vpow.pop %v1684
        %v1686 = vmul.f32 %v1664, 1.442695
        %v1687 = vpow.pop %v1686
        %v1688 = vmul.f32 %v1665, 1.442695
        %v1689 = vpow.pop %v1688
        %v1690 = vmul.f32 %v1666, 1.442695
        %v1691 = vpow.pop %v1690
        %v1692 = vmul.f32 %v1667, 1.442695
        %v1693 = vpow.pop %v1692
        %v1694 = vmul.f32 %v1668, 1.442695
        %v1695 = vpow.pop %v1694
        %v1696 = vmul.f32 %v1669, 1.442695
        %v1697 = vpow.pop %v1696
        %v1698 = vmul.f32 %v1670, 1.442695
        %v1699 = vpow.pop %v1698
        %v1700 = vmul.f32 %v1671, 1.442695
        %v1701 = vpow.pop %v1700
        %v1702 = vmul.f32 %v1672, 1.442695
        %v1703 = vpow.pop %v1702
        %v1704 = vmul.f32 %v1673, 1.442695
        %v1705 = vpow.pop %v1704
        %v1706 = vadd.f32 %v1675, 1.0
        %v1707 = vadd.f32 %v1677, 1.0
        %v1708 = vadd.f32 %v1679, 1.0
        %v1709 = vadd.f32 %v1681, 1.0
        %v1710 = vadd.f32 %v1683, 1.0
        %v1711 = vadd.f32 %v1685, 1.0
        %v1712 = vadd.f32 %v1687, 1.0
        %v1713 = vadd.f32 %v1689, 1.0
        %v1714 = vadd.f32 %v1691, 1.0
        %v1715 = vadd.f32 %v1693, 1.0
        %v1716 = vadd.f32 %v1695, 1.0
        %v1717 = vadd.f32 %v1697, 1.0
        %v1718 = vadd.f32 %v1699, 1.0
        %v1719 = vadd.f32 %v1701, 1.0
        %v1720 = vadd.f32 %v1703, 1.0
        %v1721 = vadd.f32 %v1705, 1.0
        %v1722 = vrcp.pop %v1706
        %v1723 = vmul.f32 1.0, %v1722
        %v1724 = vrcp.pop %v1707
        %v1725 = vmul.f32 1.0, %v1724
        %v1726 = vrcp.pop %v1708
        %v1727 = vmul.f32 1.0, %v1726
        %v1728 = vrcp.pop %v1709
        %v1729 = vmul.f32 1.0, %v1728
        %v1730 = vrcp.pop %v1710
        %v1731 = vmul.f32 1.0, %v1730
        %v1732 = vrcp.pop %v1711
        %v1733 = vmul.f32 1.0, %v1732
        %v1734 = vrcp.pop %v1712
        %v1735 = vmul.f32 1.0, %v1734
        %v1736 = vrcp.pop %v1713
        %v1737 = vmul.f32 1.0, %v1736
        %v1738 = vrcp.pop %v1714
        %v1739 = vmul.f32 1.0, %v1738
        %v1740 = vrcp.pop %v1715
        %v1741 = vmul.f32 1.0, %v1740
        %v1742 = vrcp.pop %v1716
        %v1743 = vmul.f32 1.0, %v1742
        %v1744 = vrcp.pop %v1717
        %v1745 = vmul.f32 1.0, %v1744
        %v1746 = vrcp.pop %v1718
        %v1747 = vmul.f32 1.0, %v1746
        %v1748 = vrcp.pop %v1719
        %v1749 = vmul.f32 1.0, %v1748
        %v1750 = vrcp.pop %v1720
        %v1751 = vmul.f32 1.0, %v1750
        %v1752 = vrcp.pop %v1721
        %v1753 = vmul.f32 1.0, %v1752
        %v1754 = vtanh.pop %v1484
        %v1755 = vtanh.pop %v1488
        %v1756 = vtanh.pop %v1494
        %v1757 = vtanh.pop %v1498
        %v1758 = vtanh.pop %v1504
        %v1759 = vtanh.pop %v1508
        %v1760 = vtanh.pop %v1514
        %v1761 = vtanh.pop %v1518
        %v1762 = vtanh.pop %v1524
        %v1763 = vtanh.pop %v1528
        %v1764 = vtanh.pop %v1534
        %v1765 = vtanh.pop %v1538
        %v1766 = vtanh.pop %v1544
        %v1767 = vtanh.pop %v1548
        %v1768 = vtanh.pop %v1554
        %v1769 = vtanh.pop %v1558
        %v1770 = vxor.u32 %v1486, 2147483648
        %v1771 = vxor.u32 %v1490, 2147483648
        %v1772 = vxor.u32 %v1496, 2147483648
        %v1773 = vxor.u32 %v1500, 2147483648
        %v1774 = vxor.u32 %v1506, 2147483648
        %v1775 = vxor.u32 %v1510, 2147483648
        %v1776 = vxor.u32 %v1516, 2147483648
        %v1777 = vxor.u32 %v1520, 2147483648
        %v1778 = vxor.u32 %v1526, 2147483648
        %v1779 = vxor.u32 %v1530, 2147483648
        %v1780 = vxor.u32 %v1536, 2147483648
        %v1781 = vxor.u32 %v1540, 2147483648
        %v1782 = vxor.u32 %v1546, 2147483648
        %v1783 = vxor.u32 %v1550, 2147483648
        %v1784 = vxor.u32 %v1556, 2147483648
        %v1785 = vxor.u32 %v1560, 2147483648
        %v1786 = vmul.f32 %v1770, 1.442695
        %v1787 = vpow.pop %v1786
        %v1788 = vmul.f32 %v1771, 1.442695
        %v1789 = vpow.pop %v1788
        %v1790 = vmul.f32 %v1772, 1.442695
        %v1791 = vpow.pop %v1790
        %v1792 = vmul.f32 %v1773, 1.442695
        %v1793 = vpow.pop %v1792
        %v1794 = vmul.f32 %v1774, 1.442695
        %v1795 = vpow.pop %v1794
        %v1796 = vmul.f32 %v1775, 1.442695
        %v1797 = vpow.pop %v1796
        %v1798 = vmul.f32 %v1776, 1.442695
        %v1799 = vpow.pop %v1798
        %v1800 = vmul.f32 %v1777, 1.442695
        %v1801 = vpow.pop %v1800
        %v1802 = vmul.f32 %v1778, 1.442695
        %v1803 = vpow.pop %v1802
        %v1804 = vmul.f32 %v1779, 1.442695
        %v1805 = vpow.pop %v1804
        %v1806 = vmul.f32 %v1780, 1.442695
        %v1807 = vpow.pop %v1806
        %v1808 = vmul.f32 %v1781, 1.442695
        %v1809 = vpow.pop %v1808
        %v1810 = vmul.f32 %v1782, 1.442695
        %v1811 = vpow.pop %v1810
        %v1812 = vmul.f32 %v1783, 1.442695
        %v1813 = vpow.pop %v1812
        %v1814 = vmul.f32 %v1784, 1.442695
        %v1815 = vpow.pop %v1814
        %v1816 = vmul.f32 %v1785, 1.442695
        %v1817 = vpow.pop %v1816
        %v1818 = vadd.f32 %v1787, 1.0
        %v1819 = vadd.f32 %v1789, 1.0
        %v1820 = vadd.f32 %v1791, 1.0
        %v1821 = vadd.f32 %v1793, 1.0
        %v1822 = vadd.f32 %v1795, 1.0
        %v1823 = vadd.f32 %v1797, 1.0
        %v1824 = vadd.f32 %v1799, 1.0
        %v1825 = vadd.f32 %v1801, 1.0
        %v1826 = vadd.f32 %v1803, 1.0
        %v1827 = vadd.f32 %v1805, 1.0
        %v1828 = vadd.f32 %v1807, 1.0
        %v1829 = vadd.f32 %v1809, 1.0
        %v1830 = vadd.f32 %v1811, 1.0
        %v1831 = vadd.f32 %v1813, 1.0
        %v1832 = vadd.f32 %v1815, 1.0
        %v1833 = vadd.f32 %v1817, 1.0
        %v1834 = vrcp.pop %v1818
        %v1835 = vmul.f32 1.0, %v1834
        %v1836 = vrcp.pop %v1819
        %v1837 = vmul.f32 1.0, %v1836
        %v1838 = vrcp.pop %v1820
        %v1839 = vmul.f32 1.0, %v1838
        %v1840 = vrcp.pop %v1821
        %v1841 = vmul.f32 1.0, %v1840
        %v1842 = vrcp.pop %v1822
        %v1843 = vmul.f32 1.0, %v1842
        %v1844 = vrcp.pop %v1823
        %v1845 = vmul.f32 1.0, %v1844
        %v1846 = vrcp.pop %v1824
        %v1847 = vmul.f32 1.0, %v1846
        %v1848 = vrcp.pop %v1825
        %v1849 = vmul.f32 1.0, %v1848
        %v1850 = vrcp.pop %v1826
        %v1851 = vmul.f32 1.0, %v1850
        %v1852 = vrcp.pop %v1827
        %v1853 = vmul.f32 1.0, %v1852
        %v1854 = vrcp.pop %v1828
        %v1855 = vmul.f32 1.0, %v1854
        %v1856 = vrcp.pop %v1829
        %v1857 = vmul.f32 1.0, %v1856
        %v1858 = vrcp.pop %v1830
        %v1859 = vmul.f32 1.0, %v1858
        %v1860 = vrcp.pop %v1831
        %v1861 = vmul.f32 1.0, %v1860
        %v1862 = vrcp.pop %v1832
        %v1863 = vmul.f32 1.0, %v1862
        %v1864 = vrcp.pop %v1833
        %v1865 = vmul.f32 1.0, %v1864
        %v1866 = vmul.f32 %v1723, 0.0
        %v1867 = vmul.f32 %v1725, 0.0
        %v1868 = vmul.f32 %v1727, 0.0
        %v1869 = vmul.f32 %v1729, 0.0
        %v1870 = vmul.f32 %v1731, 0.0
        %v1871 = vmul.f32 %v1733, 0.0
        %v1872 = vmul.f32 %v1735, 0.0
        %v1873 = vmul.f32 %v1737, 0.0
        %v1874 = vmul.f32 %v1739, 0.0
        %v1875 = vmul.f32 %v1741, 0.0
        %v1876 = vmul.f32 %v1743, 0.0
        %v1877 = vmul.f32 %v1745, 0.0
        %v1878 = vmul.f32 %v1747, 0.0
        %v1879 = vmul.f32 %v1749, 0.0
        %v1880 = vmul.f32 %v1751, 0.0
        %v1881 = vmul.f32 %v1753, 0.0
        %v1882 = vmul.f32 %v1627, %v1754
        %v1883 = vmul.f32 %v1629, %v1755
        %v1884 = vmul.f32 %v1631, %v1756
        %v1885 = vmul.f32 %v1633, %v1757
        %v1886 = vmul.f32 %v1635, %v1758
        %v1887 = vmul.f32 %v1637, %v1759
        %v1888 = vmul.f32 %v1639, %v1760
        %v1889 = vmul.f32 %v1641, %v1761
        %v1890 = vmul.f32 %v1643, %v1762
        %v1891 = vmul.f32 %v1645, %v1763
        %v1892 = vmul.f32 %v1647, %v1764
        %v1893 = vmul.f32 %v1649, %v1765
        %v1894 = vmul.f32 %v1651, %v1766
        %v1895 = vmul.f32 %v1653, %v1767
        %v1896 = vmul.f32 %v1655, %v1768
        %v1897 = vmul.f32 %v1657, %v1769
        %v1898 = vadd.f32 %v1866, %v1882
        %v1899 = vadd.f32 %v1867, %v1883
        %v1900 = vadd.f32 %v1868, %v1884
        %v1901 = vadd.f32 %v1869, %v1885
        %v1902 = vadd.f32 %v1870, %v1886
        %v1903 = vadd.f32 %v1871, %v1887
        %v1904 = vadd.f32 %v1872, %v1888
        %v1905 = vadd.f32 %v1873, %v1889
        %v1906 = vadd.f32 %v1874, %v1890
        %v1907 = vadd.f32 %v1875, %v1891
        %v1908 = vadd.f32 %v1876, %v1892
        %v1909 = vadd.f32 %v1877, %v1893
        %v1910 = vadd.f32 %v1878, %v1894
        %v1911 = vadd.f32 %v1879, %v1895
        %v1912 = vadd.f32 %v1880, %v1896
        %v1913 = vadd.f32 %v1881, %v1897
        %v1914 = vtanh.pop %v1898
        %v1915 = vtanh.pop %v1899
        %v1916 = vtanh.pop %v1900
        %v1917 = vtanh.pop %v1901
        %v1918 = vtanh.pop %v1902
        %v1919 = vtanh.pop %v1903
        %v1920 = vtanh.pop %v1904
        %v1921 = vtanh.pop %v1905
        %v1922 = vtanh.pop %v1906
        %v1923 = vtanh.pop %v1907
        %v1924 = vtanh.pop %v1908
        %v1925 = vtanh.pop %v1909
        %v1926 = vtanh.pop %v1910
        %v1927 = vtanh.pop %v1911
        %v1928 = vtanh.pop %v1912
        %v1929 = vtanh.pop %v1913
        %v1930 = vmul.f32 %v1835, %v1914
        %v1931 = vmul.f32 %v1837, %v1915
        %v1932 = vmul.f32 %v1839, %v1916
        %v1933 = vmul.f32 %v1841, %v1917
        %v1934 = vmul.f32 %v1843, %v1918
        %v1935 = vmul.f32 %v1845, %v1919
        %v1936 = vmul.f32 %v1847, %v1920
        %v1937 = vmul.f32 %v1849, %v1921
        %v1938 = vmul.f32 %v1851, %v1922
        %v1939 = vmul.f32 %v1853, %v1923
        %v1940 = vmul.f32 %v1855, %v1924
        %v1941 = vmul.f32 %v1857, %v1925
        %v1942 = vmul.f32 %v1859, %v1926
        %v1943 = vmul.f32 %v1861, %v1927
        %v1944 = vmul.f32 %v1863, %v1928
        %v1945 = vmul.f32 %v1865, %v1929
        %1946 = vset.pattern.permute.xlu0 1
        %1947 = vperm.xlu0 %1946, %v805
        %v1948 = vpop.permute.xlu0 %1947
        %1949 = vset.pattern.permute.xlu0 1
        %1950 = vperm.xlu0 %1949, %v806
        %v1951 = vpop.permute.xlu0 %1950
        %1952 = vset.pattern.permute.xlu0 1
        %1953 = vperm.xlu0 %1952, %v807
        %v1954 = vpop.permute.xlu0 %1953
        %1955 = vset.pattern.permute.xlu0 1
        %1956 = vperm.xlu0 %1955, %v808
        %v1957 = vpop.permute.xlu0 %1956
        %1958 = vset.pattern.permute.xlu0 1
        %1959 = vperm.xlu0 %1958, %v809
        %v1960 = vpop.permute.xlu0 %1959
        %1961 = vset.pattern.permute.xlu0 1
        %1962 = vperm.xlu0 %1961, %v810
        %v1963 = vpop.permute.xlu0 %1962
        %1964 = vset.pattern.permute.xlu0 1
        %1965 = vperm.xlu0 %1964, %v811
        %v1966 = vpop.permute.xlu0 %1965
        %1967 = vset.pattern.permute.xlu0 1
        %1968 = vperm.xlu0 %1967, %v812
        %v1969 = vpop.permute.xlu0 %1968
        %1970 = vset.pattern.permute.xlu0 1
        %1971 = vperm.xlu0 %1970, %v813
        %v1972 = vpop.permute.xlu0 %1971
        %1973 = vset.pattern.permute.xlu0 1
        %1974 = vperm.xlu0 %1973, %v814
        %v1975 = vpop.permute.xlu0 %1974
        %1976 = vset.pattern.permute.xlu0 1
        %1977 = vperm.xlu0 %1976, %v815
        %v1978 = vpop.permute.xlu0 %1977
        %1979 = vset.pattern.permute.xlu0 1
        %1980 = vperm.xlu0 %1979, %v816
        %v1981 = vpop.permute.xlu0 %1980
        %1982 = vset.pattern.permute.xlu0 1
        %1983 = vperm.xlu0 %1982, %v817
        %v1984 = vpop.permute.xlu0 %1983
        %1985 = vset.pattern.permute.xlu0 1
        %1986 = vperm.xlu0 %1985, %v818
        %v1987 = vpop.permute.xlu0 %1986
        %1988 = vset.pattern.permute.xlu0 1
        %1989 = vperm.xlu0 %1988, %v819
        %v1990 = vpop.permute.xlu0 %1989
        %1991 = vset.pattern.permute.xlu0 1
        %1992 = vperm.xlu0 %1991, %v820
        %v1993 = vpop.permute.xlu0 %1992
        %vm1994 = vcmp.eq.s32.totalorder %v804, %v1948
        %vm1995 = vcmp.eq.s32.totalorder %v804, %v1951
        %vm1996 = vcmp.eq.s32.totalorder %v804, %v1954
        %vm1997 = vcmp.eq.s32.totalorder %v804, %v1957
        %vm1998 = vcmp.eq.s32.totalorder %v804, %v1960
        %vm1999 = vcmp.eq.s32.totalorder %v804, %v1963
        %vm2000 = vcmp.eq.s32.totalorder %v804, %v1966
        %vm2001 = vcmp.eq.s32.totalorder %v804, %v1969
        %vm2002 = vcmp.eq.s32.totalorder %v804, %v1972
        %vm2003 = vcmp.eq.s32.totalorder %v804, %v1975
        %vm2004 = vcmp.eq.s32.totalorder %v804, %v1978
        %vm2005 = vcmp.eq.s32.totalorder %v804, %v1981
        %vm2006 = vcmp.eq.s32.totalorder %v804, %v1984
        %vm2007 = vcmp.eq.s32.totalorder %v804, %v1987
        %vm2008 = vcmp.eq.s32.totalorder %v804, %v1990
        %vm2009 = vcmp.eq.s32.totalorder %v804, %v1993
        %v2010 = vsel %vm1994, 1, 0
        %v2011 = vsel %vm1995, 1, 0
        %v2012 = vsel %vm1996, 1, 0
        %v2013 = vsel %vm1997, 1, 0
        %v2014 = vsel %vm1998, 1, 0
        %v2015 = vsel %vm1999, 1, 0
        %v2016 = vsel %vm2000, 1, 0
        %v2017 = vsel %vm2001, 1, 0
        %v2018 = vsel %vm2002, 1, 0
        %v2019 = vsel %vm2003, 1, 0
        %v2020 = vsel %vm2004, 1, 0
        %v2021 = vsel %vm2005, 1, 0
        %v2022 = vsel %vm2006, 1, 0
        %v2023 = vsel %vm2007, 1, 0
        %v2024 = vsel %vm2008, 1, 0
        %v2025 = vsel %vm2009, 1, 0
        %v2026 = vcvt.s32.f32 %v2010
        %v2027 = vcvt.s32.f32 %v2011
        %v2028 = vcvt.s32.f32 %v2012
        %v2029 = vcvt.s32.f32 %v2013
        %v2030 = vcvt.s32.f32 %v2014
        %v2031 = vcvt.s32.f32 %v2015
        %v2032 = vcvt.s32.f32 %v2016
        %v2033 = vcvt.s32.f32 %v2017
        %v2034 = vcvt.s32.f32 %v2018
        %v2035 = vcvt.s32.f32 %v2019
        %v2036 = vcvt.s32.f32 %v2020
        %v2037 = vcvt.s32.f32 %v2021
        %v2038 = vcvt.s32.f32 %v2022
        %v2039 = vcvt.s32.f32 %v2023
        %v2040 = vcvt.s32.f32 %v2024
        %v2041 = vcvt.s32.f32 %v2025
        %v2042 = vpack.c.bf16 %v2027, %v2026
        %v2043 = vpack.c.bf16 %v2029, %v2028
        %v2044 = vpack.c.bf16 %v2031, %v2030
        %v2045 = vpack.c.bf16 %v2033, %v2032
        %v2046 = vpack.c.bf16 %v2035, %v2034
        %v2047 = vpack.c.bf16 %v2037, %v2036
        %v2048 = vpack.c.bf16 %v2039, %v2038
        %v2049 = vpack.c.bf16 %v2041, %v2040
        %v2050 = vpack.c.bf16 %v1931, %v1930
        %v2051 = vpack.c.bf16 %v1933, %v1932
        %v2052 = vpack.c.bf16 %v1935, %v1934
        %v2053 = vpack.c.bf16 %v1937, %v1936
        %v2054 = vpack.c.bf16 %v1939, %v1938
        %v2055 = vpack.c.bf16 %v1941, %v1940
        %v2056 = vpack.c.bf16 %v1943, %v1942
        %v2057 = vpack.c.bf16 %v1945, %v1944
        %2058 = vmatprep.subr.bf16.mxu0 %v1022
        %2059 = vmatpush1.bf16.msra.mxu0 %v1021
        %2060 = vmatprep.subr.bf16.mxu0 %v1026
        %2061 = vmatpush1.bf16.msra.mxu0 %v1025
        %2062 = vmatprep.subr.bf16.mxu0 %v1030
        %2063 = vmatpush1.bf16.msra.mxu0 %v1029
        %2064 = vmatprep.subr.bf16.mxu0 %v1034
        %2065 = vmatpush1.bf16.msra.mxu0 %v1033
        %2066 = vmatprep.subr.bf16.mxu0 %v1038
        %2067 = vmatpush1.bf16.msra.mxu0 %v1037
        %2068 = vmatprep.subr.bf16.mxu0 %v1042
        %2069 = vmatpush1.bf16.msra.mxu0 %v1041
        %2070 = vmatprep.subr.bf16.mxu0 %v1046
        %2071 = vmatpush1.bf16.msra.mxu0 %v1045
        %2072 = vmatprep.subr.bf16.mxu0 %v1050
        %2073 = vmatpush1.bf16.msra.mxu0 %v1049
        %2074 = vmatprep.subr.bf16.mxu0 0
        %2075 = vmatpush1.bf16.msra.mxu0 0
        %2076 = vmatprep.subr.bf16.mxu0 0
        %2077 = vmatpush1.bf16.msra.mxu0 0
        %2078 = vmatprep.subr.bf16.mxu0 0
        %2079 = vmatpush1.bf16.msra.mxu0 0
        %2080 = vmatprep.subr.bf16.mxu0 0
        %2081 = vmatpush1.bf16.msra.mxu0 0
        %2082 = vmatprep.subr.bf16.mxu0 0
        %2083 = vmatpush1.bf16.msra.mxu0 0
        %2084 = vmatprep.subr.bf16.mxu0 0
        %2085 = vmatpush1.bf16.msra.mxu0 0
        %2086 = vmatprep.subr.bf16.mxu0 0
        %2087 = vmatpush1.bf16.msra.mxu0 0
        %2088 = vmatprep.subr.bf16.mxu0 0
        %2089 = vmatpush1.bf16.msra.mxu0 0
        %2090 = vmatprep.mubr.bf16.mxu0 0
        %2091 = vmatmul.mubr.bf16.gmra.mrb[0].mxu0 %v2050
        %v2092 = vpop.f32.mrb[0].mxu0
        %v2093 = vadd.f32 0.0, %v2092
        %v2094 = vpop.f32.mrb[0].mxu0
        %v2095 = vadd.f32 0.0, %v2094
        %v2096 = vpop.f32.mrb[0].mxu0
        %v2097 = vadd.f32 0.0, %v2096
        %v2098 = vpop.f32.mrb[0].mxu0
        %v2099 = vadd.f32 0.0, %v2098
        %2100 = vmatprep.mubr.bf16.mxu0 0
        %2101 = vmatmul.mubr.bf16.gmra.mrb[0].mxu0 %v2051
        %v2102 = vpop.f32.mrb[0].mxu0
        %v2103 = vadd.f32 0.0, %v2102
        %v2104 = vpop.f32.mrb[0].mxu0
        %v2105 = vadd.f32 0.0, %v2104
        %v2106 = vpop.f32.mrb[0].mxu0
        %v2107 = vadd.f32 0.0, %v2106
        %v2108 = vpop.f32.mrb[0].mxu0
        %v2109 = vadd.f32 0.0, %v2108
        %2110 = vmatprep.mubr.bf16.mxu0 0
        %2111 = vmatmul.mubr.bf16.gmra.mrb[0].mxu0 %v2052
        %v2112 = vpop.f32.mrb[0].mxu0
        %v2113 = vadd.f32 0.0, %v2112
        %v2114 = vpop.f32.mrb[0].mxu0
        %v2115 = vadd.f32 0.0, %v2114
        %v2116 = vpop.f32.mrb[0].mxu0
        %v2117 = vadd.f32 0.0, %v2116
        %v2118 = vpop.f32.mrb[0].mxu0
        %v2119 = vadd.f32 0.0, %v2118
        %2120 = vmatprep.mubr.bf16.mxu0 0
        %2121 = vmatmul.mubr.bf16.gmra.mrb[0].mxu0 %v2053
        %v2122 = vpop.f32.mrb[0].mxu0
        %v2123 = vadd.f32 0.0, %v2122
        %v2124 = vpop.f32.mrb[0].mxu0
        %v2125 = vadd.f32 0.0, %v2124
        %v2126 = vpop.f32.mrb[0].mxu0
        %v2127 = vadd.f32 0.0, %v2126
        %v2128 = vpop.f32.mrb[0].mxu0
        %v2129 = vadd.f32 0.0, %v2128
        %2130 = vmatprep.mubr.bf16.mxu0 0
        %2131 = vmatmul.mubr.bf16.gmra.mrb[0].mxu0 %v2054
        %v2132 = vpop.f32.mrb[0].mxu0
        %v2133 = vadd.f32 0.0, %v2132
        %v2134 = vpop.f32.mrb[0].mxu0
        %v2135 = vadd.f32 0.0, %v2134
        %v2136 = vpop.f32.mrb[0].mxu0
        %v2137 = vadd.f32 0.0, %v2136
        %v2138 = vpop.f32.mrb[0].mxu0
        %v2139 = vadd.f32 0.0, %v2138
        %2140 = vmatprep.mubr.bf16.mxu0 0
        %2141 = vmatmul.mubr.bf16.gmra.mrb[0].mxu0 %v2055
        %v2142 = vpop.f32.mrb[0].mxu0
        %v2143 = vadd.f32 0.0, %v2142
        %v2144 = vpop.f32.mrb[0].mxu0
        %v2145 = vadd.f32 0.0, %v2144
        %v2146 = vpop.f32.mrb[0].mxu0
        %v2147 = vadd.f32 0.0, %v2146
        %v2148 = vpop.f32.mrb[0].mxu0
        %v2149 = vadd.f32 0.0, %v2148
        %2150 = vmatprep.mubr.bf16.mxu0 0
        %2151 = vmatmul.mubr.bf16.gmra.mrb[0].mxu0 %v2056
        %v2152 = vpop.f32.mrb[0].mxu0
        %v2153 = vadd.f32 0.0, %v2152
        %v2154 = vpop.f32.mrb[0].mxu0
        %v2155 = vadd.f32 0.0, %v2154
        %v2156 = vpop.f32.mrb[0].mxu0
        %v2157 = vadd.f32 0.0, %v2156
        %v2158 = vpop.f32.mrb[0].mxu0
        %v2159 = vadd.f32 0.0, %v2158
        %2160 = vmatprep.mubr.bf16.mxu0 0
        %2161 = vmatmul.mubr.bf16.gmra.mrb[0].mxu0 %v2057
        %v2162 = vpop.f32.mrb[0].mxu0
        %v2163 = vadd.f32 0.0, %v2162
        %v2164 = vpop.f32.mrb[0].mxu0
        %v2165 = vadd.f32 0.0, %v2164
        %v2166 = vpop.f32.mrb[0].mxu0
        %v2167 = vadd.f32 0.0, %v2166
        %v2168 = vpop.f32.mrb[0].mxu0
        %v2169 = vadd.f32 0.0, %v2168
        %2170 = vdwg.mxu0
        %2171 = vmatprep.subr.bf16.mxu0 %v1024
        %2172 = vmatpush1.bf16.msra.mxu0 %v1023
        %2173 = vmatprep.subr.bf16.mxu0 %v1028
        %2174 = vmatpush1.bf16.msra.mxu0 %v1027
        %2175 = vmatprep.subr.bf16.mxu0 %v1032
        %2176 = vmatpush1.bf16.msra.mxu0 %v1031
        %2177 = vmatprep.subr.bf16.mxu0 %v1036
        %2178 = vmatpush1.bf16.msra.mxu0 %v1035
        %2179 = vmatprep.subr.bf16.mxu0 %v1040
        %2180 = vmatpush1.bf16.msra.mxu0 %v1039
        %2181 = vmatprep.subr.bf16.mxu0 %v1044
        %2182 = vmatpush1.bf16.msra.mxu0 %v1043
        %2183 = vmatprep.subr.bf16.mxu0 %v1048
        %2184 = vmatpush1.bf16.msra.mxu0 %v1047
        %2185 = vmatprep.subr.bf16.mxu0 %v1052
        %2186 = vmatpush1.bf16.msra.mxu0 %v1051
        %2187 = vmatprep.subr.bf16.mxu0 0
        %2188 = vmatpush1.bf16.msra.mxu0 0
        %2189 = vmatprep.subr.bf16.mxu0 0
        %2190 = vmatpush1.bf16.msra.mxu0 0
        %2191 = vmatprep.subr.bf16.mxu0 0
        %2192 = vmatpush1.bf16.msra.mxu0 0
        %2193 = vmatprep.subr.bf16.mxu0 0
        %2194 = vmatpush1.bf16.msra.mxu0 0
        %2195 = vmatprep.subr.bf16.mxu0 0
        %2196 = vmatpush1.bf16.msra.mxu0 0
        %2197 = vmatprep.subr.bf16.mxu0 0
        %2198 = vmatpush1.bf16.msra.mxu0 0
        %2199 = vmatprep.subr.bf16.mxu0 0
        %2200 = vmatpush1.bf16.msra.mxu0 0
        %2201 = vmatprep.subr.bf16.mxu0 0
        %2202 = vmatpush1.bf16.msra.mxu0 0
        %2203 = vmatprep.mubr.bf16.mxu0 0
        %2204 = vmatmul.mubr.bf16.gmra.mrb[0].mxu0 %v2050
        %v2205 = vpop.f32.mrb[0].mxu0
        %v2206 = vadd.f32 0.0, %v2205
        %v2207 = vpop.f32.mrb[0].mxu0
        %v2208 = vadd.f32 0.0, %v2207
        %v2209 = vpop.f32.mrb[0].mxu0
        %v2210 = vadd.f32 0.0, %v2209
        %v2211 = vpop.f32.mrb[0].mxu0
        %v2212 = vadd.f32 0.0, %v2211
        %2213 = vmatprep.mubr.bf16.mxu0 0
        %2214 = vmatmul.mubr.bf16.gmra.mrb[0].mxu0 %v2051
        %v2215 = vpop.f32.mrb[0].mxu0
        %v2216 = vadd.f32 0.0, %v2215
        %v2217 = vpop.f32.mrb[0].mxu0
        %v2218 = vadd.f32 0.0, %v2217
        %v2219 = vpop.f32.mrb[0].mxu0
        %v2220 = vadd.f32 0.0, %v2219
        %v2221 = vpop.f32.mrb[0].mxu0
        %v2222 = vadd.f32 0.0, %v2221
        %2223 = vmatprep.mubr.bf16.mxu0 0
        %2224 = vmatmul.mubr.bf16.gmra.mrb[0].mxu0 %v2052
        %v2225 = vpop.f32.mrb[0].mxu0
        %v2226 = vadd.f32 0.0, %v2225
        %v2227 = vpop.f32.mrb[0].mxu0
        %v2228 = vadd.f32 0.0, %v2227
        %v2229 = vpop.f32.mrb[0].mxu0
        %v2230 = vadd.f32 0.0, %v2229
        %v2231 = vpop.f32.mrb[0].mxu0
        %v2232 = vadd.f32 0.0, %v2231
        %2233 = vmatprep.mubr.bf16.mxu0 0
        %2234 = vmatmul.mubr.bf16.gmra.mrb[0].mxu0 %v2053
        %v2235 = vpop.f32.mrb[0].mxu0
        %v2236 = vadd.f32 0.0, %v2235
        %v2237 = vpop.f32.mrb[0].mxu0
        %v2238 = vadd.f32 0.0, %v2237
        %v2239 = vpop.f32.mrb[0].mxu0
        %v2240 = vadd.f32 0.0, %v2239
        %v2241 = vpop.f32.mrb[0].mxu0
        %v2242 = vadd.f32 0.0, %v2241
        %2243 = vmatprep.mubr.bf16.mxu0 0
        %2244 = vmatmul.mubr.bf16.gmra.mrb[0].mxu0 %v2054
        %v2245 = vpop.f32.mrb[0].mxu0
        %v2246 = vadd.f32 0.0, %v2245
        %v2247 = vpop.f32.mrb[0].mxu0
        %v2248 = vadd.f32 0.0, %v2247
        %v2249 = vpop.f32.mrb[0].mxu0
        %v2250 = vadd.f32 0.0, %v2249
        %v2251 = vpop.f32.mrb[0].mxu0
        %v2252 = vadd.f32 0.0, %v2251
        %2253 = vmatprep.mubr.bf16.mxu0 0
        %2254 = vmatmul.mubr.bf16.gmra.mrb[0].mxu0 %v2055
        %v2255 = vpop.f32.mrb[0].mxu0
        %v2256 = vadd.f32 0.0, %v2255
        %v2257 = vpop.f32.mrb[0].mxu0
        %v2258 = vadd.f32 0.0, %v2257
        %v2259 = vpop.f32.mrb[0].mxu0
        %v2260 = vadd.f32 0.0, %v2259
        %v2261 = vpop.f32.mrb[0].mxu0
        %v2262 = vadd.f32 0.0, %v2261
        %2263 = vmatprep.mubr.bf16.mxu0 0
        %2264 = vmatmul.mubr.bf16.gmra.mrb[0].mxu0 %v2056
        %v2265 = vpop.f32.mrb[0].mxu0
        %v2266 = vadd.f32 0.0, %v2265
        %v2267 = vpop.f32.mrb[0].mxu0
        %v2268 = vadd.f32 0.0, %v2267
        %v2269 = vpop.f32.mrb[0].mxu0
        %v2270 = vadd.f32 0.0, %v2269
        %v2271 = vpop.f32.mrb[0].mxu0
        %v2272 = vadd.f32 0.0, %v2271
        %2273 = vmatprep.mubr.bf16.mxu0 0
        %2274 = vmatmul.mubr.bf16.gmra.mrb[0].mxu0 %v2057
        %v2275 = vpop.f32.mrb[0].mxu0
        %v2276 = vadd.f32 0.0, %v2275
        %v2277 = vpop.f32.mrb[0].mxu0
        %v2278 = vadd.f32 0.0, %v2277
        %v2279 = vpop.f32.mrb[0].mxu0
        %v2280 = vadd.f32 0.0, %v2279
        %v2281 = vpop.f32.mrb[0].mxu0
        %v2282 = vadd.f32 0.0, %v2281
        %2283 = vdwg.mxu0
        %v2285 = vsel %vm1311, %v2042, 0
        %v2288 = vsel %vm1311, %v2043, 0
        %v2291 = vsel %vm1311, %v2044, 0
        %v2294 = vsel %vm1311, %v2045, 0
        %v2297 = vsel %vm1311, %v2046, 0
        %v2300 = vsel %vm1311, %v2047, 0
        %v2303 = vsel %vm1311, %v2048, 0
        %v2306 = vsel %vm1311, %v2049, 0
        %2308 = vmatprep.subr.bf16.mxu0 %v788
        %2309 = vmatpush1.bf16.msra.mxu0 %v787
        %2310 = vmatprep.subr.bf16.mxu0 %v792
        %2311 = vmatpush1.bf16.msra.mxu0 %v791
        %2312 = vmatprep.subr.bf16.mxu0 %v796
        %2313 = vmatpush1.bf16.msra.mxu0 %v795
        %2314 = vmatprep.subr.bf16.mxu0 %v800
        %2315 = vmatpush1.bf16.msra.mxu0 %v799
        %2316 = vmatprep.subr.bf16.mxu0 0
        %2317 = vmatpush1.bf16.msra.mxu0 0
        %2318 = vmatprep.subr.bf16.mxu0 0
        %2319 = vmatpush1.bf16.msra.mxu0 0
        %2320 = vmatprep.subr.bf16.mxu0 0
        %2321 = vmatpush1.bf16.msra.mxu0 0
        %2322 = vmatprep.subr.bf16.mxu0 0
        %2323 = vmatpush1.bf16.msra.mxu0 0
        %2324 = vmatprep.subr.bf16.mxu0 0
        %2325 = vmatpush1.bf16.msra.mxu0 0
        %2326 = vmatprep.subr.bf16.mxu0 0
        %2327 = vmatpush1.bf16.msra.mxu0 0
        %2328 = vmatprep.subr.bf16.mxu0 0
        %2329 = vmatpush1.bf16.msra.mxu0 0
        %2330 = vmatprep.subr.bf16.mxu0 0
        %2331 = vmatpush1.bf16.msra.mxu0 0
        %2332 = vmatprep.subr.bf16.mxu0 0
        %2333 = vmatpush1.bf16.msra.mxu0 0
        %2334 = vmatprep.subr.bf16.mxu0 0
        %2335 = vmatpush1.bf16.msra.mxu0 0
        %2336 = vmatprep.subr.bf16.mxu0 0
        %2337 = vmatpush1.bf16.msra.mxu0 0
        %2338 = vmatprep.subr.bf16.mxu0 0
        %2339 = vmatpush1.bf16.msra.mxu0 0
        %2340 = vmatprep.mubr.bf16.mxu0 0
        %2341 = vmatmul.mubr.bf16.gmra.mrb[0].mxu0 %v2285
        %v2342 = vpop.f32.mrb[0].mxu0
        %v2343 = vadd.f32 %v2093, %v2342
        %v2344 = vpop.f32.mrb[0].mxu0
        %v2345 = vadd.f32 %v2095, %v2344
        %v2346 = vpop.f32.mrb[0].mxu0
        %v2347 = vadd.f32 %v2097, %v2346
        %v2348 = vpop.f32.mrb[0].mxu0
        %v2349 = vadd.f32 %v2099, %v2348
        %2350 = vmatprep.mubr.bf16.mxu0 0
        %2351 = vmatmul.mubr.bf16.gmra.mrb[0].mxu0 %v2288
        %v2352 = vpop.f32.mrb[0].mxu0
        %v2353 = vadd.f32 %v2103, %v2352
        %v2354 = vpop.f32.mrb[0].mxu0
        %v2355 = vadd.f32 %v2105, %v2354
        %v2356 = vpop.f32.mrb[0].mxu0
        %v2357 = vadd.f32 %v2107, %v2356
        %v2358 = vpop.f32.mrb[0].mxu0
        %v2359 = vadd.f32 %v2109, %v2358
        %2360 = vmatprep.mubr.bf16.mxu0 0
        %2361 = vmatmul.mubr.bf16.gmra.mrb[0].mxu0 %v2291
        %v2362 = vpop.f32.mrb[0].mxu0
        %v2363 = vadd.f32 %v2113, %v2362
        %v2364 = vpop.f32.mrb[0].mxu0
        %v2365 = vadd.f32 %v2115, %v2364
        %v2366 = vpop.f32.mrb[0].mxu0
        %v2367 = vadd.f32 %v2117, %v2366
        %v2368 = vpop.f32.mrb[0].mxu0
        %v2369 = vadd.f32 %v2119, %v2368
        %2370 = vmatprep.mubr.bf16.mxu0 0
        %2371 = vmatmul.mubr.bf16.gmra.mrb[0].mxu0 %v2294
        %v2372 = vpop.f32.mrb[0].mxu0
        %v2373 = vadd.f32 %v2123, %v2372
        %v2374 = vpop.f32.mrb[0].mxu0
        %v2375 = vadd.f32 %v2125, %v2374
        %v2376 = vpop.f32.mrb[0].mxu0
        %v2377 = vadd.f32 %v2127, %v2376
        %v2378 = vpop.f32.mrb[0].mxu0
        %v2379 = vadd.f32 %v2129, %v2378
        %2380 = vmatprep.mubr.bf16.mxu0 0
        %2381 = vmatmul.mubr.bf16.gmra.mrb[0].mxu0 %v2297
        %v2382 = vpop.f32.mrb[0].mxu0
        %v2383 = vadd.f32 %v2133, %v2382
        %v2384 = vpop.f32.mrb[0].mxu0
        %v2385 = vadd.f32 %v2135, %v2384
        %v2386 = vpop.f32.mrb[0].mxu0
        %v2387 = vadd.f32 %v2137, %v2386
        %v2388 = vpop.f32.mrb[0].mxu0
        %v2389 = vadd.f32 %v2139, %v2388
        %2390 = vmatprep.mubr.bf16.mxu0 0
        %2391 = vmatmul.mubr.bf16.gmra.mrb[0].mxu0 %v2300
        %v2392 = vpop.f32.mrb[0].mxu0
        %v2393 = vadd.f32 %v2143, %v2392
        %v2394 = vpop.f32.mrb[0].mxu0
        %v2395 = vadd.f32 %v2145, %v2394
        %v2396 = vpop.f32.mrb[0].mxu0
        %v2397 = vadd.f32 %v2147, %v2396
        %v2398 = vpop.f32.mrb[0].mxu0
        %v2399 = vadd.f32 %v2149, %v2398
        %2400 = vmatprep.mubr.bf16.mxu0 0
        %2401 = vmatmul.mubr.bf16.gmra.mrb[0].mxu0 %v2303
        %v2402 = vpop.f32.mrb[0].mxu0
        %v2403 = vadd.f32 %v2153, %v2402
        %v2404 = vpop.f32.mrb[0].mxu0
        %v2405 = vadd.f32 %v2155, %v2404
        %v2406 = vpop.f32.mrb[0].mxu0
        %v2407 = vadd.f32 %v2157, %v2406
        %v2408 = vpop.f32.mrb[0].mxu0
        %v2409 = vadd.f32 %v2159, %v2408
        %2410 = vmatprep.mubr.bf16.mxu0 0
        %2411 = vmatmul.mubr.bf16.gmra.mrb[0].mxu0 %v2306
        %v2412 = vpop.f32.mrb[0].mxu0
        %v2413 = vadd.f32 %v2163, %v2412
        %v2414 = vpop.f32.mrb[0].mxu0
        %v2415 = vadd.f32 %v2165, %v2414
        %v2416 = vpop.f32.mrb[0].mxu0
        %v2417 = vadd.f32 %v2167, %v2416
        %v2418 = vpop.f32.mrb[0].mxu0
        %v2419 = vadd.f32 %v2169, %v2418
        %2420 = vdwg.mxu0
        %2421 = vmatprep.subr.bf16.mxu0 %v790
        %2422 = vmatpush1.bf16.msra.mxu0 %v789
        %2423 = vmatprep.subr.bf16.mxu0 %v794
        %2424 = vmatpush1.bf16.msra.mxu0 %v793
        %2425 = vmatprep.subr.bf16.mxu0 %v798
        %2426 = vmatpush1.bf16.msra.mxu0 %v797
        %2427 = vmatprep.subr.bf16.mxu0 %v802
        %2428 = vmatpush1.bf16.msra.mxu0 %v801
        %2429 = vmatprep.subr.bf16.mxu0 0
        %2430 = vmatpush1.bf16.msra.mxu0 0
        %2431 = vmatprep.subr.bf16.mxu0 0
        %2432 = vmatpush1.bf16.msra.mxu0 0
        %2433 = vmatprep.subr.bf16.mxu0 0
        %2434 = vmatpush1.bf16.msra.mxu0 0
        %2435 = vmatprep.subr.bf16.mxu0 0
        %2436 = vmatpush1.bf16.msra.mxu0 0
        %2437 = vmatprep.subr.bf16.mxu0 0
        %2438 = vmatpush1.bf16.msra.mxu0 0
        %2439 = vmatprep.subr.bf16.mxu0 0
        %2440 = vmatpush1.bf16.msra.mxu0 0
        %2441 = vmatprep.subr.bf16.mxu0 0
        %2442 = vmatpush1.bf16.msra.mxu0 0
        %2443 = vmatprep.subr.bf16.mxu0 0
        %2444 = vmatpush1.bf16.msra.mxu0 0
        %2445 = vmatprep.subr.bf16.mxu0 0
        %2446 = vmatpush1.bf16.msra.mxu0 0
        %2447 = vmatprep.subr.bf16.mxu0 0
        %2448 = vmatpush1.bf16.msra.mxu0 0
        %2449 = vmatprep.subr.bf16.mxu0 0
        %2450 = vmatpush1.bf16.msra.mxu0 0
        %2451 = vmatprep.subr.bf16.mxu0 0
        %2452 = vmatpush1.bf16.msra.mxu0 0
        %2453 = vmatprep.mubr.bf16.mxu0 0
        %2454 = vmatmul.mubr.bf16.gmra.mrb[0].mxu0 %v2285
        %v2455 = vpop.f32.mrb[0].mxu0
        %v2456 = vadd.f32 %v2206, %v2455
        %v2457 = vpop.f32.mrb[0].mxu0
        %v2458 = vadd.f32 %v2208, %v2457
        %v2459 = vpop.f32.mrb[0].mxu0
        %v2460 = vadd.f32 %v2210, %v2459
        %v2461 = vpop.f32.mrb[0].mxu0
        %v2462 = vadd.f32 %v2212, %v2461
        %2463 = vmatprep.mubr.bf16.mxu0 0
        %2464 = vmatmul.mubr.bf16.gmra.mrb[0].mxu0 %v2288
        %v2465 = vpop.f32.mrb[0].mxu0
        %v2466 = vadd.f32 %v2216, %v2465
        %v2467 = vpop.f32.mrb[0].mxu0
        %v2468 = vadd.f32 %v2218, %v2467
        %v2469 = vpop.f32.mrb[0].mxu0
        %v2470 = vadd.f32 %v2220, %v2469
        %v2471 = vpop.f32.mrb[0].mxu0
        %v2472 = vadd.f32 %v2222, %v2471
        %2473 = vmatprep.mubr.bf16.mxu0 0
        %2474 = vmatmul.mubr.bf16.gmra.mrb[0].mxu0 %v2291
        %v2475 = vpop.f32.mrb[0].mxu0
        %v2476 = vadd.f32 %v2226, %v2475
        %v2477 = vpop.f32.mrb[0].mxu0
        %v2478 = vadd.f32 %v2228, %v2477
        %v2479 = vpop.f32.mrb[0].mxu0
        %v2480 = vadd.f32 %v2230, %v2479
        %v2481 = vpop.f32.mrb[0].mxu0
        %v2482 = vadd.f32 %v2232, %v2481
        %2483 = vmatprep.mubr.bf16.mxu0 0
        %2484 = vmatmul.mubr.bf16.gmra.mrb[0].mxu0 %v2294
        %v2485 = vpop.f32.mrb[0].mxu0
        %v2486 = vadd.f32 %v2236, %v2485
        %v2487 = vpop.f32.mrb[0].mxu0
        %v2488 = vadd.f32 %v2238, %v2487
        %v2489 = vpop.f32.mrb[0].mxu0
        %v2490 = vadd.f32 %v2240, %v2489
        %v2491 = vpop.f32.mrb[0].mxu0
        %v2492 = vadd.f32 %v2242, %v2491
        %2493 = vmatprep.mubr.bf16.mxu0 0
        %2494 = vmatmul.mubr.bf16.gmra.mrb[0].mxu0 %v2297
        %v2495 = vpop.f32.mrb[0].mxu0
        %v2496 = vadd.f32 %v2246, %v2495
        %v2497 = vpop.f32.mrb[0].mxu0
        %v2498 = vadd.f32 %v2248, %v2497
        %v2499 = vpop.f32.mrb[0].mxu0
        %v2500 = vadd.f32 %v2250, %v2499
        %v2501 = vpop.f32.mrb[0].mxu0
        %v2502 = vadd.f32 %v2252, %v2501
        %2503 = vmatprep.mubr.bf16.mxu0 0
        %2504 = vmatmul.mubr.bf16.gmra.mrb[0].mxu0 %v2300
        %v2505 = vpop.f32.mrb[0].mxu0
        %v2506 = vadd.f32 %v2256, %v2505
        %v2507 = vpop.f32.mrb[0].mxu0
        %v2508 = vadd.f32 %v2258, %v2507
        %v2509 = vpop.f32.mrb[0].mxu0
        %v2510 = vadd.f32 %v2260, %v2509
        %v2511 = vpop.f32.mrb[0].mxu0
        %v2512 = vadd.f32 %v2262, %v2511
        %2513 = vmatprep.mubr.bf16.mxu0 0
        %2514 = vmatmul.mubr.bf16.gmra.mrb[0].mxu0 %v2303
        %v2515 = vpop.f32.mrb[0].mxu0
        %v2516 = vadd.f32 %v2266, %v2515
        %v2517 = vpop.f32.mrb[0].mxu0
        %v2518 = vadd.f32 %v2268, %v2517
        %v2519 = vpop.f32.mrb[0].mxu0
        %v2520 = vadd.f32 %v2270, %v2519
        %v2521 = vpop.f32.mrb[0].mxu0
        %v2522 = vadd.f32 %v2272, %v2521
        %2523 = vmatprep.mubr.bf16.mxu0 0
        %2524 = vmatmul.mubr.bf16.gmra.mrb[0].mxu0 %v2306
        %v2525 = vpop.f32.mrb[0].mxu0
        %v2526 = vadd.f32 %v2276, %v2525
        %v2527 = vpop.f32.mrb[0].mxu0
        %v2528 = vadd.f32 %v2278, %v2527
        %v2529 = vpop.f32.mrb[0].mxu0
        %v2530 = vadd.f32 %v2280, %v2529
        %v2531 = vpop.f32.mrb[0].mxu0
        %v2532 = vadd.f32 %v2282, %v2531
        %2533 = vdwg.mxu0
        %v2534 = vxor.u32 %v2343, 2147483648
        %v2535 = vxor.u32 %v2347, 2147483648
        %v2536 = vxor.u32 %v2353, 2147483648
        %v2537 = vxor.u32 %v2357, 2147483648
        %v2538 = vxor.u32 %v2363, 2147483648
        %v2539 = vxor.u32 %v2367, 2147483648
        %v2540 = vxor.u32 %v2373, 2147483648
        %v2541 = vxor.u32 %v2377, 2147483648
        %v2542 = vxor.u32 %v2383, 2147483648
        %v2543 = vxor.u32 %v2387, 2147483648
        %v2544 = vxor.u32 %v2393, 2147483648
        %v2545 = vxor.u32 %v2397, 2147483648
        %v2546 = vxor.u32 %v2403, 2147483648
        %v2547 = vxor.u32 %v2407, 2147483648
        %v2548 = vxor.u32 %v2413, 2147483648
        %v2549 = vxor.u32 %v2417, 2147483648
        %v2550 = vmul.f32 %v2534, 1.442695
        %v2551 = vpow.pop %v2550
        %v2552 = vmul.f32 %v2535, 1.442695
        %v2553 = vpow.pop %v2552
        %v2554 = vmul.f32 %v2536, 1.442695
        %v2555 = vpow.pop %v2554
        %v2556 = vmul.f32 %v2537, 1.442695
        %v2557 = vpow.pop %v2556
        %v2558 = vmul.f32 %v2538, 1.442695
        %v2559 = vpow.pop %v2558
        %v2560 = vmul.f32 %v2539, 1.442695
        %v2561 = vpow.pop %v2560
        %v2562 = vmul.f32 %v2540, 1.442695
        %v2563 = vpow.pop %v2562
        %v2564 = vmul.f32 %v2541, 1.442695
        %v2565 = vpow.pop %v2564
        %v2566 = vmul.f32 %v2542, 1.442695
        %v2567 = vpow.pop %v2566
        %v2568 = vmul.f32 %v2543, 1.442695
        %v2569 = vpow.pop %v2568
        %v2570 = vmul.f32 %v2544, 1.442695
        %v2571 = vpow.pop %v2570
        %v2572 = vmul.f32 %v2545, 1.442695
        %v2573 = vpow.pop %v2572
        %v2574 = vmul.f32 %v2546, 1.442695
        %v2575 = vpow.pop %v2574
        %v2576 = vmul.f32 %v2547, 1.442695
        %v2577 = vpow.pop %v2576
        %v2578 = vmul.f32 %v2548, 1.442695
        %v2579 = vpow.pop %v2578
        %v2580 = vmul.f32 %v2549, 1.442695
        %v2581 = vpow.pop %v2580
        %v2582 = vadd.f32 %v2551, 1.0
        %v2583 = vadd.f32 %v2553, 1.0
        %v2584 = vadd.f32 %v2555, 1.0
        %v2585 = vadd.f32 %v2557, 1.0
        %v2586 = vadd.f32 %v2559, 1.0
        %v2587 = vadd.f32 %v2561, 1.0
        %v2588 = vadd.f32 %v2563, 1.0
        %v2589 = vadd.f32 %v2565, 1.0
        %v2590 = vadd.f32 %v2567, 1.0
        %v2591 = vadd.f32 %v2569, 1.0
        %v2592 = vadd.f32 %v2571, 1.0
        %v2593 = vadd.f32 %v2573, 1.0
        %v2594 = vadd.f32 %v2575, 1.0
        %v2595 = vadd.f32 %v2577, 1.0
        %v2596 = vadd.f32 %v2579, 1.0
        %v2597 = vadd.f32 %v2581, 1.0
        %v2598 = vrcp.pop %v2582
        %v2599 = vmul.f32 1.0, %v2598
        %v2600 = vrcp.pop %v2583
        %v2601 = vmul.f32 1.0, %v2600
        %v2602 = vrcp.pop %v2584
        %v2603 = vmul.f32 1.0, %v2602
        %v2604 = vrcp.pop %v2585
        %v2605 = vmul.f32 1.0, %v2604
        %v2606 = vrcp.pop %v2586
        %v2607 = vmul.f32 1.0, %v2606
        %v2608 = vrcp.pop %v2587
        %v2609 = vmul.f32 1.0, %v2608
        %v2610 = vrcp.pop %v2588
        %v2611 = vmul.f32 1.0, %v2610
        %v2612 = vrcp.pop %v2589
        %v2613 = vmul.f32 1.0, %v2612
        %v2614 = vrcp.pop %v2590
        %v2615 = vmul.f32 1.0, %v2614
        %v2616 = vrcp.pop %v2591
        %v2617 = vmul.f32 1.0, %v2616
        %v2618 = vrcp.pop %v2592
        %v2619 = vmul.f32 1.0, %v2618
        %v2620 = vrcp.pop %v2593
        %v2621 = vmul.f32 1.0, %v2620
        %v2622 = vrcp.pop %v2594
        %v2623 = vmul.f32 1.0, %v2622
        %v2624 = vrcp.pop %v2595
        %v2625 = vmul.f32 1.0, %v2624
        %v2626 = vrcp.pop %v2596
        %v2627 = vmul.f32 1.0, %v2626
        %v2628 = vrcp.pop %v2597
        %v2629 = vmul.f32 1.0, %v2628
        %v2630 = vxor.u32 %v2345, 2147483648
        %v2631 = vxor.u32 %v2349, 2147483648
        %v2632 = vxor.u32 %v2355, 2147483648
        %v2633 = vxor.u32 %v2359, 2147483648
        %v2634 = vxor.u32 %v2365, 2147483648
        %v2635 = vxor.u32 %v2369, 2147483648
        %v2636 = vxor.u32 %v2375, 2147483648
        %v2637 = vxor.u32 %v2379, 2147483648
        %v2638 = vxor.u32 %v2385, 2147483648
        %v2639 = vxor.u32 %v2389, 2147483648
        %v2640 = vxor.u32 %v2395, 2147483648
        %v2641 = vxor.u32 %v2399, 2147483648
        %v2642 = vxor.u32 %v2405, 2147483648
        %v2643 = vxor.u32 %v2409, 2147483648
        %v2644 = vxor.u32 %v2415, 2147483648
        %v2645 = vxor.u32 %v2419, 2147483648
        %v2646 = vmul.f32 %v2630, 1.442695
        %v2647 = vpow.pop %v2646
        %v2648 = vmul.f32 %v2631, 1.442695
        %v2649 = vpow.pop %v2648
        %v2650 = vmul.f32 %v2632, 1.442695
        %v2651 = vpow.pop %v2650
        %v2652 = vmul.f32 %v2633, 1.442695
        %v2653 = vpow.pop %v2652
        %v2654 = vmul.f32 %v2634, 1.442695
        %v2655 = vpow.pop %v2654
        %v2656 = vmul.f32 %v2635, 1.442695
        %v2657 = vpow.pop %v2656
        %v2658 = vmul.f32 %v2636, 1.442695
        %v2659 = vpow.pop %v2658
        %v2660 = vmul.f32 %v2637, 1.442695
        %v2661 = vpow.pop %v2660
        %v2662 = vmul.f32 %v2638, 1.442695
        %v2663 = vpow.pop %v2662
        %v2664 = vmul.f32 %v2639, 1.442695
        %v2665 = vpow.pop %v2664
        %v2666 = vmul.f32 %v2640, 1.442695
        %v2667 = vpow.pop %v2666
        %v2668 = vmul.f32 %v2641, 1.442695
        %v2669 = vpow.pop %v2668
        %v2670 = vmul.f32 %v2642, 1.442695
        %v2671 = vpow.pop %v2670
        %v2672 = vmul.f32 %v2643, 1.442695
        %v2673 = vpow.pop %v2672
        %v2674 = vmul.f32 %v2644, 1.442695
        %v2675 = vpow.pop %v2674
        %v2676 = vmul.f32 %v2645, 1.442695
        %v2677 = vpow.pop %v2676
        %v2678 = vadd.f32 %v2647, 1.0
        %v2679 = vadd.f32 %v2649, 1.0
        %v2680 = vadd.f32 %v2651, 1.0
        %v2681 = vadd.f32 %v2653, 1.0
        %v2682 = vadd.f32 %v2655, 1.0
        %v2683 = vadd.f32 %v2657, 1.0
        %v2684 = vadd.f32 %v2659, 1.0
        %v2685 = vadd.f32 %v2661, 1.0
        %v2686 = vadd.f32 %v2663, 1.0
        %v2687 = vadd.f32 %v2665, 1.0
        %v2688 = vadd.f32 %v2667, 1.0
        %v2689 = vadd.f32 %v2669, 1.0
        %v2690 = vadd.f32 %v2671, 1.0
        %v2691 = vadd.f32 %v2673, 1.0
        %v2692 = vadd.f32 %v2675, 1.0
        %v2693 = vadd.f32 %v2677, 1.0
        %v2694 = vrcp.pop %v2678
        %v2695 = vmul.f32 1.0, %v2694
        %v2696 = vrcp.pop %v2679
        %v2697 = vmul.f32 1.0, %v2696
        %v2698 = vrcp.pop %v2680
        %v2699 = vmul.f32 1.0, %v2698
        %v2700 = vrcp.pop %v2681
        %v2701 = vmul.f32 1.0, %v2700
        %v2702 = vrcp.pop %v2682
        %v2703 = vmul.f32 1.0, %v2702
        %v2704 = vrcp.pop %v2683
        %v2705 = vmul.f32 1.0, %v2704
        %v2706 = vrcp.pop %v2684
        %v2707 = vmul.f32 1.0, %v2706
        %v2708 = vrcp.pop %v2685
        %v2709 = vmul.f32 1.0, %v2708
        %v2710 = vrcp.pop %v2686
        %v2711 = vmul.f32 1.0, %v2710
        %v2712 = vrcp.pop %v2687
        %v2713 = vmul.f32 1.0, %v2712
        %v2714 = vrcp.pop %v2688
        %v2715 = vmul.f32 1.0, %v2714
        %v2716 = vrcp.pop %v2689
        %v2717 = vmul.f32 1.0, %v2716
        %v2718 = vrcp.pop %v2690
        %v2719 = vmul.f32 1.0, %v2718
        %v2720 = vrcp.pop %v2691
        %v2721 = vmul.f32 1.0, %v2720
        %v2722 = vrcp.pop %v2692
        %v2723 = vmul.f32 1.0, %v2722
        %v2724 = vrcp.pop %v2693
        %v2725 = vmul.f32 1.0, %v2724
        %v2726 = vtanh.pop %v2456
        %v2727 = vtanh.pop %v2460
        %v2728 = vtanh.pop %v2466
        %v2729 = vtanh.pop %v2470
        %v2730 = vtanh.pop %v2476
        %v2731 = vtanh.pop %v2480
        %v2732 = vtanh.pop %v2486
        %v2733 = vtanh.pop %v2490
        %v2734 = vtanh.pop %v2496
        %v2735 = vtanh.pop %v2500
        %v2736 = vtanh.pop %v2506
        %v2737 = vtanh.pop %v2510
        %v2738 = vtanh.pop %v2516
        %v2739 = vtanh.pop %v2520
        %v2740 = vtanh.pop %v2526
        %v2741 = vtanh.pop %v2530
        %v2742 = vxor.u32 %v2458, 2147483648
        %v2743 = vxor.u32 %v2462, 2147483648
        %v2744 = vxor.u32 %v2468, 2147483648
        %v2745 = vxor.u32 %v2472, 2147483648
        %v2746 = vxor.u32 %v2478, 2147483648
        %v2747 = vxor.u32 %v2482, 2147483648
        %v2748 = vxor.u32 %v2488, 2147483648
        %v2749 = vxor.u32 %v2492, 2147483648
        %v2750 = vxor.u32 %v2498, 2147483648
        %v2751 = vxor.u32 %v2502, 2147483648
        %v2752 = vxor.u32 %v2508, 2147483648
        %v2753 = vxor.u32 %v2512, 2147483648
        %v2754 = vxor.u32 %v2518, 2147483648
        %v2755 = vxor.u32 %v2522, 2147483648
        %v2756 = vxor.u32 %v2528, 2147483648
        %v2757 = vxor.u32 %v2532, 2147483648
        %v2758 = vmul.f32 %v2742, 1.442695
        %v2759 = vpow.pop %v2758
        %v2760 = vmul.f32 %v2743, 1.442695
        %v2761 = vpow.pop %v2760
        %v2762 = vmul.f32 %v2744, 1.442695
        %v2763 = vpow.pop %v2762
        %v2764 = vmul.f32 %v2745, 1.442695
        %v2765 = vpow.pop %v2764
        %v2766 = vmul.f32 %v2746, 1.442695
        %v2767 = vpow.pop %v2766
        %v2768 = vmul.f32 %v2747, 1.442695
        %v2769 = vpow.pop %v2768
        %v2770 = vmul.f32 %v2748, 1.442695
        %v2771 = vpow.pop %v2770
        %v2772 = vmul.f32 %v2749, 1.442695
        %v2773 = vpow.pop %v2772
        %v2774 = vmul.f32 %v2750, 1.442695
        %v2775 = vpow.pop %v2774
        %v2776 = vmul.f32 %v2751, 1.442695
        %v2777 = vpow.pop %v2776
        %v2778 = vmul.f32 %v2752, 1.442695
        %v2779 = vpow.pop %v2778
        %v2780 = vmul.f32 %v2753, 1.442695
        %v2781 = vpow.pop %v2780
        %v2782 = vmul.f32 %v2754, 1.442695
        %v2783 = vpow.pop %v2782
        %v2784 = vmul.f32 %v2755, 1.442695
        %v2785 = vpow.pop %v2784
        %v2786 = vmul.f32 %v2756, 1.442695
        %v2787 = vpow.pop %v2786
        %v2788 = vmul.f32 %v2757, 1.442695
        %v2789 = vpow.pop %v2788
        %v2790 = vadd.f32 %v2759, 1.0
        %v2791 = vadd.f32 %v2761, 1.0
        %v2792 = vadd.f32 %v2763, 1.0
        %v2793 = vadd.f32 %v2765, 1.0
        %v2794 = vadd.f32 %v2767, 1.0
        %v2795 = vadd.f32 %v2769, 1.0
        %v2796 = vadd.f32 %v2771, 1.0
        %v2797 = vadd.f32 %v2773, 1.0
        %v2798 = vadd.f32 %v2775, 1.0
        %v2799 = vadd.f32 %v2777, 1.0
        %v2800 = vadd.f32 %v2779, 1.0
        %v2801 = vadd.f32 %v2781, 1.0
        %v2802 = vadd.f32 %v2783, 1.0
        %v2803 = vadd.f32 %v2785, 1.0
        %v2804 = vadd.f32 %v2787, 1.0
        %v2805 = vadd.f32 %v2789, 1.0
        %v2806 = vrcp.pop %v2790
        %v2807 = vmul.f32 1.0, %v2806
        %v2808 = vrcp.pop %v2791
        %v2809 = vmul.f32 1.0, %v2808
        %v2810 = vrcp.pop %v2792
        %v2811 = vmul.f32 1.0, %v2810
        %v2812 = vrcp.pop %v2793
        %v2813 = vmul.f32 1.0, %v2812
        %v2814 = vrcp.pop %v2794
        %v2815 = vmul.f32 1.0, %v2814
        %v2816 = vrcp.pop %v2795
        %v2817 = vmul.f32 1.0, %v2816
        %v2818 = vrcp.pop %v2796
        %v2819 = vmul.f32 1.0, %v2818
        %v2820 = vrcp.pop %v2797
        %v2821 = vmul.f32 1.0, %v2820
        %v2822 = vrcp.pop %v2798
        %v2823 = vmul.f32 1.0, %v2822
        %v2824 = vrcp.pop %v2799
        %v2825 = vmul.f32 1.0, %v2824
        %v2826 = vrcp.pop %v2800
        %v2827 = vmul.f32 1.0, %v2826
        %v2828 = vrcp.pop %v2801
        %v2829 = vmul.f32 1.0, %v2828
        %v2830 = vrcp.pop %v2802
        %v2831 = vmul.f32 1.0, %v2830
        %v2832 = vrcp.pop %v2803
        %v2833 = vmul.f32 1.0, %v2832
        %v2834 = vrcp.pop %v2804
        %v2835 = vmul.f32 1.0, %v2834
        %v2836 = vrcp.pop %v2805
        %v2837 = vmul.f32 1.0, %v2836
        %v2838 = vmul.f32 %v2695, %v1898
        %v2839 = vmul.f32 %v2697, %v1899
        %v2840 = vmul.f32 %v2699, %v1900
        %v2841 = vmul.f32 %v2701, %v1901
        %v2842 = vmul.f32 %v2703, %v1902
        %v2843 = vmul.f32 %v2705, %v1903
        %v2844 = vmul.f32 %v2707, %v1904
        %v2845 = vmul.f32 %v2709, %v1905
        %v2846 = vmul.f32 %v2711, %v1906
        %v2847 = vmul.f32 %v2713, %v1907
        %v2848 = vmul.f32 %v2715, %v1908
        %v2849 = vmul.f32 %v2717, %v1909
        %v2850 = vmul.f32 %v2719, %v1910
        %v2851 = vmul.f32 %v2721, %v1911
        %v2852 = vmul.f32 %v2723, %v1912
        %v2853 = vmul.f32 %v2725, %v1913
        %v2854 = vmul.f32 %v2599, %v2726
        %v2855 = vmul.f32 %v2601, %v2727
        %v2856 = vmul.f32 %v2603, %v2728
        %v2857 = vmul.f32 %v2605, %v2729
        %v2858 = vmul.f32 %v2607, %v2730
        %v2859 = vmul.f32 %v2609, %v2731
        %v2860 = vmul.f32 %v2611, %v2732
        %v2861 = vmul.f32 %v2613, %v2733
        %v2862 = vmul.f32 %v2615, %v2734
        %v2863 = vmul.f32 %v2617, %v2735
        %v2864 = vmul.f32 %v2619, %v2736
        %v2865 = vmul.f32 %v2621, %v2737
        %v2866 = vmul.f32 %v2623, %v2738
        %v2867 = vmul.f32 %v2625, %v2739
        %v2868 = vmul.f32 %v2627, %v2740
        %v2869 = vmul.f32 %v2629, %v2741
        %v2870 = vadd.f32 %v2838, %v2854
        %v2871 = vadd.f32 %v2839, %v2855
        %v2872 = vadd.f32 %v2840, %v2856
        %v2873 = vadd.f32 %v2841, %v2857
        %v2874 = vadd.f32 %v2842, %v2858
        %v2875 = vadd.f32 %v2843, %v2859
        %v2876 = vadd.f32 %v2844, %v2860
        %v2877 = vadd.f32 %v2845, %v2861
        %v2878 = vadd.f32 %v2846, %v2862
        %v2879 = vadd.f32 %v2847, %v2863
        %v2880 = vadd.f32 %v2848, %v2864
        %v2881 = vadd.f32 %v2849, %v2865
        %v2882 = vadd.f32 %v2850, %v2866
        %v2883 = vadd.f32 %v2851, %v2867
        %v2884 = vadd.f32 %v2852, %v2868
        %v2885 = vadd.f32 %v2853, %v2869
        %v2886 = vtanh.pop %v2870
        %v2887 = vtanh.pop %v2871
        %v2888 = vtanh.pop %v2872
        %v2889 = vtanh.pop %v2873
        %v2890 = vtanh.pop %v2874
        %v2891 = vtanh.pop %v2875
        %v2892 = vtanh.pop %v2876
        %v2893 = vtanh.pop %v2877
        %v2894 = vtanh.pop %v2878
        %v2895 = vtanh.pop %v2879
        %v2896 = vtanh.pop %v2880
        %v2897 = vtanh.pop %v2881
        %v2898 = vtanh.pop %v2882
        %v2899 = vtanh.pop %v2883
        %v2900 = vtanh.pop %v2884
        %v2901 = vtanh.pop %v2885
        %v2902 = vmul.f32 %v2807, %v2886
        %v2903 = vmul.f32 %v2809, %v2887
        %v2904 = vmul.f32 %v2811, %v2888
        %v2905 = vmul.f32 %v2813, %v2889
        %v2906 = vmul.f32 %v2815, %v2890
        %v2907 = vmul.f32 %v2817, %v2891
        %v2908 = vmul.f32 %v2819, %v2892
        %v2909 = vmul.f32 %v2821, %v2893
        %v2910 = vmul.f32 %v2823, %v2894
        %v2911 = vmul.f32 %v2825, %v2895
        %v2912 = vmul.f32 %v2827, %v2896
        %v2913 = vmul.f32 %v2829, %v2897
        %v2914 = vmul.f32 %v2831, %v2898
        %v2915 = vmul.f32 %v2833, %v2899
        %v2916 = vmul.f32 %v2835, %v2900
        %v2917 = vmul.f32 %v2837, %v2901
        %2918 = vset.pattern.permute.xlu0 2
        %2919 = vperm.xlu0 %2918, %v805
        %v2920 = vpop.permute.xlu0 %2919
        %2921 = vset.pattern.permute.xlu0 2
        %2922 = vperm.xlu0 %2921, %v806
        %v2923 = vpop.permute.xlu0 %2922
        %2924 = vset.pattern.permute.xlu0 2
        %2925 = vperm.xlu0 %2924, %v807
        %v2926 = vpop.permute.xlu0 %2925
        %2927 = vset.pattern.permute.xlu0 2
        %2928 = vperm.xlu0 %2927, %v808
        %v2929 = vpop.permute.xlu0 %2928
        %2930 = vset.pattern.permute.xlu0 2
        %2931 = vperm.xlu0 %2930, %v809
        %v2932 = vpop.permute.xlu0 %2931
        %2933 = vset.pattern.permute.xlu0 2
        %2934 = vperm.xlu0 %2933, %v810
        %v2935 = vpop.permute.xlu0 %2934
        %2936 = vset.pattern.permute.xlu0 2
        %2937 = vperm.xlu0 %2936, %v811
        %v2938 = vpop.permute.xlu0 %2937
        %2939 = vset.pattern.permute.xlu0 2
        %2940 = vperm.xlu0 %2939, %v812
        %v2941 = vpop.permute.xlu0 %2940
        %2942 = vset.pattern.permute.xlu0 2
        %2943 = vperm.xlu0 %2942, %v813
        %v2944 = vpop.permute.xlu0 %2943
        %2945 = vset.pattern.permute.xlu0 2
        %2946 = vperm.xlu0 %2945, %v814
        %v2947 = vpop.permute.xlu0 %2946
        %2948 = vset.pattern.permute.xlu0 2
        %2949 = vperm.xlu0 %2948, %v815
        %v2950 = vpop.permute.xlu0 %2949
        %2951 = vset.pattern.permute.xlu0 2
        %2952 = vperm.xlu0 %2951, %v816
        %v2953 = vpop.permute.xlu0 %2952
        %2954 = vset.pattern.permute.xlu0 2
        %2955 = vperm.xlu0 %2954, %v817
        %v2956 = vpop.permute.xlu0 %2955
        %2957 = vset.pattern.permute.xlu0 2
        %2958 = vperm.xlu0 %2957, %v818
        %v2959 = vpop.permute.xlu0 %2958
        %2960 = vset.pattern.permute.xlu0 2
        %2961 = vperm.xlu0 %2960, %v819
        %v2962 = vpop.permute.xlu0 %2961
        %2963 = vset.pattern.permute.xlu0 2
        %2964 = vperm.xlu0 %2963, %v820
        %v2965 = vpop.permute.xlu0 %2964
        %vm2966 = vcmp.eq.s32.totalorder %v804, %v2920
        %vm2967 = vcmp.eq.s32.totalorder %v804, %v2923
        %vm2968 = vcmp.eq.s32.totalorder %v804, %v2926
        %vm2969 = vcmp.eq.s32.totalorder %v804, %v2929
        %vm2970 = vcmp.eq.s32.totalorder %v804, %v2932
        %vm2971 = vcmp.eq.s32.totalorder %v804, %v2935
        %vm2972 = vcmp.eq.s32.totalorder %v804, %v2938
        %vm2973 = vcmp.eq.s32.totalorder %v804, %v2941
        %vm2974 = vcmp.eq.s32.totalorder %v804, %v2944
        %vm2975 = vcmp.eq.s32.totalorder %v804, %v2947
        %vm2976 = vcmp.eq.s32.totalorder %v804, %v2950
        %vm2977 = vcmp.eq.s32.totalorder %v804, %v2953
        %vm2978 = vcmp.eq.s32.totalorder %v804, %v2956
        %vm2979 = vcmp.eq.s32.totalorder %v804, %v2959
        %vm2980 = vcmp.eq.s32.totalorder %v804, %v2962
        %vm2981 = vcmp.eq.s32.totalorder %v804, %v2965
        %v2982 = vsel %vm2966, 1, 0
        %v2983 = vsel %vm2967, 1, 0
        %v2984 = vsel %vm2968, 1, 0
        %v2985 = vsel %vm2969, 1, 0
        %v2986 = vsel %vm2970, 1, 0
        %v2987 = vsel %vm2971, 1, 0
        %v2988 = vsel %vm2972, 1, 0
        %v2989 = vsel %vm2973, 1, 0
        %v2990 = vsel %vm2974, 1, 0
        %v2991 = vsel %vm2975, 1, 0
        %v2992 = vsel %vm2976, 1, 0
        %v2993 = vsel %vm2977, 1, 0
        %v2994 = vsel %vm2978, 1, 0
        %v2995 = vsel %vm2979, 1, 0
        %v2996 = vsel %vm2980, 1, 0
        %v2997 = vsel %vm2981, 1, 0
        %v2998 = vcvt.s32.f32 %v2982
        %v2999 = vcvt.s32.f32 %v2983
        %v3000 = vcvt.s32.f32 %v2984
        %v3001 = vcvt.s32.f32 %v2985
        %v3002 = vcvt.s32.f32 %v2986
        %v3003 = vcvt.s32.f32 %v2987
        %v3004 = vcvt.s32.f32 %v2988
        %v3005 = vcvt.s32.f32 %v2989
        %v3006 = vcvt.s32.f32 %v2990
        %v3007 = vcvt.s32.f32 %v2991
        %v3008 = vcvt.s32.f32 %v2992
        %v3009 = vcvt.s32.f32 %v2993
        %v3010 = vcvt.s32.f32 %v2994
        %v3011 = vcvt.s32.f32 %v2995
        %v3012 = vcvt.s32.f32 %v2996
        %v3013 = vcvt.s32.f32 %v2997
        %v3014 = vpack.c.bf16 %v2999, %v2998
        %v3015 = vpack.c.bf16 %v3001, %v3000
        %v3016 = vpack.c.bf16 %v3003, %v3002
        %v3017 = vpack.c.bf16 %v3005, %v3004
        %v3018 = vpack.c.bf16 %v3007, %v3006
        %v3019 = vpack.c.bf16 %v3009, %v3008
        %v3020 = vpack.c.bf16 %v3011, %v3010
        %v3021 = vpack.c.bf16 %v3013, %v3012
        %v3022 = vpack.c.bf16 %v2903, %v2902
        %v3023 = vpack.c.bf16 %v2905, %v2904
        %v3024 = vpack.c.bf16 %v2907, %v2906
        %v3025 = vpack.c.bf16 %v2909, %v2908
        %v3026 = vpack.c.bf16 %v2911, %v2910
        %v3027 = vpack.c.bf16 %v2913, %v2912
        %v3028 = vpack.c.bf16 %v2915, %v2914
        %v3029 = vpack.c.bf16 %v2917, %v2916
        %3030 = vmatprep.subr.bf16.mxu0 %v1022
        %3031 = vmatpush1.bf16.msra.mxu0 %v1021
        %3032 = vmatprep.subr.bf16.mxu0 %v1026
        %3033 = vmatpush1.bf16.msra.mxu0 %v1025
        %3034 = vmatprep.subr.bf16.mxu0 %v1030
        %3035 = vmatpush1.bf16.msra.mxu0 %v1029
        %3036 = vmatprep.subr.bf16.mxu0 %v1034
        %3037 = vmatpush1.bf16.msra.mxu0 %v1033
        %3038 = vmatprep.subr.bf16.mxu0 %v1038
        %3039 = vmatpush1.bf16.msra.mxu0 %v1037
        %3040 = vmatprep.subr.bf16.mxu0 %v1042
        %3041 = vmatpush1.bf16.msra.mxu0 %v1041
        %3042 = vmatprep.subr.bf16.mxu0 %v1046
        %3043 = vmatpush1.bf16.msra.mxu0 %v1045
        %3044 = vmatprep.subr.bf16.mxu0 %v1050
        %3045 = vmatpush1.bf16.msra.mxu0 %v1049
        %3046 = vmatprep.subr.bf16.mxu0 0
        %3047 = vmatpush1.bf16.msra.mxu0 0
        %3048 = vmatprep.subr.bf16.mxu0 0
        %3049 = vmatpush1.bf16.msra.mxu0 0
        %3050 = vmatprep.subr.bf16.mxu0 0
        %3051 = vmatpush1.bf16.msra.mxu0 0
        %3052 = vmatprep.subr.bf16.mxu0 0
        %3053 = vmatpush1.bf16.msra.mxu0 0
        %3054 = vmatprep.subr.bf16.mxu0 0
        %3055 = vmatpush1.bf16.msra.mxu0 0
        %3056 = vmatprep.subr.bf16.mxu0 0
        %3057 = vmatpush1.bf16.msra.mxu0 0
        %3058 = vmatprep.subr.bf16.mxu0 0
        %3059 = vmatpush1.bf16.msra.mxu0 0
        %3060 = vmatprep.subr.bf16.mxu0 0
        %3061 = vmatpush1.bf16.msra.mxu0 0
        %3062 = vmatprep.mubr.bf16.mxu0 0
        %3063 = vmatmul.mubr.bf16.gmra.mrb[0].mxu0 %v3022
        %v3064 = vpop.f32.mrb[0].mxu0
        %v3065 = vadd.f32 0.0, %v3064
        %v3066 = vpop.f32.mrb[0].mxu0
        %v3067 = vadd.f32 0.0, %v3066
        %v3068 = vpop.f32.mrb[0].mxu0
        %v3069 = vadd.f32 0.0, %v3068
        %v3070 = vpop.f32.mrb[0].mxu0
        %v3071 = vadd.f32 0.0, %v3070
        %3072 = vmatprep.mubr.bf16.mxu0 0
        %3073 = vmatmul.mubr.bf16.gmra.mrb[0].mxu0 %v3023
        %v3074 = vpop.f32.mrb[0].mxu0
        %v3075 = vadd.f32 0.0, %v3074
        %v3076 = vpop.f32.mrb[0].mxu0
        %v3077 = vadd.f32 0.0, %v3076
        %v3078 = vpop.f32.mrb[0].mxu0
        %v3079 = vadd.f32 0.0, %v3078
        %v3080 = vpop.f32.mrb[0].mxu0
        %v3081 = vadd.f32 0.0, %v3080
        %3082 = vmatprep.mubr.bf16.mxu0 0
        %3083 = vmatmul.mubr.bf16.gmra.mrb[0].mxu0 %v3024
        %v3084 = vpop.f32.mrb[0].mxu0
        %v3085 = vadd.f32 0.0, %v3084
        %v3086 = vpop.f32.mrb[0].mxu0
        %v3087 = vadd.f32 0.0, %v3086
        %v3088 = vpop.f32.mrb[0].mxu0
        %v3089 = vadd.f32 0.0, %v3088
        %v3090 = vpop.f32.mrb[0].mxu0
        %v3091 = vadd.f32 0.0, %v3090
        %3092 = vmatprep.mubr.bf16.mxu0 0
        %3093 = vmatmul.mubr.bf16.gmra.mrb[0].mxu0 %v3025
        %v3094 = vpop.f32.mrb[0].mxu0
        %v3095 = vadd.f32 0.0, %v3094
        %v3096 = vpop.f32.mrb[0].mxu0
        %v3097 = vadd.f32 0.0, %v3096
        %v3098 = vpop.f32.mrb[0].mxu0
        %v3099 = vadd.f32 0.0, %v3098
        %v3100 = vpop.f32.mrb[0].mxu0
        %v3101 = vadd.f32 0.0, %v3100
        %3102 = vmatprep.mubr.bf16.mxu0 0
        %3103 = vmatmul.mubr.bf16.gmra.mrb[0].mxu0 %v3026
        %v3104 = vpop.f32.mrb[0].mxu0
        %v3105 = vadd.f32 0.0, %v3104
        %v3106 = vpop.f32.mrb[0].mxu0
        %v3107 = vadd.f32 0.0, %v3106
        %v3108 = vpop.f32.mrb[0].mxu0
        %v3109 = vadd.f32 0.0, %v3108
        %v3110 = vpop.f32.mrb[0].mxu0
        %v3111 = vadd.f32 0.0, %v3110
        %3112 = vmatprep.mubr.bf16.mxu0 0
        %3113 = vmatmul.mubr.bf16.gmra.mrb[0].mxu0 %v3027
        %v3114 = vpop.f32.mrb[0].mxu0
        %v3115 = vadd.f32 0.0, %v3114
        %v3116 = vpop.f32.mrb[0].mxu0
        %v3117 = vadd.f32 0.0, %v3116
        %v3118 = vpop.f32.mrb[0].mxu0
        %v3119 = vadd.f32 0.0, %v3118
        %v3120 = vpop.f32.mrb[0].mxu0
        %v3121 = vadd.f32 0.0, %v3120
        %3122 = vmatprep.mubr.bf16.mxu0 0
        %3123 = vmatmul.mubr.bf16.gmra.mrb[0].mxu0 %v3028
        %v3124 = vpop.f32.mrb[0].mxu0
        %v3125 = vadd.f32 0.0, %v3124
        %v3126 = vpop.f32.mrb[0].mxu0
        %v3127 = vadd.f32 0.0, %v3126
        %v3128 = vpop.f32.mrb[0].mxu0
        %v3129 = vadd.f32 0.0, %v3128
        %v3130 = vpop.f32.mrb[0].mxu0
        %v3131 = vadd.f32 0.0, %v3130
        %3132 = vmatprep.mubr.bf16.mxu0 0
        %3133 = vmatmul.mubr.bf16.gmra.mrb[0].mxu0 %v3029
        %v3134 = vpop.f32.mrb[0].mxu0
        %v3135 = vadd.f32 0.0, %v3134
        %v3136 = vpop.f32.mrb[0].mxu0
        %v3137 = vadd.f32 0.0, %v3136
        %v3138 = vpop.f32.mrb[0].mxu0
        %v3139 = vadd.f32 0.0, %v3138
        %v3140 = vpop.f32.mrb[0].mxu0
        %v3141 = vadd.f32 0.0, %v3140
        %3142 = vdwg.mxu0
        %3143 = vmatprep.subr.bf16.mxu0 %v1024
        %3144 = vmatpush1.bf16.msra.mxu0 %v1023
        %3145 = vmatprep.subr.bf16.mxu0 %v1028
        %3146 = vmatpush1.bf16.msra.mxu0 %v1027
        %3147 = vmatprep.subr.bf16.mxu0 %v1032
        %3148 = vmatpush1.bf16.msra.mxu0 %v1031
        %3149 = vmatprep.subr.bf16.mxu0 %v1036
        %3150 = vmatpush1.bf16.msra.mxu0 %v1035
        %3151 = vmatprep.subr.bf16.mxu0 %v1040
        %3152 = vmatpush1.bf16.msra.mxu0 %v1039
        %3153 = vmatprep.subr.bf16.mxu0 %v1044
        %3154 = vmatpush1.bf16.msra.mxu0 %v1043
        %3155 = vmatprep.subr.bf16.mxu0 %v1048
        %3156 = vmatpush1.bf16.msra.mxu0 %v1047
        %3157 = vmatprep.subr.bf16.mxu0 %v1052
        %3158 = vmatpush1.bf16.msra.mxu0 %v1051
        %3159 = vmatprep.subr.bf16.mxu0 0
        %3160 = vmatpush1.bf16.msra.mxu0 0
        %3161 = vmatprep.subr.bf16.mxu0 0
        %3162 = vmatpush1.bf16.msra.mxu0 0
        %3163 = vmatprep.subr.bf16.mxu0 0
        %3164 = vmatpush1.bf16.msra.mxu0 0
        %3165 = vmatprep.subr.bf16.mxu0 0
        %3166 = vmatpush1.bf16.msra.mxu0 0
        %3167 = vmatprep.subr.bf16.mxu0 0
        %3168 = vmatpush1.bf16.msra.mxu0 0
        %3169 = vmatprep.subr.bf16.mxu0 0
        %3170 = vmatpush1.bf16.msra.mxu0 0
        %3171 = vmatprep.subr.bf16.mxu0 0
        %3172 = vmatpush1.bf16.msra.mxu0 0
        %3173 = vmatprep.subr.bf16.mxu0 0
        %3174 = vmatpush1.bf16.msra.mxu0 0
        %3175 = vmatprep.mubr.bf16.mxu0 0
        %3176 = vmatmul.mubr.bf16.gmra.mrb[0].mxu0 %v3022
        %v3177 = vpop.f32.mrb[0].mxu0
        %v3178 = vadd.f32 0.0, %v3177
        %v3179 = vpop.f32.mrb[0].mxu0
        %v3180 = vadd.f32 0.0, %v3179
        %v3181 = vpop.f32.mrb[0].mxu0
        %v3182 = vadd.f32 0.0, %v3181
        %v3183 = vpop.f32.mrb[0].mxu0
        %v3184 = vadd.f32 0.0, %v3183
        %3185 = vmatprep.mubr.bf16.mxu0 0
        %3186 = vmatmul.mubr.bf16.gmra.mrb[0].mxu0 %v3023
        %v3187 = vpop.f32.mrb[0].mxu0
        %v3188 = vadd.f32 0.0, %v3187
        %v3189 = vpop.f32.mrb[0].mxu0
        %v3190 = vadd.f32 0.0, %v3189
        %v3191 = vpop.f32.mrb[0].mxu0
        %v3192 = vadd.f32 0.0, %v3191
        %v3193 = vpop.f32.mrb[0].mxu0
        %v3194 = vadd.f32 0.0, %v3193
        %3195 = vmatprep.mubr.bf16.mxu0 0
        %3196 = vmatmul.mubr.bf16.gmra.mrb[0].mxu0 %v3024
        %v3197 = vpop.f32.mrb[0].mxu0
        %v3198 = vadd.f32 0.0, %v3197
        %v3199 = vpop.f32.mrb[0].mxu0
        %v3200 = vadd.f32 0.0, %v3199
        %v3201 = vpop.f32.mrb[0].mxu0
        %v3202 = vadd.f32 0.0, %v3201
        %v3203 = vpop.f32.mrb[0].mxu0
        %v3204 = vadd.f32 0.0, %v3203
        %3205 = vmatprep.mubr.bf16.mxu0 0
        %3206 = vmatmul.mubr.bf16.gmra.mrb[0].mxu0 %v3025
        %v3207 = vpop.f32.mrb[0].mxu0
        %v3208 = vadd.f32 0.0, %v3207
        %v3209 = vpop.f32.mrb[0].mxu0
        %v3210 = vadd.f32 0.0, %v3209
        %v3211 = vpop.f32.mrb[0].mxu0
        %v3212 = vadd.f32 0.0, %v3211
        %v3213 = vpop.f32.mrb[0].mxu0
        %v3214 = vadd.f32 0.0, %v3213
        %3215 = vmatprep.mubr.bf16.mxu0 0
        %3216 = vmatmul.mubr.bf16.gmra.mrb[0].mxu0 %v3026
        %v3217 = vpop.f32.mrb[0].mxu0
        %v3218 = vadd.f32 0.0, %v3217
        %v3219 = vpop.f32.mrb[0].mxu0
        %v3220 = vadd.f32 0.0, %v3219
        %v3221 = vpop.f32.mrb[0].mxu0
        %v3222 = vadd.f32 0.0, %v3221
        %v3223 = vpop.f32.mrb[0].mxu0
        %v3224 = vadd.f32 0.0, %v3223
        %3225 = vmatprep.mubr.bf16.mxu0 0
        %3226 = vmatmul.mubr.bf16.gmra.mrb[0].mxu0 %v3027
        %v3227 = vpop.f32.mrb[0].mxu0
        %v3228 = vadd.f32 0.0, %v3227
        %v3229 = vpop.f32.mrb[0].mxu0
        %v3230 = vadd.f32 0.0, %v3229
        %v3231 = vpop.f32.mrb[0].mxu0
        %v3232 = vadd.f32 0.0, %v3231
        %v3233 = vpop.f32.mrb[0].mxu0
        %v3234 = vadd.f32 0.0, %v3233
        %3235 = vmatprep.mubr.bf16.mxu0 0
        %3236 = vmatmul.mubr.bf16.gmra.mrb[0].mxu0 %v3028
        %v3237 = vpop.f32.mrb[0].mxu0
        %v3238 = vadd.f32 0.0, %v3237
        %v3239 = vpop.f32.mrb[0].mxu0
        %v3240 = vadd.f32 0.0, %v3239
        %v3241 = vpop.f32.mrb[0].mxu0
        %v3242 = vadd.f32 0.0, %v3241
        %v3243 = vpop.f32.mrb[0].mxu0
        %v3244 = vadd.f32 0.0, %v3243
        %3245 = vmatprep.mubr.bf16.mxu0 0
        %3246 = vmatmul.mubr.bf16.gmra.mrb[0].mxu0 %v3029
        %v3247 = vpop.f32.mrb[0].mxu0
        %v3248 = vadd.f32 0.0, %v3247
        %v3249 = vpop.f32.mrb[0].mxu0
        %v3250 = vadd.f32 0.0, %v3249
        %v3251 = vpop.f32.mrb[0].mxu0
        %v3252 = vadd.f32 0.0, %v3251
        %v3253 = vpop.f32.mrb[0].mxu0
        %v3254 = vadd.f32 0.0, %v3253
        %3255 = vdwg.mxu0
        %v3257 = vsel %vm1311, %v3014, 0
        %v3260 = vsel %vm1311, %v3015, 0
        %v3263 = vsel %vm1311, %v3016, 0
        %v3266 = vsel %vm1311, %v3017, 0
        %v3269 = vsel %vm1311, %v3018, 0
        %v3272 = vsel %vm1311, %v3019, 0
        %v3275 = vsel %vm1311, %v3020, 0
        %v3278 = vsel %vm1311, %v3021, 0
        %3280 = vmatprep.subr.bf16.mxu0 %v788
        %3281 = vmatpush1.bf16.msra.mxu0 %v787
        %3282 = vmatprep.subr.bf16.mxu0 %v792
        %3283 = vmatpush1.bf16.msra.mxu0 %v791
        %3284 = vmatprep.subr.bf16.mxu0 %v796
        %3285 = vmatpush1.bf16.msra.mxu0 %v795
        %3286 = vmatprep.subr.bf16.mxu0 %v800
        %3287 = vmatpush1.bf16.msra.mxu0 %v799
        %3288 = vmatprep.subr.bf16.mxu0 0
        %3289 = vmatpush1.bf16.msra.mxu0 0
        %3290 = vmatprep.subr.bf16.mxu0 0
        %3291 = vmatpush1.bf16.msra.mxu0 0
        %3292 = vmatprep.subr.bf16.mxu0 0
        %3293 = vmatpush1.bf16.msra.mxu0 0
        %3294 = vmatprep.subr.bf16.mxu0 0
        %3295 = vmatpush1.bf16.msra.mxu0 0
        %3296 = vmatprep.subr.bf16.mxu0 0
        %3297 = vmatpush1.bf16.msra.mxu0 0
        %3298 = vmatprep.subr.bf16.mxu0 0
        %3299 = vmatpush1.bf16.msra.mxu0 0
        %3300 = vmatprep.subr.bf16.mxu0 0
        %3301 = vmatpush1.bf16.msra.mxu0 0
        %3302 = vmatprep.subr.bf16.mxu0 0
        %3303 = vmatpush1.bf16.msra.mxu0 0
        %3304 = vmatprep.subr.bf16.mxu0 0
        %3305 = vmatpush1.bf16.msra.mxu0 0
        %3306 = vmatprep.subr.bf16.mxu0 0
        %3307 = vmatpush1.bf16.msra.mxu0 0
        %3308 = vmatprep.subr.bf16.mxu0 0
        %3309 = vmatpush1.bf16.msra.mxu0 0
        %3310 = vmatprep.subr.bf16.mxu0 0
        %3311 = vmatpush1.bf16.msra.mxu0 0
        %3312 = vmatprep.mubr.bf16.mxu0 0
        %3313 = vmatmul.mubr.bf16.gmra.mrb[0].mxu0 %v3257
        %v3314 = vpop.f32.mrb[0].mxu0
        %v3315 = vadd.f32 %v3065, %v3314
        %v3316 = vpop.f32.mrb[0].mxu0
        %v3317 = vadd.f32 %v3067, %v3316
        %v3318 = vpop.f32.mrb[0].mxu0
        %v3319 = vadd.f32 %v3069, %v3318
        %v3320 = vpop.f32.mrb[0].mxu0
        %v3321 = vadd.f32 %v3071, %v3320
        %3322 = vmatprep.mubr.bf16.mxu0 0
        %3323 = vmatmul.mubr.bf16.gmra.mrb[0].mxu0 %v3260
        %v3324 = vpop.f32.mrb[0].mxu0
        %v3325 = vadd.f32 %v3075, %v3324
        %v3326 = vpop.f32.mrb[0].mxu0
        %v3327 = vadd.f32 %v3077, %v3326
        %v3328 = vpop.f32.mrb[0].mxu0
        %v3329 = vadd.f32 %v3079, %v3328
        %v3330 = vpop.f32.mrb[0].mxu0
        %v3331 = vadd.f32 %v3081, %v3330
        %3332 = vmatprep.mubr.bf16.mxu0 0
        %3333 = vmatmul.mubr.bf16.gmra.mrb[0].mxu0 %v3263
        %v3334 = vpop.f32.mrb[0].mxu0
        %v3335 = vadd.f32 %v3085, %v3334
        %v3336 = vpop.f32.mrb[0].mxu0
        %v3337 = vadd.f32 %v3087, %v3336
        %v3338 = vpop.f32.mrb[0].mxu0
        %v3339 = vadd.f32 %v3089, %v3338
        %v3340 = vpop.f32.mrb[0].mxu0
        %v3341 = vadd.f32 %v3091, %v3340
        %3342 = vmatprep.mubr.bf16.mxu0 0
        %3343 = vmatmul.mubr.bf16.gmra.mrb[0].mxu0 %v3266
        %v3344 = vpop.f32.mrb[0].mxu0
        %v3345 = vadd.f32 %v3095, %v3344
        %v3346 = vpop.f32.mrb[0].mxu0
        %v3347 = vadd.f32 %v3097, %v3346
        %v3348 = vpop.f32.mrb[0].mxu0
        %v3349 = vadd.f32 %v3099, %v3348
        %v3350 = vpop.f32.mrb[0].mxu0
        %v3351 = vadd.f32 %v3101, %v3350
        %3352 = vmatprep.mubr.bf16.mxu0 0
        %3353 = vmatmul.mubr.bf16.gmra.mrb[0].mxu0 %v3269
        %v3354 = vpop.f32.mrb[0].mxu0
        %v3355 = vadd.f32 %v3105, %v3354
        %v3356 = vpop.f32.mrb[0].mxu0
        %v3357 = vadd.f32 %v3107, %v3356
        %v3358 = vpop.f32.mrb[0].mxu0
        %v3359 = vadd.f32 %v3109, %v3358
        %v3360 = vpop.f32.mrb[0].mxu0
        %v3361 = vadd.f32 %v3111, %v3360
        %3362 = vmatprep.mubr.bf16.mxu0 0
        %3363 = vmatmul.mubr.bf16.gmra.mrb[0].mxu0 %v3272
        %v3364 = vpop.f32.mrb[0].mxu0
        %v3365 = vadd.f32 %v3115, %v3364
        %v3366 = vpop.f32.mrb[0].mxu0
        %v3367 = vadd.f32 %v3117, %v3366
        %v3368 = vpop.f32.mrb[0].mxu0
        %v3369 = vadd.f32 %v3119, %v3368
        %v3370 = vpop.f32.mrb[0].mxu0
        %v3371 = vadd.f32 %v3121, %v3370
        %3372 = vmatprep.mubr.bf16.mxu0 0
        %3373 = vmatmul.mubr.bf16.gmra.mrb[0].mxu0 %v3275
        %v3374 = vpop.f32.mrb[0].mxu0
        %v3375 = vadd.f32 %v3125, %v3374
        %v3376 = vpop.f32.mrb[0].mxu0
        %v3377 = vadd.f32 %v3127, %v3376
        %v3378 = vpop.f32.mrb[0].mxu0
        %v3379 = vadd.f32 %v3129, %v3378
        %v3380 = vpop.f32.mrb[0].mxu0
        %v3381 = vadd.f32 %v3131, %v3380
        %3382 = vmatprep.mubr.bf16.mxu0 0
        %3383 = vmatmul.mubr.bf16.gmra.mrb[0].mxu0 %v3278
        %v3384 = vpop.f32.mrb[0].mxu0
        %v3385 = vadd.f32 %v3135, %v3384
        %v3386 = vpop.f32.mrb[0].mxu0
        %v3387 = vadd.f32 %v3137, %v3386
        %v3388 = vpop.f32.mrb[0].mxu0
        %v3389 = vadd.f32 %v3139, %v3388
        %v3390 = vpop.f32.mrb[0].mxu0
        %v3391 = vadd.f32 %v3141, %v3390
        %3392 = vdwg.mxu0
        %3393 = vmatprep.subr.bf16.mxu0 %v790
        %3394 = vmatpush1.bf16.msra.mxu0 %v789
        %3395 = vmatprep.subr.bf16.mxu0 %v794
        %3396 = vmatpush1.bf16.msra.mxu0 %v793
        %3397 = vmatprep.subr.bf16.mxu0 %v798
        %3398 = vmatpush1.bf16.msra.mxu0 %v797
        %3399 = vmatprep.subr.bf16.mxu0 %v802
        %3400 = vmatpush1.bf16.msra.mxu0 %v801
        %3401 = vmatprep.subr.bf16.mxu0 0
        %3402 = vmatpush1.bf16.msra.mxu0 0
        %3403 = vmatprep.subr.bf16.mxu0 0
        %3404 = vmatpush1.bf16.msra.mxu0 0
        %3405 = vmatprep.subr.bf16.mxu0 0
        %3406 = vmatpush1.bf16.msra.mxu0 0
        %3407 = vmatprep.subr.bf16.mxu0 0
        %3408 = vmatpush1.bf16.msra.mxu0 0
        %3409 = vmatprep.subr.bf16.mxu0 0
        %3410 = vmatpush1.bf16.msra.mxu0 0
        %3411 = vmatprep.subr.bf16.mxu0 0
        %3412 = vmatpush1.bf16.msra.mxu0 0
        %3413 = vmatprep.subr.bf16.mxu0 0
        %3414 = vmatpush1.bf16.msra.mxu0 0
        %3415 = vmatprep.subr.bf16.mxu0 0
        %3416 = vmatpush1.bf16.msra.mxu0 0
        %3417 = vmatprep.subr.bf16.mxu0 0
        %3418 = vmatpush1.bf16.msra.mxu0 0
        %3419 = vmatprep.subr.bf16.mxu0 0
        %3420 = vmatpush1.bf16.msra.mxu0 0
        %3421 = vmatprep.subr.bf16.mxu0 0
        %3422 = vmatpush1.bf16.msra.mxu0 0
        %3423 = vmatprep.subr.bf16.mxu0 0
        %3424 = vmatpush1.bf16.msra.mxu0 0
        %3425 = vmatprep.mubr.bf16.mxu0 0
        %3426 = vmatmul.mubr.bf16.gmra.mrb[0].mxu0 %v3257
        %v3427 = vpop.f32.mrb[0].mxu0
        %v3428 = vadd.f32 %v3178, %v3427
        %v3429 = vpop.f32.mrb[0].mxu0
        %v3430 = vadd.f32 %v3180, %v3429
        %v3431 = vpop.f32.mrb[0].mxu0
        %v3432 = vadd.f32 %v3182, %v3431
        %v3433 = vpop.f32.mrb[0].mxu0
        %v3434 = vadd.f32 %v3184, %v3433
        %3435 = vmatprep.mubr.bf16.mxu0 0
        %3436 = vmatmul.mubr.bf16.gmra.mrb[0].mxu0 %v3260
        %v3437 = vpop.f32.mrb[0].mxu0
        %v3438 = vadd.f32 %v3188, %v3437
        %v3439 = vpop.f32.mrb[0].mxu0
        %v3440 = vadd.f32 %v3190, %v3439
        %v3441 = vpop.f32.mrb[0].mxu0
        %v3442 = vadd.f32 %v3192, %v3441
        %v3443 = vpop.f32.mrb[0].mxu0
        %v3444 = vadd.f32 %v3194, %v3443
        %3445 = vmatprep.mubr.bf16.mxu0 0
        %3446 = vmatmul.mubr.bf16.gmra.mrb[0].mxu0 %v3263
        %v3447 = vpop.f32.mrb[0].mxu0
        %v3448 = vadd.f32 %v3198, %v3447
        %v3449 = vpop.f32.mrb[0].mxu0
        %v3450 = vadd.f32 %v3200, %v3449
        %v3451 = vpop.f32.mrb[0].mxu0
        %v3452 = vadd.f32 %v3202, %v3451
        %v3453 = vpop.f32.mrb[0].mxu0
        %v3454 = vadd.f32 %v3204, %v3453
        %3455 = vmatprep.mubr.bf16.mxu0 0
        %3456 = vmatmul.mubr.bf16.gmra.mrb[0].mxu0 %v3266
        %v3457 = vpop.f32.mrb[0].mxu0
        %v3458 = vadd.f32 %v3208, %v3457
        %v3459 = vpop.f32.mrb[0].mxu0
        %v3460 = vadd.f32 %v3210, %v3459
        %v3461 = vpop.f32.mrb[0].mxu0
        %v3462 = vadd.f32 %v3212, %v3461
        %v3463 = vpop.f32.mrb[0].mxu0
        %v3464 = vadd.f32 %v3214, %v3463
        %3465 = vmatprep.mubr.bf16.mxu0 0
        %3466 = vmatmul.mubr.bf16.gmra.mrb[0].mxu0 %v3269
        %v3467 = vpop.f32.mrb[0].mxu0
        %v3468 = vadd.f32 %v3218, %v3467
        %v3469 = vpop.f32.mrb[0].mxu0
        %v3470 = vadd.f32 %v3220, %v3469
        %v3471 = vpop.f32.mrb[0].mxu0
        %v3472 = vadd.f32 %v3222, %v3471
        %v3473 = vpop.f32.mrb[0].mxu0
        %v3474 = vadd.f32 %v3224, %v3473
        %3475 = vmatprep.mubr.bf16.mxu0 0
        %3476 = vmatmul.mubr.bf16.gmra.mrb[0].mxu0 %v3272
        %v3477 = vpop.f32.mrb[0].mxu0
        %v3478 = vadd.f32 %v3228, %v3477
        %v3479 = vpop.f32.mrb[0].mxu0
        %v3480 = vadd.f32 %v3230, %v3479
        %v3481 = vpop.f32.mrb[0].mxu0
        %v3482 = vadd.f32 %v3232, %v3481
        %v3483 = vpop.f32.mrb[0].mxu0
        %v3484 = vadd.f32 %v3234, %v3483
        %3485 = vmatprep.mubr.bf16.mxu0 0
        %3486 = vmatmul.mubr.bf16.gmra.mrb[0].mxu0 %v3275
        %v3487 = vpop.f32.mrb[0].mxu0
        %v3488 = vadd.f32 %v3238, %v3487
        %v3489 = vpop.f32.mrb[0].mxu0
        %v3490 = vadd.f32 %v3240, %v3489
        %v3491 = vpop.f32.mrb[0].mxu0
        %v3492 = vadd.f32 %v3242, %v3491
        %v3493 = vpop.f32.mrb[0].mxu0
        %v3494 = vadd.f32 %v3244, %v3493
        %3495 = vmatprep.mubr.bf16.mxu0 0
        %3496 = vmatmul.mubr.bf16.gmra.mrb[0].mxu0 %v3278
        %v3497 = vpop.f32.mrb[0].mxu0
        %v3498 = vadd.f32 %v3248, %v3497
        %v3499 = vpop.f32.mrb[0].mxu0
        %v3500 = vadd.f32 %v3250, %v3499
        %v3501 = vpop.f32.mrb[0].mxu0
        %v3502 = vadd.f32 %v3252, %v3501
        %v3503 = vpop.f32.mrb[0].mxu0
        %v3504 = vadd.f32 %v3254, %v3503
        %3505 = vdwg.mxu0
        %v3506 = vxor.u32 %v3315, 2147483648
        %v3507 = vxor.u32 %v3319, 2147483648
        %v3508 = vxor.u32 %v3325, 2147483648
        %v3509 = vxor.u32 %v3329, 2147483648
        %v3510 = vxor.u32 %v3335, 2147483648
        %v3511 = vxor.u32 %v3339, 2147483648
        %v3512 = vxor.u32 %v3345, 2147483648
        %v3513 = vxor.u32 %v3349, 2147483648
        %v3514 = vxor.u32 %v3355, 2147483648
        %v3515 = vxor.u32 %v3359, 2147483648
        %v3516 = vxor.u32 %v3365, 2147483648
        %v3517 = vxor.u32 %v3369, 2147483648
        %v3518 = vxor.u32 %v3375, 2147483648
        %v3519 = vxor.u32 %v3379, 2147483648
        %v3520 = vxor.u32 %v3385, 2147483648
        %v3521 = vxor.u32 %v3389, 2147483648
        %v3522 = vmul.f32 %v3506, 1.442695
        %v3523 = vpow.pop %v3522
        %v3524 = vmul.f32 %v3507, 1.442695
        %v3525 = vpow.pop %v3524
        %v3526 = vmul.f32 %v3508, 1.442695
        %v3527 = vpow.pop %v3526
        %v3528 = vmul.f32 %v3509, 1.442695
        %v3529 = vpow.pop %v3528
        %v3530 = vmul.f32 %v3510, 1.442695
        %v3531 = vpow.pop %v3530
        %v3532 = vmul.f32 %v3511, 1.442695
        %v3533 = vpow.pop %v3532
        %v3534 = vmul.f32 %v3512, 1.442695
        %v3535 = vpow.pop %v3534
        %v3536 = vmul.f32 %v3513, 1.442695
        %v3537 = vpow.pop %v3536
        %v3538 = vmul.f32 %v3514, 1.442695
        %v3539 = vpow.pop %v3538
        %v3540 = vmul.f32 %v3515, 1.442695
        %v3541 = vpow.pop %v3540
        %v3542 = vmul.f32 %v3516, 1.442695
        %v3543 = vpow.pop %v3542
        %v3544 = vmul.f32 %v3517, 1.442695
        %v3545 = vpow.pop %v3544
        %v3546 = vmul.f32 %v3518, 1.442695
        %v3547 = vpow.pop %v3546
        %v3548 = vmul.f32 %v3519, 1.442695
        %v3549 = vpow.pop %v3548
        %v3550 = vmul.f32 %v3520, 1.442695
        %v3551 = vpow.pop %v3550
        %v3552 = vmul.f32 %v3521, 1.442695
        %v3553 = vpow.pop %v3552
        %v3554 = vadd.f32 %v3523, 1.0
        %v3555 = vadd.f32 %v3525, 1.0
        %v3556 = vadd.f32 %v3527, 1.0
        %v3557 = vadd.f32 %v3529, 1.0
        %v3558 = vadd.f32 %v3531, 1.0
        %v3559 = vadd.f32 %v3533, 1.0
        %v3560 = vadd.f32 %v3535, 1.0
        %v3561 = vadd.f32 %v3537, 1.0
        %v3562 = vadd.f32 %v3539, 1.0
        %v3563 = vadd.f32 %v3541, 1.0
        %v3564 = vadd.f32 %v3543, 1.0
        %v3565 = vadd.f32 %v3545, 1.0
        %v3566 = vadd.f32 %v3547, 1.0
        %v3567 = vadd.f32 %v3549, 1.0
        %v3568 = vadd.f32 %v3551, 1.0
        %v3569 = vadd.f32 %v3553, 1.0
        %v3570 = vrcp.pop %v3554
        %v3571 = vmul.f32 1.0, %v3570
        %v3572 = vrcp.pop %v3555
        %v3573 = vmul.f32 1.0, %v3572
        %v3574 = vrcp.pop %v3556
        %v3575 = vmul.f32 1.0, %v3574
        %v3576 = vrcp.pop %v3557
        %v3577 = vmul.f32 1.0, %v3576
        %v3578 = vrcp.pop %v3558
        %v3579 = vmul.f32 1.0, %v3578
        %v3580 = vrcp.pop %v3559
        %v3581 = vmul.f32 1.0, %v3580
        %v3582 = vrcp.pop %v3560
        %v3583 = vmul.f32 1.0, %v3582
        %v3584 = vrcp.pop %v3561
        %v3585 = vmul.f32 1.0, %v3584
        %v3586 = vrcp.pop %v3562
        %v3587 = vmul.f32 1.0, %v3586
        %v3588 = vrcp.pop %v3563
        %v3589 = vmul.f32 1.0, %v3588
        %v3590 = vrcp.pop %v3564
        %v3591 = vmul.f32 1.0, %v3590
        %v3592 = vrcp.pop %v3565
        %v3593 = vmul.f32 1.0, %v3592
        %v3594 = vrcp.pop %v3566
        %v3595 = vmul.f32 1.0, %v3594
        %v3596 = vrcp.pop %v3567
        %v3597 = vmul.f32 1.0, %v3596
        %v3598 = vrcp.pop %v3568
        %v3599 = vmul.f32 1.0, %v3598
        %v3600 = vrcp.pop %v3569
        %v3601 = vmul.f32 1.0, %v3600
        %v3602 = vxor.u32 %v3317, 2147483648
        %v3603 = vxor.u32 %v3321, 2147483648
        %v3604 = vxor.u32 %v3327, 2147483648
        %v3605 = vxor.u32 %v3331, 2147483648
        %v3606 = vxor.u32 %v3337, 2147483648
        %v3607 = vxor.u32 %v3341, 2147483648
        %v3608 = vxor.u32 %v3347, 2147483648
        %v3609 = vxor.u32 %v3351, 2147483648
        %v3610 = vxor.u32 %v3357, 2147483648
        %v3611 = vxor.u32 %v3361, 2147483648
        %v3612 = vxor.u32 %v3367, 2147483648
        %v3613 = vxor.u32 %v3371, 2147483648
        %v3614 = vxor.u32 %v3377, 2147483648
        %v3615 = vxor.u32 %v3381, 2147483648
        %v3616 = vxor.u32 %v3387, 2147483648
        %v3617 = vxor.u32 %v3391, 2147483648
        %v3618 = vmul.f32 %v3602, 1.442695
        %v3619 = vpow.pop %v3618
        %v3620 = vmul.f32 %v3603, 1.442695
        %v3621 = vpow.pop %v3620
        %v3622 = vmul.f32 %v3604, 1.442695
        %v3623 = vpow.pop %v3622
        %v3624 = vmul.f32 %v3605, 1.442695
        %v3625 = vpow.pop %v3624
        %v3626 = vmul.f32 %v3606, 1.442695
        %v3627 = vpow.pop %v3626
        %v3628 = vmul.f32 %v3607, 1.442695
        %v3629 = vpow.pop %v3628
        %v3630 = vmul.f32 %v3608, 1.442695
        %v3631 = vpow.pop %v3630
        %v3632 = vmul.f32 %v3609, 1.442695
        %v3633 = vpow.pop %v3632
        %v3634 = vmul.f32 %v3610, 1.442695
        %v3635 = vpow.pop %v3634
        %v3636 = vmul.f32 %v3611, 1.442695
        %v3637 = vpow.pop %v3636
        %v3638 = vmul.f32 %v3612, 1.442695
        %v3639 = vpow.pop %v3638
        %v3640 = vmul.f32 %v3613, 1.442695
        %v3641 = vpow.pop %v3640
        %v3642 = vmul.f32 %v3614, 1.442695
        %v3643 = vpow.pop %v3642
        %v3644 = vmul.f32 %v3615, 1.442695
        %v3645 = vpow.pop %v3644
        %v3646 = vmul.f32 %v3616, 1.442695
        %v3647 = vpow.pop %v3646
        %v3648 = vmul.f32 %v3617, 1.442695
        %v3649 = vpow.pop %v3648
        %v3650 = vadd.f32 %v3619, 1.0
        %v3651 = vadd.f32 %v3621, 1.0
        %v3652 = vadd.f32 %v3623, 1.0
        %v3653 = vadd.f32 %v3625, 1.0
        %v3654 = vadd.f32 %v3627, 1.0
        %v3655 = vadd.f32 %v3629, 1.0
        %v3656 = vadd.f32 %v3631, 1.0
        %v3657 = vadd.f32 %v3633, 1.0
        %v3658 = vadd.f32 %v3635, 1.0
        %v3659 = vadd.f32 %v3637, 1.0
        %v3660 = vadd.f32 %v3639, 1.0
        %v3661 = vadd.f32 %v3641, 1.0
        %v3662 = vadd.f32 %v3643, 1.0
        %v3663 = vadd.f32 %v3645, 1.0
        %v3664 = vadd.f32 %v3647, 1.0
        %v3665 = vadd.f32 %v3649, 1.0
        %v3666 = vrcp.pop %v3650
        %v3667 = vmul.f32 1.0, %v3666
        %v3668 = vrcp.pop %v3651
        %v3669 = vmul.f32 1.0, %v3668
        %v3670 = vrcp.pop %v3652
        %v3671 = vmul.f32 1.0, %v3670
        %v3672 = vrcp.pop %v3653
        %v3673 = vmul.f32 1.0, %v3672
        %v3674 = vrcp.pop %v3654
        %v3675 = vmul.f32 1.0, %v3674
        %v3676 = vrcp.pop %v3655
        %v3677 = vmul.f32 1.0, %v3676
        %v3678 = vrcp.pop %v3656
        %v3679 = vmul.f32 1.0, %v3678
        %v3680 = vrcp.pop %v3657
        %v3681 = vmul.f32 1.0, %v3680
        %v3682 = vrcp.pop %v3658
        %v3683 = vmul.f32 1.0, %v3682
        %v3684 = vrcp.pop %v3659
        %v3685 = vmul.f32 1.0, %v3684
        %v3686 = vrcp.pop %v3660
        %v3687 = vmul.f32 1.0, %v3686
        %v3688 = vrcp.pop %v3661
        %v3689 = vmul.f32 1.0, %v3688
        %v3690 = vrcp.pop %v3662
        %v3691 = vmul.f32 1.0, %v3690
        %v3692 = vrcp.pop %v3663
        %v3693 = vmul.f32 1.0, %v3692
        %v3694 = vrcp.pop %v3664
        %v3695 = vmul.f32 1.0, %v3694
        %v3696 = vrcp.pop %v3665
        %v3697 = vmul.f32 1.0, %v3696
        %v3698 = vtanh.pop %v3428
        %v3699 = vtanh.pop %v3432
        %v3700 = vtanh.pop %v3438
        %v3701 = vtanh.pop %v3442
        %v3702 = vtanh.pop %v3448
        %v3703 = vtanh.pop %v3452
        %v3704 = vtanh.pop %v3458
        %v3705 = vtanh.pop %v3462
        %v3706 = vtanh.pop %v3468
        %v3707 = vtanh.pop %v3472
        %v3708 = vtanh.pop %v3478
        %v3709 = vtanh.pop %v3482
        %v3710 = vtanh.pop %v3488
        %v3711 = vtanh.pop %v3492
        %v3712 = vtanh.pop %v3498
        %v3713 = vtanh.pop %v3502
        %v3714 = vxor.u32 %v3430, 2147483648
        %v3715 = vxor.u32 %v3434, 2147483648
        %v3716 = vxor.u32 %v3440, 2147483648
        %v3717 = vxor.u32 %v3444, 2147483648
        %v3718 = vxor.u32 %v3450, 2147483648
        %v3719 = vxor.u32 %v3454, 2147483648
        %v3720 = vxor.u32 %v3460, 2147483648
        %v3721 = vxor.u32 %v3464, 2147483648
        %v3722 = vxor.u32 %v3470, 2147483648
        %v3723 = vxor.u32 %v3474, 2147483648
        %v3724 = vxor.u32 %v3480, 2147483648
        %v3725 = vxor.u32 %v3484, 2147483648
        %v3726 = vxor.u32 %v3490, 2147483648
        %v3727 = vxor.u32 %v3494, 2147483648
        %v3728 = vxor.u32 %v3500, 2147483648
        %v3729 = vxor.u32 %v3504, 2147483648
        %v3730 = vmul.f32 %v3714, 1.442695
        %v3731 = vpow.pop %v3730
        %v3732 = vmul.f32 %v3715, 1.442695
        %v3733 = vpow.pop %v3732
        %v3734 = vmul.f32 %v3716, 1.442695
        %v3735 = vpow.pop %v3734
        %v3736 = vmul.f32 %v3717, 1.442695
        %v3737 = vpow.pop %v3736
        %v3738 = vmul.f32 %v3718, 1.442695
        %v3739 = vpow.pop %v3738
        %v3740 = vmul.f32 %v3719, 1.442695
        %v3741 = vpow.pop %v3740
        %v3742 = vmul.f32 %v3720, 1.442695
        %v3743 = vpow.pop %v3742
        %v3744 = vmul.f32 %v3721, 1.442695
        %v3745 = vpow.pop %v3744
        %v3746 = vmul.f32 %v3722, 1.442695
        %v3747 = vpow.pop %v3746
        %v3748 = vmul.f32 %v3723, 1.442695
        %v3749 = vpow.pop %v3748
        %v3750 = vmul.f32 %v3724, 1.442695
        %v3751 = vpow.pop %v3750
        %v3752 = vmul.f32 %v3725, 1.442695
        %v3753 = vpow.pop %v3752
        %v3754 = vmul.f32 %v3726, 1.442695
        %v3755 = vpow.pop %v3754
        %v3756 = vmul.f32 %v3727, 1.442695
        %v3757 = vpow.pop %v3756
        %v3758 = vmul.f32 %v3728, 1.442695
        %v3759 = vpow.pop %v3758
        %v3760 = vmul.f32 %v3729, 1.442695
        %v3761 = vpow.pop %v3760
        %v3762 = vadd.f32 %v3731, 1.0
        %v3763 = vadd.f32 %v3733, 1.0
        %v3764 = vadd.f32 %v3735, 1.0
        %v3765 = vadd.f32 %v3737, 1.0
        %v3766 = vadd.f32 %v3739, 1.0
        %v3767 = vadd.f32 %v3741, 1.0
        %v3768 = vadd.f32 %v3743, 1.0
        %v3769 = vadd.f32 %v3745, 1.0
        %v3770 = vadd.f32 %v3747, 1.0
        %v3771 = vadd.f32 %v3749, 1.0
        %v3772 = vadd.f32 %v3751, 1.0
        %v3773 = vadd.f32 %v3753, 1.0
        %v3774 = vadd.f32 %v3755, 1.0
        %v3775 = vadd.f32 %v3757, 1.0
        %v3776 = vadd.f32 %v3759, 1.0
        %v3777 = vadd.f32 %v3761, 1.0
        %v3778 = vrcp.pop %v3762
        %v3779 = vmul.f32 1.0, %v3778
        %v3780 = vrcp.pop %v3763
        %v3781 = vmul.f32 1.0, %v3780
        %v3782 = vrcp.pop %v3764
        %v3783 = vmul.f32 1.0, %v3782
        %v3784 = vrcp.pop %v3765
        %v3785 = vmul.f32 1.0, %v3784
        %v3786 = vrcp.pop %v3766
        %v3787 = vmul.f32 1.0, %v3786
        %v3788 = vrcp.pop %v3767
        %v3789 = vmul.f32 1.0, %v3788
        %v3790 = vrcp.pop %v3768
        %v3791 = vmul.f32 1.0, %v3790
        %v3792 = vrcp.pop %v3769
        %v3793 = vmul.f32 1.0, %v3792
        %v3794 = vrcp.pop %v3770
        %v3795 = vmul.f32 1.0, %v3794
        %v3796 = vrcp.pop %v3771
        %v3797 = vmul.f32 1.0, %v3796
        %v3798 = vrcp.pop %v3772
        %v3799 = vmul.f32 1.0, %v3798
        %v3800 = vrcp.pop %v3773
        %v3801 = vmul.f32 1.0, %v3800
        %v3802 = vrcp.pop %v3774
        %v3803 = vmul.f32 1.0, %v3802
        %v3804 = vrcp.pop %v3775
        %v3805 = vmul.f32 1.0, %v3804
        %v3806 = vrcp.pop %v3776
        %v3807 = vmul.f32 1.0, %v3806
        %v3808 = vrcp.pop %v3777
        %v3809 = vmul.f32 1.0, %v3808
        %v3810 = vmul.f32 %v3667, %v2870
        %v3811 = vmul.f32 %v3669, %v2871
        %v3812 = vmul.f32 %v3671, %v2872
        %v3813 = vmul.f32 %v3673, %v2873
        %v3814 = vmul.f32 %v3675, %v2874
        %v3815 = vmul.f32 %v3677, %v2875
        %v3816 = vmul.f32 %v3679, %v2876
        %v3817 = vmul.f32 %v3681, %v2877
        %v3818 = vmul.f32 %v3683, %v2878
        %v3819 = vmul.f32 %v3685, %v2879
        %v3820 = vmul.f32 %v3687, %v2880
        %v3821 = vmul.f32 %v3689, %v2881
        %v3822 = vmul.f32 %v3691, %v2882
        %v3823 = vmul.f32 %v3693, %v2883
        %v3824 = vmul.f32 %v3695, %v2884
        %v3825 = vmul.f32 %v3697, %v2885
        %v3826 = vmul.f32 %v3571, %v3698
        %v3827 = vmul.f32 %v3573, %v3699
        %v3828 = vmul.f32 %v3575, %v3700
        %v3829 = vmul.f32 %v3577, %v3701
        %v3830 = vmul.f32 %v3579, %v3702
        %v3831 = vmul.f32 %v3581, %v3703
        %v3832 = vmul.f32 %v3583, %v3704
        %v3833 = vmul.f32 %v3585, %v3705
        %v3834 = vmul.f32 %v3587, %v3706
        %v3835 = vmul.f32 %v3589, %v3707
        %v3836 = vmul.f32 %v3591, %v3708
        %v3837 = vmul.f32 %v3593, %v3709
        %v3838 = vmul.f32 %v3595, %v3710
        %v3839 = vmul.f32 %v3597, %v3711
        %v3840 = vmul.f32 %v3599, %v3712
        %v3841 = vmul.f32 %v3601, %v3713
        %v3842 = vadd.f32 %v3810, %v3826
        %v3843 = vadd.f32 %v3811, %v3827
        %v3844 = vadd.f32 %v3812, %v3828
        %v3845 = vadd.f32 %v3813, %v3829
        %v3846 = vadd.f32 %v3814, %v3830
        %v3847 = vadd.f32 %v3815, %v3831
        %v3848 = vadd.f32 %v3816, %v3832
        %v3849 = vadd.f32 %v3817, %v3833
        %v3850 = vadd.f32 %v3818, %v3834
        %v3851 = vadd.f32 %v3819, %v3835
        %v3852 = vadd.f32 %v3820, %v3836
        %v3853 = vadd.f32 %v3821, %v3837
        %v3854 = vadd.f32 %v3822, %v3838
        %v3855 = vadd.f32 %v3823, %v3839
        %v3856 = vadd.f32 %v3824, %v3840
        %v3857 = vadd.f32 %v3825, %v3841
        %v3858 = vtanh.pop %v3842
        %v3859 = vtanh.pop %v3843
        %v3860 = vtanh.pop %v3844
        %v3861 = vtanh.pop %v3845
        %v3862 = vtanh.pop %v3846
        %v3863 = vtanh.pop %v3847
        %v3864 = vtanh.pop %v3848
        %v3865 = vtanh.pop %v3849
        %v3866 = vtanh.pop %v3850
        %v3867 = vtanh.pop %v3851
        %v3868 = vtanh.pop %v3852
        %v3869 = vtanh.pop %v3853
        %v3870 = vtanh.pop %v3854
        %v3871 = vtanh.pop %v3855
        %v3872 = vtanh.pop %v3856
        %v3873 = vtanh.pop %v3857
        %v3874 = vmul.f32 %v3779, %v3858
        %v3875 = vmul.f32 %v3781, %v3859
        %v3876 = vmul.f32 %v3783, %v3860
        %v3877 = vmul.f32 %v3785, %v3861
        %v3878 = vmul.f32 %v3787, %v3862
        %v3879 = vmul.f32 %v3789, %v3863
        %v3880 = vmul.f32 %v3791, %v3864
        %v3881 = vmul.f32 %v3793, %v3865
        %v3882 = vmul.f32 %v3795, %v3866
        %v3883 = vmul.f32 %v3797, %v3867
        %v3884 = vmul.f32 %v3799, %v3868
        %v3885 = vmul.f32 %v3801, %v3869
        %v3886 = vmul.f32 %v3803, %v3870
        %v3887 = vmul.f32 %v3805, %v3871
        %v3888 = vmul.f32 %v3807, %v3872
        %v3889 = vmul.f32 %v3809, %v3873
        %3890 = vset.pattern.permute.xlu0 3
        %3891 = vperm.xlu0 %3890, %v805
        %v3892 = vpop.permute.xlu0 %3891
        %3893 = vset.pattern.permute.xlu0 3
        %3894 = vperm.xlu0 %3893, %v806
        %v3895 = vpop.permute.xlu0 %3894
        %3896 = vset.pattern.permute.xlu0 3
        %3897 = vperm.xlu0 %3896, %v807
        %v3898 = vpop.permute.xlu0 %3897
        %3899 = vset.pattern.permute.xlu0 3
        %3900 = vperm.xlu0 %3899, %v808
        %v3901 = vpop.permute.xlu0 %3900
        %3902 = vset.pattern.permute.xlu0 3
        %3903 = vperm.xlu0 %3902, %v809
        %v3904 = vpop.permute.xlu0 %3903
        %3905 = vset.pattern.permute.xlu0 3
        %3906 = vperm.xlu0 %3905, %v810
        %v3907 = vpop.permute.xlu0 %3906
        %3908 = vset.pattern.permute.xlu0 3
        %3909 = vperm.xlu0 %3908, %v811
        %v3910 = vpop.permute.xlu0 %3909
        %3911 = vset.pattern.permute.xlu0 3
        %3912 = vperm.xlu0 %3911, %v812
        %v3913 = vpop.permute.xlu0 %3912
        %3914 = vset.pattern.permute.xlu0 3
        %3915 = vperm.xlu0 %3914, %v813
        %v3916 = vpop.permute.xlu0 %3915
        %3917 = vset.pattern.permute.xlu0 3
        %3918 = vperm.xlu0 %3917, %v814
        %v3919 = vpop.permute.xlu0 %3918
        %3920 = vset.pattern.permute.xlu0 3
        %3921 = vperm.xlu0 %3920, %v815
        %v3922 = vpop.permute.xlu0 %3921
        %3923 = vset.pattern.permute.xlu0 3
        %3924 = vperm.xlu0 %3923, %v816
        %v3925 = vpop.permute.xlu0 %3924
        %3926 = vset.pattern.permute.xlu0 3
        %3927 = vperm.xlu0 %3926, %v817
        %v3928 = vpop.permute.xlu0 %3927
        %3929 = vset.pattern.permute.xlu0 3
        %3930 = vperm.xlu0 %3929, %v818
        %v3931 = vpop.permute.xlu0 %3930
        %3932 = vset.pattern.permute.xlu0 3
        %3933 = vperm.xlu0 %3932, %v819
        %v3934 = vpop.permute.xlu0 %3933
        %3935 = vset.pattern.permute.xlu0 3
        %3936 = vperm.xlu0 %3935, %v820
        %v3937 = vpop.permute.xlu0 %3936
        %vm3938 = vcmp.eq.s32.totalorder %v804, %v3892
        %vm3939 = vcmp.eq.s32.totalorder %v804, %v3895
        %vm3940 = vcmp.eq.s32.totalorder %v804, %v3898
        %vm3941 = vcmp.eq.s32.totalorder %v804, %v3901
        %vm3942 = vcmp.eq.s32.totalorder %v804, %v3904
        %vm3943 = vcmp.eq.s32.totalorder %v804, %v3907
        %vm3944 = vcmp.eq.s32.totalorder %v804, %v3910
        %vm3945 = vcmp.eq.s32.totalorder %v804, %v3913
        %vm3946 = vcmp.eq.s32.totalorder %v804, %v3916
        %vm3947 = vcmp.eq.s32.totalorder %v804, %v3919
        %vm3948 = vcmp.eq.s32.totalorder %v804, %v3922
        %vm3949 = vcmp.eq.s32.totalorder %v804, %v3925
        %vm3950 = vcmp.eq.s32.totalorder %v804, %v3928
        %vm3951 = vcmp.eq.s32.totalorder %v804, %v3931
        %vm3952 = vcmp.eq.s32.totalorder %v804, %v3934
        %vm3953 = vcmp.eq.s32.totalorder %v804, %v3937
        %v3954 = vsel %vm3938, 1, 0
        %v3955 = vsel %vm3939, 1, 0
        %v3956 = vsel %vm3940, 1, 0
        %v3957 = vsel %vm3941, 1, 0
        %v3958 = vsel %vm3942, 1, 0
        %v3959 = vsel %vm3943, 1, 0
        %v3960 = vsel %vm3944, 1, 0
        %v3961 = vsel %vm3945, 1, 0
        %v3962 = vsel %vm3946, 1, 0
        %v3963 = vsel %vm3947, 1, 0
        %v3964 = vsel %vm3948, 1, 0
        %v3965 = vsel %vm3949, 1, 0
        %v3966 = vsel %vm3950, 1, 0
        %v3967 = vsel %vm3951, 1, 0
        %v3968 = vsel %vm3952, 1, 0
        %v3969 = vsel %vm3953, 1, 0
        %v3970 = vcvt.s32.f32 %v3954
        %v3971 = vcvt.s32.f32 %v3955
        %v3972 = vcvt.s32.f32 %v3956
        %v3973 = vcvt.s32.f32 %v3957
        %v3974 = vcvt.s32.f32 %v3958
        %v3975 = vcvt.s32.f32 %v3959
        %v3976 = vcvt.s32.f32 %v3960
        %v3977 = vcvt.s32.f32 %v3961
        %v3978 = vcvt.s32.f32 %v3962
        %v3979 = vcvt.s32.f32 %v3963
        %v3980 = vcvt.s32.f32 %v3964
        %v3981 = vcvt.s32.f32 %v3965
        %v3982 = vcvt.s32.f32 %v3966
        %v3983 = vcvt.s32.f32 %v3967
        %v3984 = vcvt.s32.f32 %v3968
        %v3985 = vcvt.s32.f32 %v3969
        %v3986 = vpack.c.bf16 %v3971, %v3970
        %v3987 = vpack.c.bf16 %v3973, %v3972
        %v3988 = vpack.c.bf16 %v3975, %v3974
        %v3989 = vpack.c.bf16 %v3977, %v3976
        %v3990 = vpack.c.bf16 %v3979, %v3978
        %v3991 = vpack.c.bf16 %v3981, %v3980
        %v3992 = vpack.c.bf16 %v3983, %v3982
        %v3993 = vpack.c.bf16 %v3985, %v3984
        %v3994 = vpack.c.bf16 %v3875, %v3874
        %v3995 = vpack.c.bf16 %v3877, %v3876
        %v3996 = vpack.c.bf16 %v3879, %v3878
        %v3997 = vpack.c.bf16 %v3881, %v3880
        %v3998 = vpack.c.bf16 %v3883, %v3882
        %v3999 = vpack.c.bf16 %v3885, %v3884
        %v4000 = vpack.c.bf16 %v3887, %v3886
        %v4001 = vpack.c.bf16 %v3889, %v3888
        %4002 = vmatprep.subr.bf16.mxu0 %v1022
        %4003 = vmatpush1.bf16.msra.mxu0 %v1021
        %4004 = vmatprep.subr.bf16.mxu0 %v1026
        %4005 = vmatpush1.bf16.msra.mxu0 %v1025
        %4006 = vmatprep.subr.bf16.mxu0 %v1030
        %4007 = vmatpush1.bf16.msra.mxu0 %v1029
        %4008 = vmatprep.subr.bf16.mxu0 %v1034
        %4009 = vmatpush1.bf16.msra.mxu0 %v1033
        %4010 = vmatprep.subr.bf16.mxu0 %v1038
        %4011 = vmatpush1.bf16.msra.mxu0 %v1037
        %4012 = vmatprep.subr.bf16.mxu0 %v1042
        %4013 = vmatpush1.bf16.msra.mxu0 %v1041
        %4014 = vmatprep.subr.bf16.mxu0 %v1046
        %4015 = vmatpush1.bf16.msra.mxu0 %v1045
        %4016 = vmatprep.subr.bf16.mxu0 %v1050
        %4017 = vmatpush1.bf16.msra.mxu0 %v1049
        %4018 = vmatprep.subr.bf16.mxu0 0
        %4019 = vmatpush1.bf16.msra.mxu0 0
        %4020 = vmatprep.subr.bf16.mxu0 0
        %4021 = vmatpush1.bf16.msra.mxu0 0
        %4022 = vmatprep.subr.bf16.mxu0 0
        %4023 = vmatpush1.bf16.msra.mxu0 0
        %4024 = vmatprep.subr.bf16.mxu0 0
        %4025 = vmatpush1.bf16.msra.mxu0 0
        %4026 = vmatprep.subr.bf16.mxu0 0
        %4027 = vmatpush1.bf16.msra.mxu0 0
        %4028 = vmatprep.subr.bf16.mxu0 0
        %4029 = vmatpush1.bf16.msra.mxu0 0
        %4030 = vmatprep.subr.bf16.mxu0 0
        %4031 = vmatpush1.bf16.msra.mxu0 0
        %4032 = vmatprep.subr.bf16.mxu0 0
        %4033 = vmatpush1.bf16.msra.mxu0 0
        %4034 = vmatprep.mubr.bf16.mxu0 0
        %4035 = vmatmul.mubr.bf16.gmra.mrb[0].mxu0 %v3994
        %v4036 = vpop.f32.mrb[0].mxu0
        %v4037 = vadd.f32 0.0, %v4036
        %v4038 = vpop.f32.mrb[0].mxu0
        %v4039 = vadd.f32 0.0, %v4038
        %v4040 = vpop.f32.mrb[0].mxu0
        %v4041 = vadd.f32 0.0, %v4040
        %v4042 = vpop.f32.mrb[0].mxu0
        %v4043 = vadd.f32 0.0, %v4042
        %4044 = vmatprep.mubr.bf16.mxu0 0
        %4045 = vmatmul.mubr.bf16.gmra.mrb[0].mxu0 %v3995
        %v4046 = vpop.f32.mrb[0].mxu0
        %v4047 = vadd.f32 0.0, %v4046
        %v4048 = vpop.f32.mrb[0].mxu0
        %v4049 = vadd.f32 0.0, %v4048
        %v4050 = vpop.f32.mrb[0].mxu0
        %v4051 = vadd.f32 0.0, %v4050
        %v4052 = vpop.f32.mrb[0].mxu0
        %v4053 = vadd.f32 0.0, %v4052
        %4054 = vmatprep.mubr.bf16.mxu0 0
        %4055 = vmatmul.mubr.bf16.gmra.mrb[0].mxu0 %v3996
        %v4056 = vpop.f32.mrb[0].mxu0
        %v4057 = vadd.f32 0.0, %v4056
        %v4058 = vpop.f32.mrb[0].mxu0
        %v4059 = vadd.f32 0.0, %v4058
        %v4060 = vpop.f32.mrb[0].mxu0
        %v4061 = vadd.f32 0.0, %v4060
        %v4062 = vpop.f32.mrb[0].mxu0
        %v4063 = vadd.f32 0.0, %v4062
        %4064 = vmatprep.mubr.bf16.mxu0 0
        %4065 = vmatmul.mubr.bf16.gmra.mrb[0].mxu0 %v3997
        %v4066 = vpop.f32.mrb[0].mxu0
        %v4067 = vadd.f32 0.0, %v4066
        %v4068 = vpop.f32.mrb[0].mxu0
        %v4069 = vadd.f32 0.0, %v4068
        %v4070 = vpop.f32.mrb[0].mxu0
        %v4071 = vadd.f32 0.0, %v4070
        %v4072 = vpop.f32.mrb[0].mxu0
        %v4073 = vadd.f32 0.0, %v4072
        %4074 = vmatprep.mubr.bf16.mxu0 0
        %4075 = vmatmul.mubr.bf16.gmra.mrb[0].mxu0 %v3998
        %v4076 = vpop.f32.mrb[0].mxu0
        %v4077 = vadd.f32 0.0, %v4076
        %v4078 = vpop.f32.mrb[0].mxu0
        %v4079 = vadd.f32 0.0, %v4078
        %v4080 = vpop.f32.mrb[0].mxu0
        %v4081 = vadd.f32 0.0, %v4080
        %v4082 = vpop.f32.mrb[0].mxu0
        %v4083 = vadd.f32 0.0, %v4082
        %4084 = vmatprep.mubr.bf16.mxu0 0
        %4085 = vmatmul.mubr.bf16.gmra.mrb[0].mxu0 %v3999
        %v4086 = vpop.f32.mrb[0].mxu0
        %v4087 = vadd.f32 0.0, %v4086
        %v4088 = vpop.f32.mrb[0].mxu0
        %v4089 = vadd.f32 0.0, %v4088
        %v4090 = vpop.f32.mrb[0].mxu0
        %v4091 = vadd.f32 0.0, %v4090
        %v4092 = vpop.f32.mrb[0].mxu0
        %v4093 = vadd.f32 0.0, %v4092
        %4094 = vmatprep.mubr.bf16.mxu0 0
        %4095 = vmatmul.mubr.bf16.gmra.mrb[0].mxu0 %v4000
        %v4096 = vpop.f32.mrb[0].mxu0
        %v4097 = vadd.f32 0.0, %v4096
        %v4098 = vpop.f32.mrb[0].mxu0
        %v4099 = vadd.f32 0.0, %v4098
        %v4100 = vpop.f32.mrb[0].mxu0
        %v4101 = vadd.f32 0.0, %v4100
        %v4102 = vpop.f32.mrb[0].mxu0
        %v4103 = vadd.f32 0.0, %v4102
        %4104 = vmatprep.mubr.bf16.mxu0 0
        %4105 = vmatmul.mubr.bf16.gmra.mrb[0].mxu0 %v4001
        %v4106 = vpop.f32.mrb[0].mxu0
        %v4107 = vadd.f32 0.0, %v4106
        %v4108 = vpop.f32.mrb[0].mxu0
        %v4109 = vadd.f32 0.0, %v4108
        %v4110 = vpop.f32.mrb[0].mxu0
        %v4111 = vadd.f32 0.0, %v4110
        %v4112 = vpop.f32.mrb[0].mxu0
        %v4113 = vadd.f32 0.0, %v4112
        %4114 = vdwg.mxu0
        %4115 = vmatprep.subr.bf16.mxu0 %v1024
        %4116 = vmatpush1.bf16.msra.mxu0 %v1023
        %4117 = vmatprep.subr.bf16.mxu0 %v1028
        %4118 = vmatpush1.bf16.msra.mxu0 %v1027
        %4119 = vmatprep.subr.bf16.mxu0 %v1032
        %4120 = vmatpush1.bf16.msra.mxu0 %v1031
        %4121 = vmatprep.subr.bf16.mxu0 %v1036
        %4122 = vmatpush1.bf16.msra.mxu0 %v1035
        %4123 = vmatprep.subr.bf16.mxu0 %v1040
        %4124 = vmatpush1.bf16.msra.mxu0 %v1039
        %4125 = vmatprep.subr.bf16.mxu0 %v1044
        %4126 = vmatpush1.bf16.msra.mxu0 %v1043
        %4127 = vmatprep.subr.bf16.mxu0 %v1048
        %4128 = vmatpush1.bf16.msra.mxu0 %v1047
        %4129 = vmatprep.subr.bf16.mxu0 %v1052
        %4130 = vmatpush1.bf16.msra.mxu0 %v1051
        %4131 = vmatprep.subr.bf16.mxu0 0
        %4132 = vmatpush1.bf16.msra.mxu0 0
        %4133 = vmatprep.subr.bf16.mxu0 0
        %4134 = vmatpush1.bf16.msra.mxu0 0
        %4135 = vmatprep.subr.bf16.mxu0 0
        %4136 = vmatpush1.bf16.msra.mxu0 0
        %4137 = vmatprep.subr.bf16.mxu0 0
        %4138 = vmatpush1.bf16.msra.mxu0 0
        %4139 = vmatprep.subr.bf16.mxu0 0
        %4140 = vmatpush1.bf16.msra.mxu0 0
        %4141 = vmatprep.subr.bf16.mxu0 0
        %4142 = vmatpush1.bf16.msra.mxu0 0
        %4143 = vmatprep.subr.bf16.mxu0 0
        %4144 = vmatpush1.bf16.msra.mxu0 0
        %4145 = vmatprep.subr.bf16.mxu0 0
        %4146 = vmatpush1.bf16.msra.mxu0 0
        %4147 = vmatprep.mubr.bf16.mxu0 0
        %4148 = vmatmul.mubr.bf16.gmra.mrb[0].mxu0 %v3994
        %v4149 = vpop.f32.mrb[0].mxu0
        %v4150 = vadd.f32 0.0, %v4149
        %v4151 = vpop.f32.mrb[0].mxu0
        %v4152 = vadd.f32 0.0, %v4151
        %v4153 = vpop.f32.mrb[0].mxu0
        %v4154 = vadd.f32 0.0, %v4153
        %v4155 = vpop.f32.mrb[0].mxu0
        %v4156 = vadd.f32 0.0, %v4155
        %4157 = vmatprep.mubr.bf16.mxu0 0
        %4158 = vmatmul.mubr.bf16.gmra.mrb[0].mxu0 %v3995
        %v4159 = vpop.f32.mrb[0].mxu0
        %v4160 = vadd.f32 0.0, %v4159
        %v4161 = vpop.f32.mrb[0].mxu0
        %v4162 = vadd.f32 0.0, %v4161
        %v4163 = vpop.f32.mrb[0].mxu0
        %v4164 = vadd.f32 0.0, %v4163
        %v4165 = vpop.f32.mrb[0].mxu0
        %v4166 = vadd.f32 0.0, %v4165
        %4167 = vmatprep.mubr.bf16.mxu0 0
        %4168 = vmatmul.mubr.bf16.gmra.mrb[0].mxu0 %v3996
        %v4169 = vpop.f32.mrb[0].mxu0
        %v4170 = vadd.f32 0.0, %v4169
        %v4171 = vpop.f32.mrb[0].mxu0
        %v4172 = vadd.f32 0.0, %v4171
        %v4173 = vpop.f32.mrb[0].mxu0
        %v4174 = vadd.f32 0.0, %v4173
        %v4175 = vpop.f32.mrb[0].mxu0
        %v4176 = vadd.f32 0.0, %v4175
        %4177 = vmatprep.mubr.bf16.mxu0 0
        %4178 = vmatmul.mubr.bf16.gmra.mrb[0].mxu0 %v3997
        %v4179 = vpop.f32.mrb[0].mxu0
        %v4180 = vadd.f32 0.0, %v4179
        %v4181 = vpop.f32.mrb[0].mxu0
        %v4182 = vadd.f32 0.0, %v4181
        %v4183 = vpop.f32.mrb[0].mxu0
        %v4184 = vadd.f32 0.0, %v4183
        %v4185 = vpop.f32.mrb[0].mxu0
        %v4186 = vadd.f32 0.0, %v4185
        %4187 = vmatprep.mubr.bf16.mxu0 0
        %4188 = vmatmul.mubr.bf16.gmra.mrb[0].mxu0 %v3998
        %v4189 = vpop.f32.mrb[0].mxu0
        %v4190 = vadd.f32 0.0, %v4189
        %v4191 = vpop.f32.mrb[0].mxu0
        %v4192 = vadd.f32 0.0, %v4191
        %v4193 = vpop.f32.mrb[0].mxu0
        %v4194 = vadd.f32 0.0, %v4193
        %v4195 = vpop.f32.mrb[0].mxu0
        %v4196 = vadd.f32 0.0, %v4195
        %4197 = vmatprep.mubr.bf16.mxu0 0
        %4198 = vmatmul.mubr.bf16.gmra.mrb[0].mxu0 %v3999
        %v4199 = vpop.f32.mrb[0].mxu0
        %v4200 = vadd.f32 0.0, %v4199
        %v4201 = vpop.f32.mrb[0].mxu0
        %v4202 = vadd.f32 0.0, %v4201
        %v4203 = vpop.f32.mrb[0].mxu0
        %v4204 = vadd.f32 0.0, %v4203
        %v4205 = vpop.f32.mrb[0].mxu0
        %v4206 = vadd.f32 0.0, %v4205
        %4207 = vmatprep.mubr.bf16.mxu0 0
        %4208 = vmatmul.mubr.bf16.gmra.mrb[0].mxu0 %v4000
        %v4209 = vpop.f32.mrb[0].mxu0
        %v4210 = vadd.f32 0.0, %v4209
        %v4211 = vpop.f32.mrb[0].mxu0
        %v4212 = vadd.f32 0.0, %v4211
        %v4213 = vpop.f32.mrb[0].mxu0
        %v4214 = vadd.f32 0.0, %v4213
        %v4215 = vpop.f32.mrb[0].mxu0
        %v4216 = vadd.f32 0.0, %v4215
        %4217 = vmatprep.mubr.bf16.mxu0 0
        %4218 = vmatmul.mubr.bf16.gmra.mrb[0].mxu0 %v4001
        %v4219 = vpop.f32.mrb[0].mxu0
        %v4220 = vadd.f32 0.0, %v4219
        %v4221 = vpop.f32.mrb[0].mxu0
        %v4222 = vadd.f32 0.0, %v4221
        %v4223 = vpop.f32.mrb[0].mxu0
        %v4224 = vadd.f32 0.0, %v4223
        %v4225 = vpop.f32.mrb[0].mxu0
        %v4226 = vadd.f32 0.0, %v4225
        %4227 = vdwg.mxu0
        %v4229 = vsel %vm1311, %v3986, 0
        %v4232 = vsel %vm1311, %v3987, 0
        %v4235 = vsel %vm1311, %v3988, 0
        %v4238 = vsel %vm1311, %v3989, 0
        %v4241 = vsel %vm1311, %v3990, 0
        %v4244 = vsel %vm1311, %v3991, 0
        %v4247 = vsel %vm1311, %v3992, 0
        %v4250 = vsel %vm1311, %v3993, 0
        %4252 = vmatprep.subr.bf16.mxu0 %v788
        %4253 = vmatpush1.bf16.msra.mxu0 %v787
        %4254 = vmatprep.subr.bf16.mxu0 %v792
        %4255 = vmatpush1.bf16.msra.mxu0 %v791
        %4256 = vmatprep.subr.bf16.mxu0 %v796
        %4257 = vmatpush1.bf16.msra.mxu0 %v795
        %4258 = vmatprep.subr.bf16.mxu0 %v800
        %4259 = vmatpush1.bf16.msra.mxu0 %v799
        %4260 = vmatprep.subr.bf16.mxu0 0
        %4261 = vmatpush1.bf16.msra.mxu0 0
        %4262 = vmatprep.subr.bf16.mxu0 0
        %4263 = vmatpush1.bf16.msra.mxu0 0
        %4264 = vmatprep.subr.bf16.mxu0 0
        %4265 = vmatpush1.bf16.msra.mxu0 0
        %4266 = vmatprep.subr.bf16.mxu0 0
        %4267 = vmatpush1.bf16.msra.mxu0 0
        %4268 = vmatprep.subr.bf16.mxu0 0
        %4269 = vmatpush1.bf16.msra.mxu0 0
        %4270 = vmatprep.subr.bf16.mxu0 0
        %4271 = vmatpush1.bf16.msra.mxu0 0
        %4272 = vmatprep.subr.bf16.mxu0 0
        %4273 = vmatpush1.bf16.msra.mxu0 0
        %4274 = vmatprep.subr.bf16.mxu0 0
        %4275 = vmatpush1.bf16.msra.mxu0 0
        %4276 = vmatprep.subr.bf16.mxu0 0
        %4277 = vmatpush1.bf16.msra.mxu0 0
        %4278 = vmatprep.subr.bf16.mxu0 0
        %4279 = vmatpush1.bf16.msra.mxu0 0
        %4280 = vmatprep.subr.bf16.mxu0 0
        %4281 = vmatpush1.bf16.msra.mxu0 0
        %4282 = vmatprep.subr.bf16.mxu0 0
        %4283 = vmatpush1.bf16.msra.mxu0 0
        %4284 = vmatprep.mubr.bf16.mxu0 0
        %4285 = vmatmul.mubr.bf16.gmra.mrb[0].mxu0 %v4229
        %v4286 = vpop.f32.mrb[0].mxu0
        %v4287 = vadd.f32 %v4037, %v4286
        %v4288 = vpop.f32.mrb[0].mxu0
        %v4289 = vadd.f32 %v4039, %v4288
        %v4290 = vpop.f32.mrb[0].mxu0
        %v4291 = vadd.f32 %v4041, %v4290
        %v4292 = vpop.f32.mrb[0].mxu0
        %v4293 = vadd.f32 %v4043, %v4292
        %4294 = vmatprep.mubr.bf16.mxu0 0
        %4295 = vmatmul.mubr.bf16.gmra.mrb[0].mxu0 %v4232
        %v4296 = vpop.f32.mrb[0].mxu0
        %v4297 = vadd.f32 %v4047, %v4296
        %v4298 = vpop.f32.mrb[0].mxu0
        %v4299 = vadd.f32 %v4049, %v4298
        %v4300 = vpop.f32.mrb[0].mxu0
        %v4301 = vadd.f32 %v4051, %v4300
        %v4302 = vpop.f32.mrb[0].mxu0
        %v4303 = vadd.f32 %v4053, %v4302
        %4304 = vmatprep.mubr.bf16.mxu0 0
        %4305 = vmatmul.mubr.bf16.gmra.mrb[0].mxu0 %v4235
        %v4306 = vpop.f32.mrb[0].mxu0
        %v4307 = vadd.f32 %v4057, %v4306
        %v4308 = vpop.f32.mrb[0].mxu0
        %v4309 = vadd.f32 %v4059, %v4308
        %v4310 = vpop.f32.mrb[0].mxu0
        %v4311 = vadd.f32 %v4061, %v4310
        %v4312 = vpop.f32.mrb[0].mxu0
        %v4313 = vadd.f32 %v4063, %v4312
        %4314 = vmatprep.mubr.bf16.mxu0 0
        %4315 = vmatmul.mubr.bf16.gmra.mrb[0].mxu0 %v4238
        %v4316 = vpop.f32.mrb[0].mxu0
        %v4317 = vadd.f32 %v4067, %v4316
        %v4318 = vpop.f32.mrb[0].mxu0
        %v4319 = vadd.f32 %v4069, %v4318
        %v4320 = vpop.f32.mrb[0].mxu0
        %v4321 = vadd.f32 %v4071, %v4320
        %v4322 = vpop.f32.mrb[0].mxu0
        %v4323 = vadd.f32 %v4073, %v4322
        %4324 = vmatprep.mubr.bf16.mxu0 0
        %4325 = vmatmul.mubr.bf16.gmra.mrb[0].mxu0 %v4241
        %v4326 = vpop.f32.mrb[0].mxu0
        %v4327 = vadd.f32 %v4077, %v4326
        %v4328 = vpop.f32.mrb[0].mxu0
        %v4329 = vadd.f32 %v4079, %v4328
        %v4330 = vpop.f32.mrb[0].mxu0
        %v4331 = vadd.f32 %v4081, %v4330
        %v4332 = vpop.f32.mrb[0].mxu0
        %v4333 = vadd.f32 %v4083, %v4332
        %4334 = vmatprep.mubr.bf16.mxu0 0
        %4335 = vmatmul.mubr.bf16.gmra.mrb[0].mxu0 %v4244
        %v4336 = vpop.f32.mrb[0].mxu0
        %v4337 = vadd.f32 %v4087, %v4336
        %v4338 = vpop.f32.mrb[0].mxu0
        %v4339 = vadd.f32 %v4089, %v4338
        %v4340 = vpop.f32.mrb[0].mxu0
        %v4341 = vadd.f32 %v4091, %v4340
        %v4342 = vpop.f32.mrb[0].mxu0
        %v4343 = vadd.f32 %v4093, %v4342
        %4344 = vmatprep.mubr.bf16.mxu0 0
        %4345 = vmatmul.mubr.bf16.gmra.mrb[0].mxu0 %v4247
        %v4346 = vpop.f32.mrb[0].mxu0
        %v4347 = vadd.f32 %v4097, %v4346
        %v4348 = vpop.f32.mrb[0].mxu0
        %v4349 = vadd.f32 %v4099, %v4348
        %v4350 = vpop.f32.mrb[0].mxu0
        %v4351 = vadd.f32 %v4101, %v4350
        %v4352 = vpop.f32.mrb[0].mxu0
        %v4353 = vadd.f32 %v4103, %v4352
        %4354 = vmatprep.mubr.bf16.mxu0 0
        %4355 = vmatmul.mubr.bf16.gmra.mrb[0].mxu0 %v4250
        %v4356 = vpop.f32.mrb[0].mxu0
        %v4357 = vadd.f32 %v4107, %v4356
        %v4358 = vpop.f32.mrb[0].mxu0
        %v4359 = vadd.f32 %v4109, %v4358
        %v4360 = vpop.f32.mrb[0].mxu0
        %v4361 = vadd.f32 %v4111, %v4360
        %v4362 = vpop.f32.mrb[0].mxu0
        %v4363 = vadd.f32 %v4113, %v4362
        %4364 = vdwg.mxu0
        %4365 = vmatprep.subr.bf16.mxu0 %v790
        %4366 = vmatpush1.bf16.msra.mxu0 %v789
        %4367 = vmatprep.subr.bf16.mxu0 %v794
        %4368 = vmatpush1.bf16.msra.mxu0 %v793
        %4369 = vmatprep.subr.bf16.mxu0 %v798
        %4370 = vmatpush1.bf16.msra.mxu0 %v797
        %4371 = vmatprep.subr.bf16.mxu0 %v802
        %4372 = vmatpush1.bf16.msra.mxu0 %v801
        %4373 = vmatprep.subr.bf16.mxu0 0
        %4374 = vmatpush1.bf16.msra.mxu0 0
        %4375 = vmatprep.subr.bf16.mxu0 0
        %4376 = vmatpush1.bf16.msra.mxu0 0
        %4377 = vmatprep.subr.bf16.mxu0 0
        %4378 = vmatpush1.bf16.msra.mxu0 0
        %4379 = vmatprep.subr.bf16.mxu0 0
        %4380 = vmatpush1.bf16.msra.mxu0 0
        %4381 = vmatprep.subr.bf16.mxu0 0
        %4382 = vmatpush1.bf16.msra.mxu0 0
        %4383 = vmatprep.subr.bf16.mxu0 0
        %4384 = vmatpush1.bf16.msra.mxu0 0
        %4385 = vmatprep.subr.bf16.mxu0 0
        %4386 = vmatpush1.bf16.msra.mxu0 0
        %4387 = vmatprep.subr.bf16.mxu0 0
        %4388 = vmatpush1.bf16.msra.mxu0 0
        %4389 = vmatprep.subr.bf16.mxu0 0
        %4390 = vmatpush1.bf16.msra.mxu0 0
        %4391 = vmatprep.subr.bf16.mxu0 0
        %4392 = vmatpush1.bf16.msra.mxu0 0
        %4393 = vmatprep.subr.bf16.mxu0 0
        %4394 = vmatpush1.bf16.msra.mxu0 0
        %4395 = vmatprep.subr.bf16.mxu0 0
        %4396 = vmatpush1.bf16.msra.mxu0 0
        %4397 = vmatprep.mubr.bf16.mxu0 0
        %4398 = vmatmul.mubr.bf16.gmra.mrb[0].mxu0 %v4229
        %v4399 = vpop.f32.mrb[0].mxu0
        %v4400 = vadd.f32 %v4150, %v4399
        %v4401 = vpop.f32.mrb[0].mxu0
        %v4402 = vadd.f32 %v4152, %v4401
        %v4403 = vpop.f32.mrb[0].mxu0
        %v4404 = vadd.f32 %v4154, %v4403
        %v4405 = vpop.f32.mrb[0].mxu0
        %v4406 = vadd.f32 %v4156, %v4405
        %4407 = vmatprep.mubr.bf16.mxu0 0
        %4408 = vmatmul.mubr.bf16.gmra.mrb[0].mxu0 %v4232
        %v4409 = vpop.f32.mrb[0].mxu0
        %v4410 = vadd.f32 %v4160, %v4409
        %v4411 = vpop.f32.mrb[0].mxu0
        %v4412 = vadd.f32 %v4162, %v4411
        %v4413 = vpop.f32.mrb[0].mxu0
        %v4414 = vadd.f32 %v4164, %v4413
        %v4415 = vpop.f32.mrb[0].mxu0
        %v4416 = vadd.f32 %v4166, %v4415
        %4417 = vmatprep.mubr.bf16.mxu0 0
        %4418 = vmatmul.mubr.bf16.gmra.mrb[0].mxu0 %v4235
        %v4419 = vpop.f32.mrb[0].mxu0
        %v4420 = vadd.f32 %v4170, %v4419
        %v4421 = vpop.f32.mrb[0].mxu0
        %v4422 = vadd.f32 %v4172, %v4421
        %v4423 = vpop.f32.mrb[0].mxu0
        %v4424 = vadd.f32 %v4174, %v4423
        %v4425 = vpop.f32.mrb[0].mxu0
        %v4426 = vadd.f32 %v4176, %v4425
        %4427 = vmatprep.mubr.bf16.mxu0 0
        %4428 = vmatmul.mubr.bf16.gmra.mrb[0].mxu0 %v4238
        %v4429 = vpop.f32.mrb[0].mxu0
        %v4430 = vadd.f32 %v4180, %v4429
        %v4431 = vpop.f32.mrb[0].mxu0
        %v4432 = vadd.f32 %v4182, %v4431
        %v4433 = vpop.f32.mrb[0].mxu0
        %v4434 = vadd.f32 %v4184, %v4433
        %v4435 = vpop.f32.mrb[0].mxu0
        %v4436 = vadd.f32 %v4186, %v4435
        %4437 = vmatprep.mubr.bf16.mxu0 0
        %4438 = vmatmul.mubr.bf16.gmra.mrb[0].mxu0 %v4241
        %v4439 = vpop.f32.mrb[0].mxu0
        %v4440 = vadd.f32 %v4190, %v4439
        %v4441 = vpop.f32.mrb[0].mxu0
        %v4442 = vadd.f32 %v4192, %v4441
        %v4443 = vpop.f32.mrb[0].mxu0
        %v4444 = vadd.f32 %v4194, %v4443
        %v4445 = vpop.f32.mrb[0].mxu0
        %v4446 = vadd.f32 %v4196, %v4445
        %4447 = vmatprep.mubr.bf16.mxu0 0
        %4448 = vmatmul.mubr.bf16.gmra.mrb[0].mxu0 %v4244
        %v4449 = vpop.f32.mrb[0].mxu0
        %v4450 = vadd.f32 %v4200, %v4449
        %v4451 = vpop.f32.mrb[0].mxu0
        %v4452 = vadd.f32 %v4202, %v4451
        %v4453 = vpop.f32.mrb[0].mxu0
        %v4454 = vadd.f32 %v4204, %v4453
        %v4455 = vpop.f32.mrb[0].mxu0
        %v4456 = vadd.f32 %v4206, %v4455
        %4457 = vmatprep.mubr.bf16.mxu0 0
        %4458 = vmatmul.mubr.bf16.gmra.mrb[0].mxu0 %v4247
        %v4459 = vpop.f32.mrb[0].mxu0
        %v4460 = vadd.f32 %v4210, %v4459
        %v4461 = vpop.f32.mrb[0].mxu0
        %v4462 = vadd.f32 %v4212, %v4461
        %v4463 = vpop.f32.mrb[0].mxu0
        %v4464 = vadd.f32 %v4214, %v4463
        %v4465 = vpop.f32.mrb[0].mxu0
        %v4466 = vadd.f32 %v4216, %v4465
        %4467 = vmatprep.mubr.bf16.mxu0 0
        %4468 = vmatmul.mubr.bf16.gmra.mrb[0].mxu0 %v4250
        %v4469 = vpop.f32.mrb[0].mxu0
        %v4470 = vadd.f32 %v4220, %v4469
        %v4471 = vpop.f32.mrb[0].mxu0
        %v4472 = vadd.f32 %v4222, %v4471
        %v4473 = vpop.f32.mrb[0].mxu0
        %v4474 = vadd.f32 %v4224, %v4473
        %v4475 = vpop.f32.mrb[0].mxu0
        %v4476 = vadd.f32 %v4226, %v4475
        %4477 = vdwg.mxu0
        %v4478 = vxor.u32 %v4287, 2147483648
        %v4479 = vxor.u32 %v4291, 2147483648
        %v4480 = vxor.u32 %v4297, 2147483648
        %v4481 = vxor.u32 %v4301, 2147483648
        %v4482 = vxor.u32 %v4307, 2147483648
        %v4483 = vxor.u32 %v4311, 2147483648
        %v4484 = vxor.u32 %v4317, 2147483648
        %v4485 = vxor.u32 %v4321, 2147483648
        %v4486 = vxor.u32 %v4327, 2147483648
        %v4487 = vxor.u32 %v4331, 2147483648
        %v4488 = vxor.u32 %v4337, 2147483648
        %v4489 = vxor.u32 %v4341, 2147483648
        %v4490 = vxor.u32 %v4347, 2147483648
        %v4491 = vxor.u32 %v4351, 2147483648
        %v4492 = vxor.u32 %v4357, 2147483648
        %v4493 = vxor.u32 %v4361, 2147483648
        %v4494 = vmul.f32 %v4478, 1.442695
        %v4495 = vpow.pop %v4494
        %v4496 = vmul.f32 %v4479, 1.442695
        %v4497 = vpow.pop %v4496
        %v4498 = vmul.f32 %v4480, 1.442695
        %v4499 = vpow.pop %v4498
        %v4500 = vmul.f32 %v4481, 1.442695
        %v4501 = vpow.pop %v4500
        %v4502 = vmul.f32 %v4482, 1.442695
        %v4503 = vpow.pop %v4502
        %v4504 = vmul.f32 %v4483, 1.442695
        %v4505 = vpow.pop %v4504
        %v4506 = vmul.f32 %v4484, 1.442695
        %v4507 = vpow.pop %v4506
        %v4508 = vmul.f32 %v4485, 1.442695
        %v4509 = vpow.pop %v4508
        %v4510 = vmul.f32 %v4486, 1.442695
        %v4511 = vpow.pop %v4510
        %v4512 = vmul.f32 %v4487, 1.442695
        %v4513 = vpow.pop %v4512
        %v4514 = vmul.f32 %v4488, 1.442695
        %v4515 = vpow.pop %v4514
        %v4516 = vmul.f32 %v4489, 1.442695
        %v4517 = vpow.pop %v4516
        %v4518 = vmul.f32 %v4490, 1.442695
        %v4519 = vpow.pop %v4518
        %v4520 = vmul.f32 %v4491, 1.442695
        %v4521 = vpow.pop %v4520
        %v4522 = vmul.f32 %v4492, 1.442695
        %v4523 = vpow.pop %v4522
        %v4524 = vmul.f32 %v4493, 1.442695
        %v4525 = vpow.pop %v4524
        %v4526 = vadd.f32 %v4495, 1.0
        %v4527 = vadd.f32 %v4497, 1.0
        %v4528 = vadd.f32 %v4499, 1.0
        %v4529 = vadd.f32 %v4501, 1.0
        %v4530 = vadd.f32 %v4503, 1.0
        %v4531 = vadd.f32 %v4505, 1.0
        %v4532 = vadd.f32 %v4507, 1.0
        %v4533 = vadd.f32 %v4509, 1.0
        %v4534 = vadd.f32 %v4511, 1.0
        %v4535 = vadd.f32 %v4513, 1.0
        %v4536 = vadd.f32 %v4515, 1.0
        %v4537 = vadd.f32 %v4517, 1.0
        %v4538 = vadd.f32 %v4519, 1.0
        %v4539 = vadd.f32 %v4521, 1.0
        %v4540 = vadd.f32 %v4523, 1.0
        %v4541 = vadd.f32 %v4525, 1.0
        %v4542 = vrcp.pop %v4526
        %v4543 = vmul.f32 1.0, %v4542
        %v4544 = vrcp.pop %v4527
        %v4545 = vmul.f32 1.0, %v4544
        %v4546 = vrcp.pop %v4528
        %v4547 = vmul.f32 1.0, %v4546
        %v4548 = vrcp.pop %v4529
        %v4549 = vmul.f32 1.0, %v4548
        %v4550 = vrcp.pop %v4530
        %v4551 = vmul.f32 1.0, %v4550
        %v4552 = vrcp.pop %v4531
        %v4553 = vmul.f32 1.0, %v4552
        %v4554 = vrcp.pop %v4532
        %v4555 = vmul.f32 1.0, %v4554
        %v4556 = vrcp.pop %v4533
        %v4557 = vmul.f32 1.0, %v4556
        %v4558 = vrcp.pop %v4534
        %v4559 = vmul.f32 1.0, %v4558
        %v4560 = vrcp.pop %v4535
        %v4561 = vmul.f32 1.0, %v4560
        %v4562 = vrcp.pop %v4536
        %v4563 = vmul.f32 1.0, %v4562
        %v4564 = vrcp.pop %v4537
        %v4565 = vmul.f32 1.0, %v4564
        %v4566 = vrcp.pop %v4538
        %v4567 = vmul.f32 1.0, %v4566
        %v4568 = vrcp.pop %v4539
        %v4569 = vmul.f32 1.0, %v4568
        %v4570 = vrcp.pop %v4540
        %v4571 = vmul.f32 1.0, %v4570
        %v4572 = vrcp.pop %v4541
        %v4573 = vmul.f32 1.0, %v4572
        %v4574 = vxor.u32 %v4289, 2147483648
        %v4575 = vxor.u32 %v4293, 2147483648
        %v4576 = vxor.u32 %v4299, 2147483648
        %v4577 = vxor.u32 %v4303, 2147483648
        %v4578 = vxor.u32 %v4309, 2147483648
        %v4579 = vxor.u32 %v4313, 2147483648
        %v4580 = vxor.u32 %v4319, 2147483648
        %v4581 = vxor.u32 %v4323, 2147483648
        %v4582 = vxor.u32 %v4329, 2147483648
        %v4583 = vxor.u32 %v4333, 2147483648
        %v4584 = vxor.u32 %v4339, 2147483648
        %v4585 = vxor.u32 %v4343, 2147483648
        %v4586 = vxor.u32 %v4349, 2147483648
        %v4587 = vxor.u32 %v4353, 2147483648
        %v4588 = vxor.u32 %v4359, 2147483648
        %v4589 = vxor.u32 %v4363, 2147483648
        %v4590 = vmul.f32 %v4574, 1.442695
        %v4591 = vpow.pop %v4590
        %v4592 = vmul.f32 %v4575, 1.442695
        %v4593 = vpow.pop %v4592
        %v4594 = vmul.f32 %v4576, 1.442695
        %v4595 = vpow.pop %v4594
        %v4596 = vmul.f32 %v4577, 1.442695
        %v4597 = vpow.pop %v4596
        %v4598 = vmul.f32 %v4578, 1.442695
        %v4599 = vpow.pop %v4598
        %v4600 = vmul.f32 %v4579, 1.442695
        %v4601 = vpow.pop %v4600
        %v4602 = vmul.f32 %v4580, 1.442695
        %v4603 = vpow.pop %v4602
        %v4604 = vmul.f32 %v4581, 1.442695
        %v4605 = vpow.pop %v4604
        %v4606 = vmul.f32 %v4582, 1.442695
        %v4607 = vpow.pop %v4606
        %v4608 = vmul.f32 %v4583, 1.442695
        %v4609 = vpow.pop %v4608
        %v4610 = vmul.f32 %v4584, 1.442695
        %v4611 = vpow.pop %v4610
        %v4612 = vmul.f32 %v4585, 1.442695
        %v4613 = vpow.pop %v4612
        %v4614 = vmul.f32 %v4586, 1.442695
        %v4615 = vpow.pop %v4614
        %v4616 = vmul.f32 %v4587, 1.442695
        %v4617 = vpow.pop %v4616
        %v4618 = vmul.f32 %v4588, 1.442695
        %v4619 = vpow.pop %v4618
        %v4620 = vmul.f32 %v4589, 1.442695
        %v4621 = vpow.pop %v4620
        %v4622 = vadd.f32 %v4591, 1.0
        %v4623 = vadd.f32 %v4593, 1.0
        %v4624 = vadd.f32 %v4595, 1.0
        %v4625 = vadd.f32 %v4597, 1.0
        %v4626 = vadd.f32 %v4599, 1.0
        %v4627 = vadd.f32 %v4601, 1.0
        %v4628 = vadd.f32 %v4603, 1.0
        %v4629 = vadd.f32 %v4605, 1.0
        %v4630 = vadd.f32 %v4607, 1.0
        %v4631 = vadd.f32 %v4609, 1.0
        %v4632 = vadd.f32 %v4611, 1.0
        %v4633 = vadd.f32 %v4613, 1.0
        %v4634 = vadd.f32 %v4615, 1.0
        %v4635 = vadd.f32 %v4617, 1.0
        %v4636 = vadd.f32 %v4619, 1.0
        %v4637 = vadd.f32 %v4621, 1.0
        %v4638 = vrcp.pop %v4622
        %v4639 = vmul.f32 1.0, %v4638
        %v4640 = vrcp.pop %v4623
        %v4641 = vmul.f32 1.0, %v4640
        %v4642 = vrcp.pop %v4624
        %v4643 = vmul.f32 1.0, %v4642
        %v4644 = vrcp.pop %v4625
        %v4645 = vmul.f32 1.0, %v4644
        %v4646 = vrcp.pop %v4626
        %v4647 = vmul.f32 1.0, %v4646
        %v4648 = vrcp.pop %v4627
        %v4649 = vmul.f32 1.0, %v4648
        %v4650 = vrcp.pop %v4628
        %v4651 = vmul.f32 1.0, %v4650
        %v4652 = vrcp.pop %v4629
        %v4653 = vmul.f32 1.0, %v4652
        %v4654 = vrcp.pop %v4630
        %v4655 = vmul.f32 1.0, %v4654
        %v4656 = vrcp.pop %v4631
        %v4657 = vmul.f32 1.0, %v4656
        %v4658 = vrcp.pop %v4632
        %v4659 = vmul.f32 1.0, %v4658
        %v4660 = vrcp.pop %v4633
        %v4661 = vmul.f32 1.0, %v4660
        %v4662 = vrcp.pop %v4634
        %v4663 = vmul.f32 1.0, %v4662
        %v4664 = vrcp.pop %v4635
        %v4665 = vmul.f32 1.0, %v4664
        %v4666 = vrcp.pop %v4636
        %v4667 = vmul.f32 1.0, %v4666
        %v4668 = vrcp.pop %v4637
        %v4669 = vmul.f32 1.0, %v4668
        %v4670 = vtanh.pop %v4400
        %v4671 = vtanh.pop %v4404
        %v4672 = vtanh.pop %v4410
        %v4673 = vtanh.pop %v4414
        %v4674 = vtanh.pop %v4420
        %v4675 = vtanh.pop %v4424
        %v4676 = vtanh.pop %v4430
        %v4677 = vtanh.pop %v4434
        %v4678 = vtanh.pop %v4440
        %v4679 = vtanh.pop %v4444
        %v4680 = vtanh.pop %v4450
        %v4681 = vtanh.pop %v4454
        %v4682 = vtanh.pop %v4460
        %v4683 = vtanh.pop %v4464
        %v4684 = vtanh.pop %v4470
        %v4685 = vtanh.pop %v4474
        %v4686 = vxor.u32 %v4402, 2147483648
        %v4687 = vxor.u32 %v4406, 2147483648
        %v4688 = vxor.u32 %v4412, 2147483648
        %v4689 = vxor.u32 %v4416, 2147483648
        %v4690 = vxor.u32 %v4422, 2147483648
        %v4691 = vxor.u32 %v4426, 2147483648
        %v4692 = vxor.u32 %v4432, 2147483648
        %v4693 = vxor.u32 %v4436, 2147483648
        %v4694 = vxor.u32 %v4442, 2147483648
        %v4695 = vxor.u32 %v4446, 2147483648
        %v4696 = vxor.u32 %v4452, 2147483648
        %v4697 = vxor.u32 %v4456, 2147483648
        %v4698 = vxor.u32 %v4462, 2147483648
        %v4699 = vxor.u32 %v4466, 2147483648
        %v4700 = vxor.u32 %v4472, 2147483648
        %v4701 = vxor.u32 %v4476, 2147483648
        %v4702 = vmul.f32 %v4686, 1.442695
        %v4703 = vpow.pop %v4702
        %v4704 = vmul.f32 %v4687, 1.442695
        %v4705 = vpow.pop %v4704
        %v4706 = vmul.f32 %v4688, 1.442695
        %v4707 = vpow.pop %v4706
        %v4708 = vmul.f32 %v4689, 1.442695
        %v4709 = vpow.pop %v4708
        %v4710 = vmul.f32 %v4690, 1.442695
        %v4711 = vpow.pop %v4710
        %v4712 = vmul.f32 %v4691, 1.442695
        %v4713 = vpow.pop %v4712
        %v4714 = vmul.f32 %v4692, 1.442695
        %v4715 = vpow.pop %v4714
        %v4716 = vmul.f32 %v4693, 1.442695
        %v4717 = vpow.pop %v4716
        %v4718 = vmul.f32 %v4694, 1.442695
        %v4719 = vpow.pop %v4718
        %v4720 = vmul.f32 %v4695, 1.442695
        %v4721 = vpow.pop %v4720
        %v4722 = vmul.f32 %v4696, 1.442695
        %v4723 = vpow.pop %v4722
        %v4724 = vmul.f32 %v4697, 1.442695
        %v4725 = vpow.pop %v4724
        %v4726 = vmul.f32 %v4698, 1.442695
        %v4727 = vpow.pop %v4726
        %v4728 = vmul.f32 %v4699, 1.442695
        %v4729 = vpow.pop %v4728
        %v4730 = vmul.f32 %v4700, 1.442695
        %v4731 = vpow.pop %v4730
        %v4732 = vmul.f32 %v4701, 1.442695
        %v4733 = vpow.pop %v4732
        %v4734 = vadd.f32 %v4703, 1.0
        %v4735 = vadd.f32 %v4705, 1.0
        %v4736 = vadd.f32 %v4707, 1.0
        %v4737 = vadd.f32 %v4709, 1.0
        %v4738 = vadd.f32 %v4711, 1.0
        %v4739 = vadd.f32 %v4713, 1.0
        %v4740 = vadd.f32 %v4715, 1.0
        %v4741 = vadd.f32 %v4717, 1.0
        %v4742 = vadd.f32 %v4719, 1.0
        %v4743 = vadd.f32 %v4721, 1.0
        %v4744 = vadd.f32 %v4723, 1.0
        %v4745 = vadd.f32 %v4725, 1.0
        %v4746 = vadd.f32 %v4727, 1.0
        %v4747 = vadd.f32 %v4729, 1.0
        %v4748 = vadd.f32 %v4731, 1.0
        %v4749 = vadd.f32 %v4733, 1.0
        %v4750 = vrcp.pop %v4734
        %v4751 = vmul.f32 1.0, %v4750
        %v4752 = vrcp.pop %v4735
        %v4753 = vmul.f32 1.0, %v4752
        %v4754 = vrcp.pop %v4736
        %v4755 = vmul.f32 1.0, %v4754
        %v4756 = vrcp.pop %v4737
        %v4757 = vmul.f32 1.0, %v4756
        %v4758 = vrcp.pop %v4738
        %v4759 = vmul.f32 1.0, %v4758
        %v4760 = vrcp.pop %v4739
        %v4761 = vmul.f32 1.0, %v4760
        %v4762 = vrcp.pop %v4740
        %v4763 = vmul.f32 1.0, %v4762
        %v4764 = vrcp.pop %v4741
        %v4765 = vmul.f32 1.0, %v4764
        %v4766 = vrcp.pop %v4742
        %v4767 = vmul.f32 1.0, %v4766
        %v4768 = vrcp.pop %v4743
        %v4769 = vmul.f32 1.0, %v4768
        %v4770 = vrcp.pop %v4744
        %v4771 = vmul.f32 1.0, %v4770
        %v4772 = vrcp.pop %v4745
        %v4773 = vmul.f32 1.0, %v4772
        %v4774 = vrcp.pop %v4746
        %v4775 = vmul.f32 1.0, %v4774
        %v4776 = vrcp.pop %v4747
        %v4777 = vmul.f32 1.0, %v4776
        %v4778 = vrcp.pop %v4748
        %v4779 = vmul.f32 1.0, %v4778
        %v4780 = vrcp.pop %v4749
        %v4781 = vmul.f32 1.0, %v4780
        %v4782 = vmul.f32 %v4639, %v3842
        %v4783 = vmul.f32 %v4641, %v3843
        %v4784 = vmul.f32 %v4643, %v3844
        %v4785 = vmul.f32 %v4645, %v3845
        %v4786 = vmul.f32 %v4647, %v3846
        %v4787 = vmul.f32 %v4649, %v3847
        %v4788 = vmul.f32 %v4651, %v3848
        %v4789 = vmul.f32 %v4653, %v3849
        %v4790 = vmul.f32 %v4655, %v3850
        %v4791 = vmul.f32 %v4657, %v3851
        %v4792 = vmul.f32 %v4659, %v3852
        %v4793 = vmul.f32 %v4661, %v3853
        %v4794 = vmul.f32 %v4663, %v3854
        %v4795 = vmul.f32 %v4665, %v3855
        %v4796 = vmul.f32 %v4667, %v3856
        %v4797 = vmul.f32 %v4669, %v3857
        %v4798 = vmul.f32 %v4543, %v4670
        %v4799 = vmul.f32 %v4545, %v4671
        %v4800 = vmul.f32 %v4547, %v4672
        %v4801 = vmul.f32 %v4549, %v4673
        %v4802 = vmul.f32 %v4551, %v4674
        %v4803 = vmul.f32 %v4553, %v4675
        %v4804 = vmul.f32 %v4555, %v4676
        %v4805 = vmul.f32 %v4557, %v4677
        %v4806 = vmul.f32 %v4559, %v4678
        %v4807 = vmul.f32 %v4561, %v4679
        %v4808 = vmul.f32 %v4563, %v4680
        %v4809 = vmul.f32 %v4565, %v4681
        %v4810 = vmul.f32 %v4567, %v4682
        %v4811 = vmul.f32 %v4569, %v4683
        %v4812 = vmul.f32 %v4571, %v4684
        %v4813 = vmul.f32 %v4573, %v4685
        %v4814 = vadd.f32 %v4782, %v4798
        %v4815 = vadd.f32 %v4783, %v4799
        %v4816 = vadd.f32 %v4784, %v4800
        %v4817 = vadd.f32 %v4785, %v4801
        %v4818 = vadd.f32 %v4786, %v4802
        %v4819 = vadd.f32 %v4787, %v4803
        %v4820 = vadd.f32 %v4788, %v4804
        %v4821 = vadd.f32 %v4789, %v4805
        %v4822 = vadd.f32 %v4790, %v4806
        %v4823 = vadd.f32 %v4791, %v4807
        %v4824 = vadd.f32 %v4792, %v4808
        %v4825 = vadd.f32 %v4793, %v4809
        %v4826 = vadd.f32 %v4794, %v4810
        %v4827 = vadd.f32 %v4795, %v4811
        %v4828 = vadd.f32 %v4796, %v4812
        %v4829 = vadd.f32 %v4797, %v4813
        %v4830 = vtanh.pop %v4814
        %v4831 = vtanh.pop %v4815
        %v4832 = vtanh.pop %v4816
        %v4833 = vtanh.pop %v4817
        %v4834 = vtanh.pop %v4818
        %v4835 = vtanh.pop %v4819
        %v4836 = vtanh.pop %v4820
        %v4837 = vtanh.pop %v4821
        %v4838 = vtanh.pop %v4822
        %v4839 = vtanh.pop %v4823
        %v4840 = vtanh.pop %v4824
        %v4841 = vtanh.pop %v4825
        %v4842 = vtanh.pop %v4826
        %v4843 = vtanh.pop %v4827
        %v4844 = vtanh.pop %v4828
        %v4845 = vtanh.pop %v4829
        %v4846 = vmul.f32 %v4751, %v4830
        %v4847 = vmul.f32 %v4753, %v4831
        %v4848 = vmul.f32 %v4755, %v4832
        %v4849 = vmul.f32 %v4757, %v4833
        %v4850 = vmul.f32 %v4759, %v4834
        %v4851 = vmul.f32 %v4761, %v4835
        %v4852 = vmul.f32 %v4763, %v4836
        %v4853 = vmul.f32 %v4765, %v4837
        %v4854 = vmul.f32 %v4767, %v4838
        %v4855 = vmul.f32 %v4769, %v4839
        %v4856 = vmul.f32 %v4771, %v4840
        %v4857 = vmul.f32 %v4773, %v4841
        %v4858 = vmul.f32 %v4775, %v4842
        %v4859 = vmul.f32 %v4777, %v4843
        %v4860 = vmul.f32 %v4779, %v4844
        %v4861 = vmul.f32 %v4781, %v4845
        %v4862 = vld [vmem:[%s337] sm:$0x1]
        %v4863 = vlaneseq
        %v4864 = vshrl.u32 %v4863, 7
        %v4865 = vadd.s32 %v4864, 8
        %v4866 = vadd.s32 %v4864, 16
        %v4867 = vadd.s32 %v4864, 24
        %v4868 = vadd.s32 %v4864, 32
        %v4869 = vadd.s32 %v4864, 40
        %v4870 = vadd.s32 %v4864, 48
        %v4871 = vadd.s32 %v4864, 56
        %v4872 = vlaneseq
        %v4873 = vshrl.u32 %v4872, 7
        %v4874 = vsub.s32 0, %v4873
        %v4875 = vrot.slane %v4862, %v4874
        %vm4876 = vcmp.eq.s32.totalorder %v4864, %v4875
        %vm4877 = vcmp.eq.s32.totalorder %v4865, %v4875
        %vm4878 = vcmp.eq.s32.totalorder %v4866, %v4875
        %vm4879 = vcmp.eq.s32.totalorder %v4867, %v4875
        %vm4880 = vcmp.eq.s32.totalorder %v4868, %v4875
        %vm4881 = vcmp.eq.s32.totalorder %v4869, %v4875
        %vm4882 = vcmp.eq.s32.totalorder %v4870, %v4875
        %vm4883 = vcmp.eq.s32.totalorder %v4871, %v4875
        %v4884 = vsel %vm4876, 1, 0
        %v4885 = vsel %vm4877, 1, 0
        %v4886 = vsel %vm4878, 1, 0
        %v4887 = vsel %vm4879, 1, 0
        %v4888 = vsel %vm4880, 1, 0
        %v4889 = vsel %vm4881, 1, 0
        %v4890 = vsel %vm4882, 1, 0
        %v4891 = vsel %vm4883, 1, 0
        %v4892 = vcvt.s32.f32 %v4884
        %v4893 = vcvt.s32.f32 %v4885
        %v4894 = vcvt.s32.f32 %v4886
        %v4895 = vcvt.s32.f32 %v4887
        %v4896 = vcvt.s32.f32 %v4888
        %v4897 = vcvt.s32.f32 %v4889
        %v4898 = vcvt.s32.f32 %v4890
        %v4899 = vcvt.s32.f32 %v4891
        %v4900 = vpack.c.bf16 %v4893, %v4892
        %v4901 = vpack.c.bf16 %v4895, %v4894
        %v4902 = vpack.c.bf16 %v4897, %v4896
        %v4903 = vpack.c.bf16 %v4899, %v4898
        %v4904 = vld [vmem:[#allocation3] sm:$0xff]
        %v4905 = vld [vmem:[#allocation3 + $0x8] sm:$0xff]
        %v4906 = vld [vmem:[#allocation3 + $0x10] sm:$0xff]
        %v4907 = vld [vmem:[#allocation3 + $0x18] sm:$0xff]
        %v4908 = vld [vmem:[#allocation3 + $0x20] sm:$0xff]
        %v4909 = vld [vmem:[#allocation3 + $0x28] sm:$0xff]
        %v4910 = vld [vmem:[#allocation3 + $0x30] sm:$0xff]
        %v4911 = vld [vmem:[#allocation3 + $0x38] sm:$0xff]
        %v4912 = vpack.c.bf16 %v4847, %v4846
        %v4913 = vpack.c.bf16 %v4849, %v4848
        %v4914 = vpack.c.bf16 %v4851, %v4850
        %v4915 = vpack.c.bf16 %v4853, %v4852
        %v4916 = vpack.c.bf16 %v4855, %v4854
        %v4917 = vpack.c.bf16 %v4857, %v4856
        %v4918 = vpack.c.bf16 %v4859, %v4858
        %v4919 = vpack.c.bf16 %v4861, %v4860
        %4920 = vmatprep.subr.bf16.mxu0 0
        %4921 = vmatpush1.bf16.msra.mxu0 %v4912
        %4922 = vmatprep.subr.bf16.mxu0 0
        %4923 = vmatpush1.bf16.msra.mxu0 %v4913
        %4924 = vmatprep.subr.bf16.mxu0 0
        %4925 = vmatpush1.bf16.msra.mxu0 %v4914
        %4926 = vmatprep.subr.bf16.mxu0 0
        %4927 = vmatpush1.bf16.msra.mxu0 %v4915
        %4928 = vmatprep.subr.bf16.mxu0 0
        %4929 = vmatpush1.bf16.msra.mxu0 %v4916
        %4930 = vmatprep.subr.bf16.mxu0 0
        %4931 = vmatpush1.bf16.msra.mxu0 %v4917
        %4932 = vmatprep.subr.bf16.mxu0 0
        %4933 = vmatpush1.bf16.msra.mxu0 %v4918
        %4934 = vmatprep.subr.bf16.mxu0 0
        %4935 = vmatpush1.bf16.msra.mxu0 %v4919
        %4936 = vmatprep.subr.bf16.mxu0 0
        %4937 = vmatpush1.bf16.msra.mxu0 0
        %4938 = vmatprep.subr.bf16.mxu0 0
        %4939 = vmatpush1.bf16.msra.mxu0 0
        %4940 = vmatprep.subr.bf16.mxu0 0
        %4941 = vmatpush1.bf16.msra.mxu0 0
        %4942 = vmatprep.subr.bf16.mxu0 0
        %4943 = vmatpush1.bf16.msra.mxu0 0
        %4944 = vmatprep.subr.bf16.mxu0 0
        %4945 = vmatpush1.bf16.msra.mxu0 0
        %4946 = vmatprep.subr.bf16.mxu0 0
        %4947 = vmatpush1.bf16.msra.mxu0 0
        %4948 = vmatprep.subr.bf16.mxu0 0
        %4949 = vmatpush1.bf16.msra.mxu0 0
        %4950 = vmatprep.subr.bf16.mxu0 0
        %4951 = vmatpush1.bf16.msra.mxu0 0
        %4952 = vmatprep.mubr.bf16.mxu0 0
        %4953 = vmatmul.mubr.bf16.gmra.mrb[0].mxu0 %v4900
        %v4954 = vpop.f32.mrb[0].mxu0
        %v4955 = vadd.f32 0.0, %v4954
        %v4956 = vpop.f32.mrb[0].mxu0
        %v4957 = vpop.f32.mrb[0].mxu0
        %v4958 = vadd.f32 0.0, %v4957
        %v4959 = vpop.f32.mrb[0].mxu0
        %4960 = vmatprep.mubr.bf16.mxu0 0
        %4961 = vmatmul.mubr.bf16.gmra.mrb[0].mxu0 %v4901
        %v4962 = vpop.f32.mrb[0].mxu0
        %v4963 = vadd.f32 0.0, %v4962
        %v4964 = vpop.f32.mrb[0].mxu0
        %v4965 = vpop.f32.mrb[0].mxu0
        %v4966 = vadd.f32 0.0, %v4965
        %v4967 = vpop.f32.mrb[0].mxu0
        %4968 = vmatprep.mubr.bf16.mxu0 0
        %4969 = vmatmul.mubr.bf16.gmra.mrb[0].mxu0 %v4902
        %v4970 = vpop.f32.mrb[0].mxu0
        %v4971 = vadd.f32 0.0, %v4970
        %v4972 = vpop.f32.mrb[0].mxu0
        %v4973 = vpop.f32.mrb[0].mxu0
        %v4974 = vadd.f32 0.0, %v4973
        %v4975 = vpop.f32.mrb[0].mxu0
        %4976 = vmatprep.mubr.bf16.mxu0 0
        %4977 = vmatmul.mubr.bf16.gmra.mrb[0].mxu0 %v4903
        %v4978 = vpop.f32.mrb[0].mxu0
        %v4979 = vadd.f32 0.0, %v4978
        %v4980 = vpop.f32.mrb[0].mxu0
        %v4981 = vpop.f32.mrb[0].mxu0
        %v4982 = vadd.f32 0.0, %v4981
        %v4983 = vpop.f32.mrb[0].mxu0
        %4984 = vdwg.mxu0
        %v4985 = vadd.f32 %v4904, %v4955
        %v4986 = vadd.f32 %v4905, %v4958
        %v4987 = vadd.f32 %v4906, %v4963
        %v4988 = vadd.f32 %v4907, %v4966
        %v4989 = vadd.f32 %v4908, %v4971
        %v4990 = vadd.f32 %v4909, %v4974
        %v4991 = vadd.f32 %v4910, %v4979
        %v4992 = vadd.f32 %v4911, %v4982
        %4993 = vst [vmem:[#allocation3] sm:$0xff] %v4985
        %4994 = vst [vmem:[#allocation3 + $0x8] sm:$0xff] %v4986
        %4995 = vst [vmem:[#allocation3 + $0x10] sm:$0xff] %v4987
        %4996 = vst [vmem:[#allocation3 + $0x18] sm:$0xff] %v4988
        %4997 = vst [vmem:[#allocation3 + $0x20] sm:$0xff] %v4989
        %4998 = vst [vmem:[#allocation3 + $0x28] sm:$0xff] %v4990
        %4999 = vst [vmem:[#allocation3 + $0x30] sm:$0xff] %v4991
        %5000 = vst [vmem:[#allocation3 + $0x38] sm:$0xff] %v4992
        %p5001 = scmp.eq.s32.totalorder %s22, 1
        // Predicated region
        $region65: #{tpu_custom_call.1} parent=51 // pred_check
          %p5002 = pneg %p5001
        $region66: #{tpu_custom_call.1} parent=51 // pred_check_branch
          %5004 = sbr.rel (%p5002) target = $region68
        $region67: #{tpu_custom_call.1} parent=51 // pred_region
          %v5005 = vld [vmem:[#allocation3] sm:$0xff]
          %v5006 = vld [vmem:[#allocation3 + $0x8] sm:$0xff]
          %v5007 = vld [vmem:[#allocation3 + $0x10] sm:$0xff]
          %v5008 = vld [vmem:[#allocation3 + $0x18] sm:$0xff]
          %v5009 = vld [vmem:[#allocation3 + $0x20] sm:$0xff]
          %v5010 = vld [vmem:[#allocation3 + $0x28] sm:$0xff]
          %v5011 = vld [vmem:[#allocation3 + $0x30] sm:$0xff]
          %v5012 = vld [vmem:[#allocation3 + $0x38] sm:$0xff]
          %v5013 = vld [vmem:[#allocation4] sm:$0xff]
          %v5014 = vld [vmem:[#allocation4 + $0x8] sm:$0xff]
          %v5015 = vld [vmem:[#allocation4 + $0x10] sm:$0xff]
          %v5016 = vld [vmem:[#allocation4 + $0x18] sm:$0xff]
          %v5017 = vld [vmem:[#allocation4 + $0x20] sm:$0xff]
          %v5018 = vld [vmem:[#allocation4 + $0x28] sm:$0xff]
          %v5019 = vld [vmem:[#allocation4 + $0x30] sm:$0xff]
          %v5020 = vld [vmem:[#allocation4 + $0x38] sm:$0xff]
          %v5021 = vadd.f32 %v5005, %v5013
          %v5022 = vadd.f32 %v5006, %v5014
          %v5023 = vadd.f32 %v5007, %v5015
          %v5024 = vadd.f32 %v5008, %v5016
          %v5025 = vadd.f32 %v5009, %v5017
          %v5026 = vadd.f32 %v5010, %v5018
          %v5027 = vadd.f32 %v5011, %v5019
          %v5028 = vadd.f32 %v5012, %v5020
          %v5029 = vadd.f32 %v5021, %v5022
          %v5030 = vadd.f32 %v5029, %v5023
          %v5031 = vadd.f32 %v5030, %v5024
          %v5032 = vadd.f32 %v5031, %v5025
          %v5033 = vadd.f32 %v5032, %v5026
          %v5034 = vadd.f32 %v5033, %v5027
          %v5035 = vadd.f32 %v5034, %v5028
          %v5036 = vrot.slane %v5035, 4
          %v5037 = vadd.f32 %v5035, %v5036
          %v5038 = vrot.slane %v5037, 2
          %v5039 = vadd.f32 %v5037, %v5038
          %v5040 = vrot.slane %v5039, 1
          %v5041 = vadd.f32 %v5039, %v5040
          %v5042 = vrcp.pop 64.0
          %v5043 = vmul.f32 %v5041, %v5042
          %v5044 = vsub.f32 %v5021, %v5043
          %v5045 = vsub.f32 %v5022, %v5043
          %v5046 = vsub.f32 %v5023, %v5043
          %v5047 = vsub.f32 %v5024, %v5043
          %v5048 = vsub.f32 %v5025, %v5043
          %v5049 = vsub.f32 %v5026, %v5043
          %v5050 = vsub.f32 %v5027, %v5043
          %v5051 = vsub.f32 %v5028, %v5043
          %v5052 = vmul.f32 %v5044, %v5044
          %v5053 = vmul.f32 %v5045, %v5045
          %v5054 = vmul.f32 %v5046, %v5046
          %v5055 = vmul.f32 %v5047, %v5047
          %v5056 = vmul.f32 %v5048, %v5048
          %v5057 = vmul.f32 %v5049, %v5049
          %v5058 = vmul.f32 %v5050, %v5050
          %v5059 = vmul.f32 %v5051, %v5051
          %v5060 = vadd.f32 %v5052, %v5053
          %v5061 = vadd.f32 %v5060, %v5054
          %v5062 = vadd.f32 %v5061, %v5055
          %v5063 = vadd.f32 %v5062, %v5056
          %v5064 = vadd.f32 %v5063, %v5057
          %v5065 = vadd.f32 %v5064, %v5058
          %v5066 = vadd.f32 %v5065, %v5059
          %v5067 = vrot.slane %v5066, 4
          %v5068 = vadd.f32 %v5066, %v5067
          %v5069 = vrot.slane %v5068, 2
          %v5070 = vadd.f32 %v5068, %v5069
          %v5071 = vrot.slane %v5070, 1
          %v5072 = vadd.f32 %v5070, %v5071
          %v5073 = vmul.f32 %v5072, %v5042
          %v5074 = vadd.f32 %v5073, 1e-05
          %v5075 = vrsqrt.pop %v5074
          %v5076 = vmul.f32 %v5044, %v5075
          %v5077 = vmul.f32 %v5045, %v5075
          %v5078 = vmul.f32 %v5046, %v5075
          %v5079 = vmul.f32 %v5047, %v5075
          %v5080 = vmul.f32 %v5048, %v5075
          %v5081 = vmul.f32 %v5049, %v5075
          %v5082 = vmul.f32 %v5050, %v5075
          %v5083 = vmul.f32 %v5051, %v5075
          %v5084 = vld [vmem:[%s6] sm:$0x1]
          %v5086 = vlaneseq
          %v5087 = vshrl.u32 %v5086, 7
          %v5088 = vsub.s32 0, %v5087
          %v5089 = vrot.slane %v5084, %v5088
          %v5091 = vmul.f32 %v5076, %v5089
          %v5092 = vmul.f32 %v5077, %v5089
          %v5093 = vmul.f32 %v5078, %v5089
          %v5094 = vmul.f32 %v5079, %v5089
          %v5095 = vmul.f32 %v5080, %v5089
          %v5096 = vmul.f32 %v5081, %v5089
          %v5097 = vmul.f32 %v5082, %v5089
          %v5098 = vmul.f32 %v5083, %v5089
          %v5099 = vld [vmem:[%s7] sm:$0x1]
          %v5101 = vlaneseq
          %v5102 = vshrl.u32 %v5101, 7
          %v5103 = vsub.s32 0, %v5102
          %v5104 = vrot.slane %v5099, %v5103
          %v5106 = vadd.f32 %v5091, %v5104
          %v5107 = vadd.f32 %v5092, %v5104
          %v5108 = vadd.f32 %v5093, %v5104
          %v5109 = vadd.f32 %v5094, %v5104
          %v5110 = vadd.f32 %v5095, %v5104
          %v5111 = vadd.f32 %v5096, %v5104
          %v5112 = vadd.f32 %v5097, %v5104
          %v5113 = vadd.f32 %v5098, %v5104
          %v5114 = vmax.f32 %v5106, 0.0
          %v5115 = vmax.f32 %v5107, 0.0
          %v5116 = vmax.f32 %v5108, 0.0
          %v5117 = vmax.f32 %v5109, 0.0
          %v5118 = vmax.f32 %v5110, 0.0
          %v5119 = vmax.f32 %v5111, 0.0
          %v5120 = vmax.f32 %v5112, 0.0
          %v5121 = vmax.f32 %v5113, 0.0
          %5122 = vst [vmem:[#allocation9] sm:$0xff] %v5114
          %5123 = vst [vmem:[#allocation9 + $0x8] sm:$0xff] %v5115
          %5124 = vst [vmem:[#allocation9 + $0x10] sm:$0xff] %v5116
          %5125 = vst [vmem:[#allocation9 + $0x18] sm:$0xff] %v5117
          %5126 = vst [vmem:[#allocation9 + $0x20] sm:$0xff] %v5118
          %5127 = vst [vmem:[#allocation9 + $0x28] sm:$0xff] %v5119
          %5128 = vst [vmem:[#allocation9 + $0x30] sm:$0xff] %v5120
          %5129 = vst [vmem:[#allocation9 + $0x38] sm:$0xff] %v5121
        $region68: #{tpu_custom_call.1} parent=51 // pred_fallthru
          _
        // Predicated region
        $region69: #{tpu_custom_call.1} parent=51 // pred_check
          %p5130 = pneg %p213
        $region70: #{tpu_custom_call.1} parent=51 // pred_check_branch
          %5132 = sbr.rel (%p5130) target = $region72
        $region71: #{tpu_custom_call.1} parent=51 // pred_region
          %s5134 = ssub.s32 1024, 1024
          %5135 = vsyncadd [#allocation6], %s5134
          %s5136 = sshll.u32 [#allocation9], 4
          %s5137 = int_to_ptr.vmem [resolvable:$true] %s5136
          %5142 = dma.vmem_to_hbm [thread:$0]  %s5137, 1024, %s8, [#allocation6], 128, 128, 8
        $region72: #{tpu_custom_call.1} parent=51 // pred_fallthru
          _
        // Predicated region
        $region73: #{tpu_custom_call.1} parent=51 // pred_check
          %p5143 = pneg %p213
        $region74: #{tpu_custom_call.1} parent=51 // pred_check_branch
          %5145 = sbr.rel (%p5143) target = $region76
        $region75: #{tpu_custom_call.1} parent=51 // pred_region
          %5146 = dma.done [#allocation6], 1024
        $region76: #{tpu_custom_call.1} parent=51 // pred_fallthru
          _
      $region52: #{tpu_custom_call.1} parent=5 // pred_fallthru
        _
      %p5147 = scmp.le.s32.totalorder 2, %s17
      // Predicated region
      $region77: #{tpu_custom_call.1} parent=5 // pred_check
        %p5148 = pneg %p5147
      $region78: #{tpu_custom_call.1} parent=5 // pred_check_branch
        %5150 = sbr.rel (%p5148) target = $region80
      $region79: #{tpu_custom_call.1} parent=5 // pred_region
        %s5151 = ssub.s32 %s17, 2
      $region80: #{tpu_custom_call.1} parent=5 // pred_fallthru
        _
    $region6: #{tpu_custom_call.1} parent=1 // loop_footer
      %s21 = sadd.s32 1, %s17
    $region7: #{tpu_custom_call.1} parent=1 // loop_footer_branch
      %16 = sbr.rel target = $region3
    $region8: #{tpu_custom_call.1} parent=1 // loop_exit
      _
    %5152 = vsyncpa [#allocation5], 1
    %s5153 = scalar_lea.sflag [#allocation5], 1
    %5154 = vsyncpa %s5153, 1
    %5155 = vsyncpa [#allocation8], 1
    %5156 = vsyncpa [#allocation6], 1
    %s5157 = scalar_lea.sflag [#allocation6], 1
    %5158 = vsyncpa %s5157, 1

</llo_original>
